<compile_context>
chip_gen: v7x
topology: tpu7x:2x2x1
jax: 0.10.0
libtpu: 0.0.40
codegen_flags: <defaults>
</compile_context>

<pallas_src>
import functools
import math

import jax
import jax.numpy as jnp
from jax import lax
from jax.experimental import pallas as pl
from jax.experimental.pallas import tpu as pltpu


# ----------------------------------------------------------------------------
# Fused kernel
# ----------------------------------------------------------------------------
def _fused_kernel(vision_ref, text_ref, aspect_ref,
                  wcv_ref, bcv_ref,
                  wq_ref, bq_ref, wkv_ref, bkv_ref, wo_ref, bo_ref,
                  wc_ref, bc_ref,
                  clog_ref, slog_ref, attn_ref, *, num_heads):
    f32 = jnp.float32
    B, N, C = vision_ref.shape
    A = aspect_ref.shape[0]
    Dh = C // num_heads
    scale = 1.0 / math.sqrt(Dh)

    # ---- contrastive head, specialized for a single key (softmax == 1) -----
    #   out = (text @ Wv + bv) @ Wo + bo == text @ (Wv Wo) + (bv Wo + bo)
    text = text_ref[...].astype(f32)                                     # (B, C)
    c_out = jnp.dot(text, wcv_ref[...], preferred_element_type=f32) + bcv_ref[...]
    clog_ref[...] = jnp.sum(c_out * text, axis=-1,
                            keepdims=True).astype(clog_ref.dtype)        # (B, 1)

    # ---- cross attention ----------------------------------------------------
    # Fused K/V projection over all B*N key rows (tile-aligned collapse).
    vis = vision_ref[...].astype(f32)                                    # (B, N, C)
    kv_rows = vis.reshape(B * N, C)
    KV = jnp.dot(kv_rows, wkv_ref[...], preferred_element_type=f32) + bkv_ref[...]
    Kp = KV[:, :C]                                                       # (B*N, C)
    Vp = KV[:, C:]                                                       # (B*N, C)

    # Gather query rows from native (A, B, C) layout into (b, a)-major order
    # so a single M = B*A projection feeds the MXU.
    asp = aspect_ref[...].astype(f32)                                    # (A, B, C)
    q_rows = jnp.concatenate(
        [asp[a][b:b + 1, :] for b in range(B) for a in range(A)], axis=0)  # (B*A, C)
    Qp = jnp.dot(q_rows, wq_ref[...], preferred_element_type=f32) + bq_ref[...]

    inv_heads = 1.0 / float(num_heads)
    ctx_rows = []
    for b in range(B):                                                   # static unroll
        Qb = Qp[b * A:(b + 1) * A, :]                                    # (A, C)
        Kb = Kp[b * N:(b + 1) * N, :]                                    # (N, C)
        Vb = Vp[b * N:(b + 1) * N, :]                                    # (N, C)

        attn_sum = jnp.zeros((A, N), f32)
        head_ctx = []
        for h in range(num_heads):                                       # static unroll
            sl = slice(h * Dh, (h + 1) * Dh)
            s = lax.dot_general(Qb[:, sl], Kb[:, sl],
                                (((1,), (1,)), ((), ())),
                                preferred_element_type=f32) * scale      # (A, N)
            s = s - jnp.max(s, axis=-1, keepdims=True)
            p = jnp.exp(s)
            p = p * pl.reciprocal(jnp.sum(p, axis=-1, keepdims=True), approx=True)
            attn_sum = attn_sum + p
            head_ctx.append(jnp.dot(p, Vb[:, sl],
                                    preferred_element_type=f32))         # (A, Dh)

        attn_ref[b] = (attn_sum * inv_heads).astype(attn_ref.dtype)      # avg heads
        ctx_rows.append(jnp.concatenate(head_ctx, axis=-1))              # (A, C)

    # Single wide output projection over all B*A rows.
    ctx = jnp.concatenate(ctx_rows, axis=0)                              # (B*A, C)
    out_rows = jnp.dot(ctx, wo_ref[...], preferred_element_type=f32) + bo_ref[...]

    # Mean over aspects + classifier.
    rep = jnp.concatenate(
        [jnp.mean(out_rows[b * A:(b + 1) * A, :], axis=0, keepdims=True)
         for b in range(B)], axis=0)                                     # (B, C)
    slog_ref[...] = (jnp.dot(rep, wc_ref[...], preferred_element_type=f32)
                     + bc_ref[...]).astype(slog_ref.dtype)


# ----------------------------------------------------------------------------
# Wrapper
# ----------------------------------------------------------------------------
def dual_head_forward(kparams, vision_features, text_embeddings, aspect_queries,
                      num_heads=8):
    # vision_features: (B, N, C), text_embeddings: (B, C), aspect_queries: (A, B, C)
    B, N, C = vision_features.shape
    A = aspect_queries.shape[0]
    nc = kparams["wc"].shape[1]

    kernel = functools.partial(_fused_kernel, num_heads=num_heads)

    def full_spec(shape):
        n = len(shape)
        return pl.BlockSpec(shape, lambda i, n=n: (0,) * n)

    in_arrays = (vision_features, text_embeddings, aspect_queries,
                 kparams["wcv"], kparams["bcv"],
                 kparams["wq"], kparams["bq"],
                 kparams["wkv"], kparams["bkv"],
                 kparams["wo"], kparams["bo"],
                 kparams["wc"], kparams["bc"])

    out_shapes = (jax.ShapeDtypeStruct((B, 1), jnp.float32),
                  jax.ShapeDtypeStruct((B, nc), jnp.float32),
                  jax.ShapeDtypeStruct((B, A, N), jnp.float32))

    clog, slog, attn = pl.pallas_call(
        kernel,
        out_shape=out_shapes,
        grid=(1,),
        in_specs=[full_spec(a.shape) for a in in_arrays],
        out_specs=tuple(full_spec(s.shape) for s in out_shapes),
        compiler_params=pltpu.CompilerParams(dimension_semantics=("arbitrary",)),
    )(*in_arrays)

    contrastive_logits = jnp.squeeze(clog, axis=1)        # (B,)  (matches .squeeze())
    return contrastive_logits, slog, attn


# ----------------------------------------------------------------------------
# Parameter init (natural, nn.Module-style) + one-time kernel packing
# ----------------------------------------------------------------------------
def init_params(key, C, num_classes):
    ks = jax.random.split(key, 8)

    def mha_params(kw, kb, ko):
        in_w = jax.random.normal(kw, (3 * C, C), jnp.float32) * 0.02   # in_proj_weight
        in_b = jax.random.normal(kb, (3 * C,), jnp.float32) * 0.02     # in_proj_bias
        out_w = jax.random.normal(ko, (C, C), jnp.float32) * 0.02      # out_proj.weight
        out_b = jnp.zeros((C,), jnp.float32)                           # out_proj.bias
        return dict(
            wq=in_w[:C].T, wk=in_w[C:2 * C].T, wv=in_w[2 * C:].T, wo=out_w.T,
            bq=in_b[:C][None, :], bk=in_b[C:2 * C][None, :],
            bv=in_b[2 * C:][None, :], bo=out_b[None, :])

    return dict(
        contrastive=mha_params(ks[0], ks[1], ks[2]),
        cross=mha_params(ks[3], ks[4], ks[5]),
        wc=(jax.random.normal(ks[6], (num_classes, C), jnp.float32) * 0.02).T,
        bc=(jax.random.normal(ks[7], (num_classes,), jnp.float32) * 0.02)[None, :],
    )


def pack_params(params):
    """One-time repack: fold contrastive V·O (Lk==1 specialization), concat K|V."""
    c = params["contrastive"]
    x = params["cross"]
    return dict(
        # contrastive head collapses to a single affine map (softmax over 1 key == 1)
        wcv=c["wv"] @ c["wo"],
        bcv=c["bv"] @ c["wo"] + c["bo"],
        # cross-attention weights
        wq=x["wq"], bq=x["bq"],
        wkv=jnp.concatenate([x["wk"], x["wv"]], axis=1),
        bkv=jnp.concatenate([x["bk"], x["bv"]], axis=1),
        wo=x["wo"], bo=x["bo"],
        # classifier
        wc=params["wc"], bc=params["bc"],
    )


# ----------------------------------------------------------------------------
# Pure-JAX reference (for correctness check)
# ----------------------------------------------------------------------------
def _mha_ref(q, k, v, p, num_heads):
    B, Lq, C = q.shape
    Lk = k.shape[1]
    Dh = C // num_heads
    Q = q @ p["wq"] + p["bq"]
    K = k @ p["wk"] + p["bk"]
    V = v @ p["wv"] + p["bv"]
    Q = Q.reshape(B, Lq, num_heads, Dh).transpose(0, 2, 1, 3)
    K = K.reshape(B, Lk, num_heads, Dh).transpose(0, 2, 1, 3)
    V = V.reshape(B, Lk, num_heads, Dh).transpose(0, 2, 1, 3)
    s = jnp.einsum("bhqd,bhkd->bhqk", Q, K) / math.sqrt(Dh)
    w = jax.nn.softmax(s, axis=-1)
    o = jnp.einsum("bhqk,bhkd->bhqd", w, V)
    o = o.transpose(0, 2, 1, 3).reshape(B, Lq, C)
    return o @ p["wo"] + p["bo"], w.mean(axis=1)


def _forward_ref(params, vision_features, text_embeddings, aspect_queries, num_heads):
    vgs = vision_features.mean(axis=1)[:, None, :]
    ts = text_embeddings[:, None, :]
    co, _ = _mha_ref(vgs, ts, ts, params["contrastive"], num_heads)
    cl = jnp.squeeze(jnp.einsum("bqc,bkc->bqk", co, ts))
    aq = jnp.transpose(aspect_queries, (1, 0, 2))
    att, aw = _mha_ref(aq, vision_features, vision_features, params["cross"], num_heads)
    sl = att.mean(axis=1) @ params["wc"] + params["bc"]
    return cl, sl, aw


# ----------------------------------------------------------------------------
if __name__ == "__main__":
    # Small shapes consistent with the module (vision_dim divisible by num_heads).
    C = 128            # vision_dim = text_dim
    num_heads = 8
    num_classes = 10
    B, N, A = 2, 16, 4  # batch, spatial tokens, num_aspects

    key = jax.random.PRNGKey(0)
    kp, kv, kt, ka = jax.random.split(key, 4)
    params = init_params(kp, C, num_classes)
    kparams = pack_params(params)              # one-time weight packing (outside jit)
    vision_features = jax.random.normal(kv, (B, N, C), jnp.float32)
    text_embeddings = jax.random.normal(kt, (B, C), jnp.float32)
    aspect_queries = jax.random.normal(ka, (A, B, C), jnp.float32)

    fwd = jax.jit(dual_head_forward, static_argnames=("num_heads",))
    c_logits, s_logits, attn_w = fwd(kparams, vision_features, text_embeddings,
                                     aspect_queries, num_heads=num_heads)
    jax.block_until_ready((c_logits, s_logits, attn_w))

    # shape checks (match the PyTorch forward return)
    assert c_logits.shape == (B,)
    assert s_logits.shape == (B, num_classes)
    assert attn_w.shape == (B, A, N)

    # numerical check against a pure-JAX reference on the natural parameters
    rc, rs, rw = _forward_ref(params, vision_features, text_embeddings,
                              aspect_queries, num_heads)
    assert jnp.allclose(c_logits, rc, atol=2e-3, rtol=2e-3)
    assert jnp.allclose(s_logits, rs, atol=2e-3, rtol=2e-3)
    assert jnp.allclose(attn_w, rw, atol=2e-3, rtol=2e-3)

    # TODO(synk): neural_memory test-time-adaptation path (optional arg) not modeled;
    # vision_projector / text_projector are unused in forward() and not materialized.
    print("KERNEL_OK")
</pallas_src>

<mosaic_0001>
module attributes {stable_mosaic.version = 11 : i64} {
  func.func @_fused_kernel(%arg0: i32, %arg1: memref<2x16x128xf32, #tpu.memory_space<vmem>>, %arg2: memref<2x128xf32, #tpu.memory_space<vmem>>, %arg3: memref<4x2x128xf32, #tpu.memory_space<vmem>>, %arg4: memref<128x128xf32, #tpu.memory_space<vmem>>, %arg5: memref<1x128xf32, #tpu.memory_space<vmem>>, %arg6: memref<128x128xf32, #tpu.memory_space<vmem>>, %arg7: memref<1x128xf32, #tpu.memory_space<vmem>>, %arg8: memref<128x256xf32, #tpu.memory_space<vmem>>, %arg9: memref<1x256xf32, #tpu.memory_space<vmem>>, %arg10: memref<128x128xf32, #tpu.memory_space<vmem>>, %arg11: memref<1x128xf32, #tpu.memory_space<vmem>>, %arg12: memref<128x10xf32, #tpu.memory_space<vmem>>, %arg13: memref<1x10xf32, #tpu.memory_space<vmem>>, %arg14: memref<2x1xf32, #tpu.memory_space<vmem>>, %arg15: memref<2x10xf32, #tpu.memory_space<vmem>>, %arg16: memref<2x4x16xf32, #tpu.memory_space<vmem>>) attributes {dimension_semantics = [#tpu.dimension_semantics<arbitrary>], iteration_bounds = array<i64: 1>, scalar_prefetch = 0 : i64, scratch_operands = 0 : i64, tpu.core_type = #tpu.core_type<tc>, window_params = [{pipeline_mode = #tpu.pipeline_mode<synchronous>, transform_indices = @transform_0, window_bounds = array<i64: 2, 16, 128>}, {pipeline_mode = #tpu.pipeline_mode<synchronous>, transform_indices = @transform_1, window_bounds = array<i64: 2, 128>}, {pipeline_mode = #tpu.pipeline_mode<synchronous>, transform_indices = @transform_2, window_bounds = array<i64: 4, 2, 128>}, {pipeline_mode = #tpu.pipeline_mode<synchronous>, transform_indices = @transform_3, window_bounds = array<i64: 128, 128>}, {pipeline_mode = #tpu.pipeline_mode<synchronous>, transform_indices = @transform_4, window_bounds = array<i64: 1, 128>}, {pipeline_mode = #tpu.pipeline_mode<synchronous>, transform_indices = @transform_5, window_bounds = array<i64: 128, 128>}, {pipeline_mode = #tpu.pipeline_mode<synchronous>, transform_indices = @transform_6, window_bounds = array<i64: 1, 128>}, {pipeline_mode = #tpu.pipeline_mode<synchronous>, transform_indices = @transform_7, window_bounds = array<i64: 128, 256>}, {pipeline_mode = #tpu.pipeline_mode<synchronous>, transform_indices = @transform_8, window_bounds = array<i64: 1, 256>}, {pipeline_mode = #tpu.pipeline_mode<synchronous>, transform_indices = @transform_9, window_bounds = array<i64: 128, 128>}, {pipeline_mode = #tpu.pipeline_mode<synchronous>, transform_indices = @transform_10, window_bounds = array<i64: 1, 128>}, {pipeline_mode = #tpu.pipeline_mode<synchronous>, transform_indices = @transform_11, window_bounds = array<i64: 128, 10>}, {pipeline_mode = #tpu.pipeline_mode<synchronous>, transform_indices = @transform_12, window_bounds = array<i64: 1, 10>}, {pipeline_mode = #tpu.pipeline_mode<synchronous>, transform_indices = @transform_13, window_bounds = array<i64: 2, 1>}, {pipeline_mode = #tpu.pipeline_mode<synchronous>, transform_indices = @transform_14, window_bounds = array<i64: 2, 10>}, {pipeline_mode = #tpu.pipeline_mode<synchronous>, transform_indices = @transform_15, window_bounds = array<i64: 2, 4, 16>}]} {
    %c0 = arith.constant 0 : index
    %c0_0 = arith.constant 0 : index
    %0 = vector.load %arg2[%c0, %c0_0] : memref<2x128xf32, #tpu.memory_space<vmem>>, vector<2x128xf32>
    %c0_1 = arith.constant 0 : index
    %c0_2 = arith.constant 0 : index
    %1 = vector.load %arg4[%c0_1, %c0_2] : memref<128x128xf32, #tpu.memory_space<vmem>>, vector<128x128xf32>
    %cst = arith.constant dense<0.000000e+00> : vector<2x128xf32>
    %2 = tpu.matmul %0, %1, %cst {dimension_numbers = #tpu.dot_dimension_numbers<[1], [0], [0], [1], [0, 0, 1, 1], [], []>} : vector<2x128xf32>, vector<128x128xf32>, vector<2x128xf32> -> vector<2x128xf32>
    %c0_3 = arith.constant 0 : index
    %c0_4 = arith.constant 0 : index
    %3 = vector.load %arg5[%c0_3, %c0_4] : memref<1x128xf32, #tpu.memory_space<vmem>>, vector<1x128xf32>
    %4 = vector.broadcast %3 : vector<1x128xf32> to vector<2x128xf32>
    %5 = arith.addf %2, %4 : vector<2x128xf32>
    %6 = arith.mulf %5, %0 : vector<2x128xf32>
    %cst_5 = arith.constant dense<0.000000e+00> : vector<2xf32>
    %7 = vector.multi_reduction <add>, %6, %cst_5 [1] : vector<2x128xf32> to vector<2xf32>
    %8 = vector.shape_cast %7 : vector<2xf32> to vector<2x1xf32>
    %c0_6 = arith.constant 0 : index
    %c0_7 = arith.constant 0 : index
    %9 = vector.load %arg14[%c0_6, %c0_7] : memref<2x1xf32, #tpu.memory_space<vmem>>, vector<2x1xf32>
    tpu.vector_store %arg14[%c0_6, %c0_7], %8 {strides = array<i32>} : memref<2x1xf32, #tpu.memory_space<vmem>>, vector<2x1xf32>,
    %c0_8 = arith.constant 0 : index
    %c0_9 = arith.constant 0 : index
    %c0_10 = arith.constant 0 : index
    %10 = vector.load %arg1[%c0_8, %c0_9, %c0_10] : memref<2x16x128xf32, #tpu.memory_space<vmem>>, vector<2x16x128xf32>
    %11 = vector.shape_cast %10 : vector<2x16x128xf32> to vector<32x128xf32>
    %c0_11 = arith.constant 0 : index
    %c0_12 = arith.constant 0 : index
    %12 = vector.load %arg8[%c0_11, %c0_12] : memref<128x256xf32, #tpu.memory_space<vmem>>, vector<128x256xf32>
    %cst_13 = arith.constant dense<0.000000e+00> : vector<32x256xf32>
    %13 = tpu.matmul %11, %12, %cst_13 {dimension_numbers = #tpu.dot_dimension_numbers<[1], [0], [0], [1], [0, 0, 1, 1], [], []>} : vector<32x128xf32>, vector<128x256xf32>, vector<32x256xf32> -> vector<32x256xf32>
    %c0_14 = arith.constant 0 : index
    %c0_15 = arith.constant 0 : index
    %14 = vector.load %arg9[%c0_14, %c0_15] : memref<1x256xf32, #tpu.memory_space<vmem>>, vector<1x256xf32>
    %15 = vector.broadcast %14 : vector<1x256xf32> to vector<32x256xf32>
    %16 = arith.addf %13, %15 : vector<32x256xf32>
    %17 = vector.extract_strided_slice %16 {offsets = [0, 0], sizes = [32, 128], strides = [1, 1]} : vector<32x256xf32> to vector<32x128xf32>
    %18 = vector.extract_strided_slice %16 {offsets = [0, 128], sizes = [32, 128], strides = [1, 1]} : vector<32x256xf32> to vector<32x128xf32>
    %c0_16 = arith.constant 0 : index
    %c0_17 = arith.constant 0 : index
    %c0_18 = arith.constant 0 : index
    %19 = vector.load %arg3[%c0_16, %c0_17, %c0_18] : memref<4x2x128xf32, #tpu.memory_space<vmem>>, vector<4x2x128xf32>
    %20 = vector.extract_strided_slice %19 {offsets = [0, 0, 0], sizes = [1, 2, 128], strides = [1, 1, 1]} : vector<4x2x128xf32> to vector<1x2x128xf32>
    %21 = vector.shape_cast %20 : vector<1x2x128xf32> to vector<2x128xf32>
    %22 = vector.extract_strided_slice %21 {offsets = [0, 0], sizes = [1, 128], strides = [1, 1]} : vector<2x128xf32> to vector<1x128xf32>
    %23 = vector.extract_strided_slice %19 {offsets = [1, 0, 0], sizes = [1, 2, 128], strides = [1, 1, 1]} : vector<4x2x128xf32> to vector<1x2x128xf32>
    %24 = vector.shape_cast %23 : vector<1x2x128xf32> to vector<2x128xf32>
    %25 = vector.extract_strided_slice %24 {offsets = [0, 0], sizes = [1, 128], strides = [1, 1]} : vector<2x128xf32> to vector<1x128xf32>
    %26 = vector.extract_strided_slice %19 {offsets = [2, 0, 0], sizes = [1, 2, 128], strides = [1, 1, 1]} : vector<4x2x128xf32> to vector<1x2x128xf32>
    %27 = vector.shape_cast %26 : vector<1x2x128xf32> to vector<2x128xf32>
    %28 = vector.extract_strided_slice %27 {offsets = [0, 0], sizes = [1, 128], strides = [1, 1]} : vector<2x128xf32> to vector<1x128xf32>
    %29 = vector.extract_strided_slice %19 {offsets = [3, 0, 0], sizes = [1, 2, 128], strides = [1, 1, 1]} : vector<4x2x128xf32> to vector<1x2x128xf32>
    %30 = vector.shape_cast %29 : vector<1x2x128xf32> to vector<2x128xf32>
    %31 = vector.extract_strided_slice %30 {offsets = [0, 0], sizes = [1, 128], strides = [1, 1]} : vector<2x128xf32> to vector<1x128xf32>
    %32 = vector.extract_strided_slice %19 {offsets = [0, 0, 0], sizes = [1, 2, 128], strides = [1, 1, 1]} : vector<4x2x128xf32> to vector<1x2x128xf32>
    %33 = vector.shape_cast %32 : vector<1x2x128xf32> to vector<2x128xf32>
    %34 = vector.extract_strided_slice %33 {offsets = [1, 0], sizes = [1, 128], strides = [1, 1]} : vector<2x128xf32> to vector<1x128xf32>
    %35 = vector.extract_strided_slice %19 {offsets = [1, 0, 0], sizes = [1, 2, 128], strides = [1, 1, 1]} : vector<4x2x128xf32> to vector<1x2x128xf32>
    %36 = vector.shape_cast %35 : vector<1x2x128xf32> to vector<2x128xf32>
    %37 = vector.extract_strided_slice %36 {offsets = [1, 0], sizes = [1, 128], strides = [1, 1]} : vector<2x128xf32> to vector<1x128xf32>
    %38 = vector.extract_strided_slice %19 {offsets = [2, 0, 0], sizes = [1, 2, 128], strides = [1, 1, 1]} : vector<4x2x128xf32> to vector<1x2x128xf32>
    %39 = vector.shape_cast %38 : vector<1x2x128xf32> to vector<2x128xf32>
    %40 = vector.extract_strided_slice %39 {offsets = [1, 0], sizes = [1, 128], strides = [1, 1]} : vector<2x128xf32> to vector<1x128xf32>
    %41 = vector.extract_strided_slice %19 {offsets = [3, 0, 0], sizes = [1, 2, 128], strides = [1, 1, 1]} : vector<4x2x128xf32> to vector<1x2x128xf32>
    %42 = vector.shape_cast %41 : vector<1x2x128xf32> to vector<2x128xf32>
    %43 = vector.extract_strided_slice %42 {offsets = [1, 0], sizes = [1, 128], strides = [1, 1]} : vector<2x128xf32> to vector<1x128xf32>
    %44 = tpu.concatenate %22, %25, %28, %31, %34, %37, %40, %43 in 0 : vector<1x128xf32>, vector<1x128xf32>, vector<1x128xf32>, vector<1x128xf32>, vector<1x128xf32>, vector<1x128xf32>, vector<1x128xf32>, vector<1x128xf32> -> vector<8x128xf32>
    %c0_19 = arith.constant 0 : index
    %c0_20 = arith.constant 0 : index
    %45 = vector.load %arg6[%c0_19, %c0_20] : memref<128x128xf32, #tpu.memory_space<vmem>>, vector<128x128xf32>
    %cst_21 = arith.constant dense<0.000000e+00> : vector<8x128xf32>
    %46 = tpu.matmul %44, %45, %cst_21 {dimension_numbers = #tpu.dot_dimension_numbers<[1], [0], [0], [1], [0, 0, 1, 1], [], []>} : vector<8x128xf32>, vector<128x128xf32>, vector<8x128xf32> -> vector<8x128xf32>
    %c0_22 = arith.constant 0 : index
    %c0_23 = arith.constant 0 : index
    %47 = vector.load %arg7[%c0_22, %c0_23] : memref<1x128xf32, #tpu.memory_space<vmem>>, vector<1x128xf32>
    %48 = vector.broadcast %47 : vector<1x128xf32> to vector<8x128xf32>
    %49 = arith.addf %46, %48 : vector<8x128xf32>
    %50 = vector.extract_strided_slice %49 {offsets = [0, 0], sizes = [4, 128], strides = [1, 1]} : vector<8x128xf32> to vector<4x128xf32>
    %51 = vector.extract_strided_slice %17 {offsets = [0, 0], sizes = [16, 128], strides = [1, 1]} : vector<32x128xf32> to vector<16x128xf32>
    %52 = vector.extract_strided_slice %18 {offsets = [0, 0], sizes = [16, 128], strides = [1, 1]} : vector<32x128xf32> to vector<16x128xf32>
    %cst_24 = arith.constant 0.000000e+00 : f32
    %53 = vector.broadcast %cst_24 : f32 to vector<4x16xf32>
    %54 = vector.extract_strided_slice %50 {offsets = [0, 0], sizes = [4, 16], strides = [1, 1]} : vector<4x128xf32> to vector<4x16xf32>
    %55 = vector.extract_strided_slice %51 {offsets = [0, 0], sizes = [16, 16], strides = [1, 1]} : vector<16x128xf32> to vector<16x16xf32>
    %cst_25 = arith.constant dense<0.000000e+00> : vector<4x16xf32>
    %56 = tpu.matmul %54, %55, %cst_25 {dimension_numbers = #tpu.dot_dimension_numbers<[1], [1], [0], [0], [0, 0, 1, 0], [], []>} : vector<4x16xf32>, vector<16x16xf32>, vector<4x16xf32> -> vector<4x16xf32>
    %cst_26 = arith.constant 2.500000e-01 : f32
    %57 = vector.broadcast %cst_26 : f32 to vector<4x16xf32>
    %58 = arith.mulf %56, %57 : vector<4x16xf32>
    %cst_27 = arith.constant dense<0xFF800000> : vector<4xf32>
    %59 = vector.multi_reduction <maximumf>, %58, %cst_27 [1] : vector<4x16xf32> to vector<4xf32>
    %60 = vector.shape_cast %59 : vector<4xf32> to vector<4x1xf32>
    %61 = vector.broadcast %60 : vector<4x1xf32> to vector<4x16xf32>
    %62 = arith.subf %58, %61 : vector<4x16xf32>
    %63 = math.exp %62 : vector<4x16xf32>
    %cst_28 = arith.constant dense<0.000000e+00> : vector<4xf32>
    %64 = vector.multi_reduction <add>, %63, %cst_28 [1] : vector<4x16xf32> to vector<4xf32>
    %65 = vector.shape_cast %64 : vector<4xf32> to vector<4x1xf32>
    %66 = tpu.reciprocal %65 {approx = true} : vector<4x1xf32> -> vector<4x1xf32>
    %67 = vector.broadcast %66 : vector<4x1xf32> to vector<4x16xf32>
    %68 = arith.mulf %63, %67 : vector<4x16xf32>
    %69 = arith.addf %53, %68 : vector<4x16xf32>
    %70 = vector.extract_strided_slice %52 {offsets = [0, 0], sizes = [16, 16], strides = [1, 1]} : vector<16x128xf32> to vector<16x16xf32>
    %cst_29 = arith.constant dense<0.000000e+00> : vector<4x16xf32>
    %71 = tpu.matmul %68, %70, %cst_29 {dimension_numbers = #tpu.dot_dimension_numbers<[1], [0], [0], [1], [0, 0, 1, 1], [], []>} : vector<4x16xf32>, vector<16x16xf32>, vector<4x16xf32> -> vector<4x16xf32>
    %72 = vector.extract_strided_slice %50 {offsets = [0, 16], sizes = [4, 16], strides = [1, 1]} : vector<4x128xf32> to vector<4x16xf32>
    %73 = vector.extract_strided_slice %51 {offsets = [0, 16], sizes = [16, 16], strides = [1, 1]} : vector<16x128xf32> to vector<16x16xf32>
    %cst_30 = arith.constant dense<0.000000e+00> : vector<4x16xf32>
    %74 = tpu.matmul %72, %73, %cst_30 {dimension_numbers = #tpu.dot_dimension_numbers<[1], [1], [0], [0], [0, 0, 1, 0], [], []>} : vector<4x16xf32>, vector<16x16xf32>, vector<4x16xf32> -> vector<4x16xf32>
    %cst_31 = arith.constant 2.500000e-01 : f32
    %75 = vector.broadcast %cst_31 : f32 to vector<4x16xf32>
    %76 = arith.mulf %74, %75 : vector<4x16xf32>
    %cst_32 = arith.constant dense<0xFF800000> : vector<4xf32>
    %77 = vector.multi_reduction <maximumf>, %76, %cst_32 [1] : vector<4x16xf32> to vector<4xf32>
    %78 = vector.shape_cast %77 : vector<4xf32> to vector<4x1xf32>
    %79 = vector.broadcast %78 : vector<4x1xf32> to vector<4x16xf32>
    %80 = arith.subf %76, %79 : vector<4x16xf32>
    %81 = math.exp %80 : vector<4x16xf32>
    %cst_33 = arith.constant dense<0.000000e+00> : vector<4xf32>
    %82 = vector.multi_reduction <add>, %81, %cst_33 [1] : vector<4x16xf32> to vector<4xf32>
    %83 = vector.shape_cast %82 : vector<4xf32> to vector<4x1xf32>
    %84 = tpu.reciprocal %83 {approx = true} : vector<4x1xf32> -> vector<4x1xf32>
    %85 = vector.broadcast %84 : vector<4x1xf32> to vector<4x16xf32>
    %86 = arith.mulf %81, %85 : vector<4x16xf32>
    %87 = arith.addf %69, %86 : vector<4x16xf32>
    %88 = vector.extract_strided_slice %52 {offsets = [0, 16], sizes = [16, 16], strides = [1, 1]} : vector<16x128xf32> to vector<16x16xf32>
    %cst_34 = arith.constant dense<0.000000e+00> : vector<4x16xf32>
    %89 = tpu.matmul %86, %88, %cst_34 {dimension_numbers = #tpu.dot_dimension_numbers<[1], [0], [0], [1], [0, 0, 1, 1], [], []>} : vector<4x16xf32>, vector<16x16xf32>, vector<4x16xf32> -> vector<4x16xf32>
    %90 = vector.extract_strided_slice %50 {offsets = [0, 32], sizes = [4, 16], strides = [1, 1]} : vector<4x128xf32> to vector<4x16xf32>
    %91 = vector.extract_strided_slice %51 {offsets = [0, 32], sizes = [16, 16], strides = [1, 1]} : vector<16x128xf32> to vector<16x16xf32>
    %cst_35 = arith.constant dense<0.000000e+00> : vector<4x16xf32>
    %92 = tpu.matmul %90, %91, %cst_35 {dimension_numbers = #tpu.dot_dimension_numbers<[1], [1], [0], [0], [0, 0, 1, 0], [], []>} : vector<4x16xf32>, vector<16x16xf32>, vector<4x16xf32> -> vector<4x16xf32>
    %cst_36 = arith.constant 2.500000e-01 : f32
    %93 = vector.broadcast %cst_36 : f32 to vector<4x16xf32>
    %94 = arith.mulf %92, %93 : vector<4x16xf32>
    %cst_37 = arith.constant dense<0xFF800000> : vector<4xf32>
    %95 = vector.multi_reduction <maximumf>, %94, %cst_37 [1] : vector<4x16xf32> to vector<4xf32>
    %96 = vector.shape_cast %95 : vector<4xf32> to vector<4x1xf32>
    %97 = vector.broadcast %96 : vector<4x1xf32> to vector<4x16xf32>
    %98 = arith.subf %94, %97 : vector<4x16xf32>
    %99 = math.exp %98 : vector<4x16xf32>
    %cst_38 = arith.constant dense<0.000000e+00> : vector<4xf32>
    %100 = vector.multi_reduction <add>, %99, %cst_38 [1] : vector<4x16xf32> to vector<4xf32>
    %101 = vector.shape_cast %100 : vector<4xf32> to vector<4x1xf32>
    %102 = tpu.reciprocal %101 {approx = true} : vector<4x1xf32> -> vector<4x1xf32>
    %103 = vector.broadcast %102 : vector<4x1xf32> to vector<4x16xf32>
    %104 = arith.mulf %99, %103 : vector<4x16xf32>
    %105 = arith.addf %87, %104 : vector<4x16xf32>
    %106 = vector.extract_strided_slice %52 {offsets = [0, 32], sizes = [16, 16], strides = [1, 1]} : vector<16x128xf32> to vector<16x16xf32>
    %cst_39 = arith.constant dense<0.000000e+00> : vector<4x16xf32>
    %107 = tpu.matmul %104, %106, %cst_39 {dimension_numbers = #tpu.dot_dimension_numbers<[1], [0], [0], [1], [0, 0, 1, 1], [], []>} : vector<4x16xf32>, vector<16x16xf32>, vector<4x16xf32> -> vector<4x16xf32>
    %108 = vector.extract_strided_slice %50 {offsets = [0, 48], sizes = [4, 16], strides = [1, 1]} : vector<4x128xf32> to vector<4x16xf32>
    %109 = vector.extract_strided_slice %51 {offsets = [0, 48], sizes = [16, 16], strides = [1, 1]} : vector<16x128xf32> to vector<16x16xf32>
    %cst_40 = arith.constant dense<0.000000e+00> : vector<4x16xf32>
    %110 = tpu.matmul %108, %109, %cst_40 {dimension_numbers = #tpu.dot_dimension_numbers<[1], [1], [0], [0], [0, 0, 1, 0], [], []>} : vector<4x16xf32>, vector<16x16xf32>, vector<4x16xf32> -> vector<4x16xf32>
    %cst_41 = arith.constant 2.500000e-01 : f32
    %111 = vector.broadcast %cst_41 : f32 to vector<4x16xf32>
    %112 = arith.mulf %110, %111 : vector<4x16xf32>
    %cst_42 = arith.constant dense<0xFF800000> : vector<4xf32>
    %113 = vector.multi_reduction <maximumf>, %112, %cst_42 [1] : vector<4x16xf32> to vector<4xf32>
    %114 = vector.shape_cast %113 : vector<4xf32> to vector<4x1xf32>
    %115 = vector.broadcast %114 : vector<4x1xf32> to vector<4x16xf32>
    %116 = arith.subf %112, %115 : vector<4x16xf32>
    %117 = math.exp %116 : vector<4x16xf32>
    %cst_43 = arith.constant dense<0.000000e+00> : vector<4xf32>
    %118 = vector.multi_reduction <add>, %117, %cst_43 [1] : vector<4x16xf32> to vector<4xf32>
    %119 = vector.shape_cast %118 : vector<4xf32> to vector<4x1xf32>
    %120 = tpu.reciprocal %119 {approx = true} : vector<4x1xf32> -> vector<4x1xf32>
    %121 = vector.broadcast %120 : vector<4x1xf32> to vector<4x16xf32>
    %122 = arith.mulf %117, %121 : vector<4x16xf32>
    %123 = arith.addf %105, %122 : vector<4x16xf32>
    %124 = vector.extract_strided_slice %52 {offsets = [0, 48], sizes = [16, 16], strides = [1, 1]} : vector<16x128xf32> to vector<16x16xf32>
    %cst_44 = arith.constant dense<0.000000e+00> : vector<4x16xf32>
    %125 = tpu.matmul %122, %124, %cst_44 {dimension_numbers = #tpu.dot_dimension_numbers<[1], [0], [0], [1], [0, 0, 1, 1], [], []>} : vector<4x16xf32>, vector<16x16xf32>, vector<4x16xf32> -> vector<4x16xf32>
    %126 = vector.extract_strided_slice %50 {offsets = [0, 64], sizes = [4, 16], strides = [1, 1]} : vector<4x128xf32> to vector<4x16xf32>
    %127 = vector.extract_strided_slice %51 {offsets = [0, 64], sizes = [16, 16], strides = [1, 1]} : vector<16x128xf32> to vector<16x16xf32>
    %cst_45 = arith.constant dense<0.000000e+00> : vector<4x16xf32>
    %128 = tpu.matmul %126, %127, %cst_45 {dimension_numbers = #tpu.dot_dimension_numbers<[1], [1], [0], [0], [0, 0, 1, 0], [], []>} : vector<4x16xf32>, vector<16x16xf32>, vector<4x16xf32> -> vector<4x16xf32>
    %cst_46 = arith.constant 2.500000e-01 : f32
    %129 = vector.broadcast %cst_46 : f32 to vector<4x16xf32>
    %130 = arith.mulf %128, %129 : vector<4x16xf32>
    %cst_47 = arith.constant dense<0xFF800000> : vector<4xf32>
    %131 = vector.multi_reduction <maximumf>, %130, %cst_47 [1] : vector<4x16xf32> to vector<4xf32>
    %132 = vector.shape_cast %131 : vector<4xf32> to vector<4x1xf32>
    %133 = vector.broadcast %132 : vector<4x1xf32> to vector<4x16xf32>
    %134 = arith.subf %130, %133 : vector<4x16xf32>
    %135 = math.exp %134 : vector<4x16xf32>
    %cst_48 = arith.constant dense<0.000000e+00> : vector<4xf32>
    %136 = vector.multi_reduction <add>, %135, %cst_48 [1] : vector<4x16xf32> to vector<4xf32>
    %137 = vector.shape_cast %136 : vector<4xf32> to vector<4x1xf32>
    %138 = tpu.reciprocal %137 {approx = true} : vector<4x1xf32> -> vector<4x1xf32>
    %139 = vector.broadcast %138 : vector<4x1xf32> to vector<4x16xf32>
    %140 = arith.mulf %135, %139 : vector<4x16xf32>
    %141 = arith.addf %123, %140 : vector<4x16xf32>
    %142 = vector.extract_strided_slice %52 {offsets = [0, 64], sizes = [16, 16], strides = [1, 1]} : vector<16x128xf32> to vector<16x16xf32>
    %cst_49 = arith.constant dense<0.000000e+00> : vector<4x16xf32>
    %143 = tpu.matmul %140, %142, %cst_49 {dimension_numbers = #tpu.dot_dimension_numbers<[1], [0], [0], [1], [0, 0, 1, 1], [], []>} : vector<4x16xf32>, vector<16x16xf32>, vector<4x16xf32> -> vector<4x16xf32>
    %144 = vector.extract_strided_slice %50 {offsets = [0, 80], sizes = [4, 16], strides = [1, 1]} : vector<4x128xf32> to vector<4x16xf32>
    %145 = vector.extract_strided_slice %51 {offsets = [0, 80], sizes = [16, 16], strides = [1, 1]} : vector<16x128xf32> to vector<16x16xf32>
    %cst_50 = arith.constant dense<0.000000e+00> : vector<4x16xf32>
    %146 = tpu.matmul %144, %145, %cst_50 {dimension_numbers = #tpu.dot_dimension_numbers<[1], [1], [0], [0], [0, 0, 1, 0], [], []>} : vector<4x16xf32>, vector<16x16xf32>, vector<4x16xf32> -> vector<4x16xf32>
    %cst_51 = arith.constant 2.500000e-01 : f32
    %147 = vector.broadcast %cst_51 : f32 to vector<4x16xf32>
    %148 = arith.mulf %146, %147 : vector<4x16xf32>
    %cst_52 = arith.constant dense<0xFF800000> : vector<4xf32>
    %149 = vector.multi_reduction <maximumf>, %148, %cst_52 [1] : vector<4x16xf32> to vector<4xf32>
    %150 = vector.shape_cast %149 : vector<4xf32> to vector<4x1xf32>
    %151 = vector.broadcast %150 : vector<4x1xf32> to vector<4x16xf32>
    %152 = arith.subf %148, %151 : vector<4x16xf32>
    %153 = math.exp %152 : vector<4x16xf32>
    %cst_53 = arith.constant dense<0.000000e+00> : vector<4xf32>
    %154 = vector.multi_reduction <add>, %153, %cst_53 [1] : vector<4x16xf32> to vector<4xf32>
    %155 = vector.shape_cast %154 : vector<4xf32> to vector<4x1xf32>
    %156 = tpu.reciprocal %155 {approx = true} : vector<4x1xf32> -> vector<4x1xf32>
    %157 = vector.broadcast %156 : vector<4x1xf32> to vector<4x16xf32>
    %158 = arith.mulf %153, %157 : vector<4x16xf32>
    %159 = arith.addf %141, %158 : vector<4x16xf32>
    %160 = vector.extract_strided_slice %52 {offsets = [0, 80], sizes = [16, 16], strides = [1, 1]} : vector<16x128xf32> to vector<16x16xf32>
    %cst_54 = arith.constant dense<0.000000e+00> : vector<4x16xf32>
    %161 = tpu.matmul %158, %160, %cst_54 {dimension_numbers = #tpu.dot_dimension_numbers<[1], [0], [0], [1], [0, 0, 1, 1], [], []>} : vector<4x16xf32>, vector<16x16xf32>, vector<4x16xf32> -> vector<4x16xf32>
    %162 = vector.extract_strided_slice %50 {offsets = [0, 96], sizes = [4, 16], strides = [1, 1]} : vector<4x128xf32> to vector<4x16xf32>
    %163 = vector.extract_strided_slice %51 {offsets = [0, 96], sizes = [16, 16], strides = [1, 1]} : vector<16x128xf32> to vector<16x16xf32>
    %cst_55 = arith.constant dense<0.000000e+00> : vector<4x16xf32>
    %164 = tpu.matmul %162, %163, %cst_55 {dimension_numbers = #tpu.dot_dimension_numbers<[1], [1], [0], [0], [0, 0, 1, 0], [], []>} : vector<4x16xf32>, vector<16x16xf32>, vector<4x16xf32> -> vector<4x16xf32>
    %cst_56 = arith.constant 2.500000e-01 : f32
    %165 = vector.broadcast %cst_56 : f32 to vector<4x16xf32>
    %166 = arith.mulf %164, %165 : vector<4x16xf32>
    %cst_57 = arith.constant dense<0xFF800000> : vector<4xf32>
    %167 = vector.multi_reduction <maximumf>, %166, %cst_57 [1] : vector<4x16xf32> to vector<4xf32>
    %168 = vector.shape_cast %167 : vector<4xf32> to vector<4x1xf32>
    %169 = vector.broadcast %168 : vector<4x1xf32> to vector<4x16xf32>
    %170 = arith.subf %166, %169 : vector<4x16xf32>
    %171 = math.exp %170 : vector<4x16xf32>
    %cst_58 = arith.constant dense<0.000000e+00> : vector<4xf32>
    %172 = vector.multi_reduction <add>, %171, %cst_58 [1] : vector<4x16xf32> to vector<4xf32>
    %173 = vector.shape_cast %172 : vector<4xf32> to vector<4x1xf32>
    %174 = tpu.reciprocal %173 {approx = true} : vector<4x1xf32> -> vector<4x1xf32>
    %175 = vector.broadcast %174 : vector<4x1xf32> to vector<4x16xf32>
    %176 = arith.mulf %171, %175 : vector<4x16xf32>
    %177 = arith.addf %159, %176 : vector<4x16xf32>
    %178 = vector.extract_strided_slice %52 {offsets = [0, 96], sizes = [16, 16], strides = [1, 1]} : vector<16x128xf32> to vector<16x16xf32>
    %cst_59 = arith.constant dense<0.000000e+00> : vector<4x16xf32>
    %179 = tpu.matmul %176, %178, %cst_59 {dimension_numbers = #tpu.dot_dimension_numbers<[1], [0], [0], [1], [0, 0, 1, 1], [], []>} : vector<4x16xf32>, vector<16x16xf32>, vector<4x16xf32> -> vector<4x16xf32>
    %180 = vector.extract_strided_slice %50 {offsets = [0, 112], sizes = [4, 16], strides = [1, 1]} : vector<4x128xf32> to vector<4x16xf32>
    %181 = vector.extract_strided_slice %51 {offsets = [0, 112], sizes = [16, 16], strides = [1, 1]} : vector<16x128xf32> to vector<16x16xf32>
    %cst_60 = arith.constant dense<0.000000e+00> : vector<4x16xf32>
    %182 = tpu.matmul %180, %181, %cst_60 {dimension_numbers = #tpu.dot_dimension_numbers<[1], [1], [0], [0], [0, 0, 1, 0], [], []>} : vector<4x16xf32>, vector<16x16xf32>, vector<4x16xf32> -> vector<4x16xf32>
    %cst_61 = arith.constant 2.500000e-01 : f32
    %183 = vector.broadcast %cst_61 : f32 to vector<4x16xf32>
    %184 = arith.mulf %182, %183 : vector<4x16xf32>
    %cst_62 = arith.constant dense<0xFF800000> : vector<4xf32>
    %185 = vector.multi_reduction <maximumf>, %184, %cst_62 [1] : vector<4x16xf32> to vector<4xf32>
    %186 = vector.shape_cast %185 : vector<4xf32> to vector<4x1xf32>
    %187 = vector.broadcast %186 : vector<4x1xf32> to vector<4x16xf32>
    %188 = arith.subf %184, %187 : vector<4x16xf32>
    %189 = math.exp %188 : vector<4x16xf32>
    %cst_63 = arith.constant dense<0.000000e+00> : vector<4xf32>
    %190 = vector.multi_reduction <add>, %189, %cst_63 [1] : vector<4x16xf32> to vector<4xf32>
    %191 = vector.shape_cast %190 : vector<4xf32> to vector<4x1xf32>
    %192 = tpu.reciprocal %191 {approx = true} : vector<4x1xf32> -> vector<4x1xf32>
    %193 = vector.broadcast %192 : vector<4x1xf32> to vector<4x16xf32>
    %194 = arith.mulf %189, %193 : vector<4x16xf32>
    %195 = arith.addf %177, %194 : vector<4x16xf32>
    %196 = vector.extract_strided_slice %52 {offsets = [0, 112], sizes = [16, 16], strides = [1, 1]} : vector<16x128xf32> to vector<16x16xf32>
    %cst_64 = arith.constant dense<0.000000e+00> : vector<4x16xf32>
    %197 = tpu.matmul %194, %196, %cst_64 {dimension_numbers = #tpu.dot_dimension_numbers<[1], [0], [0], [1], [0, 0, 1, 1], [], []>} : vector<4x16xf32>, vector<16x16xf32>, vector<4x16xf32> -> vector<4x16xf32>
    %cst_65 = arith.constant 1.250000e-01 : f32
    %198 = vector.broadcast %cst_65 : f32 to vector<4x16xf32>
    %199 = arith.mulf %195, %198 : vector<4x16xf32>
    %c0_66 = arith.constant 0 : index
    %c0_67 = arith.constant 0 : index
    %c0_68 = arith.constant 0 : index
    %200 = vector.load %arg16[%c0_66, %c0_67, %c0_68] : memref<2x4x16xf32, #tpu.memory_space<vmem>>, vector<1x4x16xf32>
    %201 = vector.shape_cast %200 : vector<1x4x16xf32> to vector<4x16xf32>
    %202 = vector.shape_cast %199 : vector<4x16xf32> to vector<1x4x16xf32>
    tpu.vector_store %arg16[%c0_66, %c0_67, %c0_68], %202 {strides = array<i32>} : memref<2x4x16xf32, #tpu.memory_space<vmem>>, vector<1x4x16xf32>,
    %203 = tpu.concatenate %71, %89, %107, %125, %143, %161, %179, %197 in 1 : vector<4x16xf32>, vector<4x16xf32>, vector<4x16xf32>, vector<4x16xf32>, vector<4x16xf32>, vector<4x16xf32>, vector<4x16xf32>, vector<4x16xf32> -> vector<4x128xf32>
    %204 = vector.extract_strided_slice %49 {offsets = [4, 0], sizes = [4, 128], strides = [1, 1]} : vector<8x128xf32> to vector<4x128xf32>
    %205 = vector.extract_strided_slice %17 {offsets = [16, 0], sizes = [16, 128], strides = [1, 1]} : vector<32x128xf32> to vector<16x128xf32>
    %206 = vector.extract_strided_slice %18 {offsets = [16, 0], sizes = [16, 128], strides = [1, 1]} : vector<32x128xf32> to vector<16x128xf32>
    %cst_69 = arith.constant 0.000000e+00 : f32
    %207 = vector.broadcast %cst_69 : f32 to vector<4x16xf32>
    %208 = vector.extract_strided_slice %204 {offsets = [0, 0], sizes = [4, 16], strides = [1, 1]} : vector<4x128xf32> to vector<4x16xf32>
    %209 = vector.extract_strided_slice %205 {offsets = [0, 0], sizes = [16, 16], strides = [1, 1]} : vector<16x128xf32> to vector<16x16xf32>
    %cst_70 = arith.constant dense<0.000000e+00> : vector<4x16xf32>
    %210 = tpu.matmul %208, %209, %cst_70 {dimension_numbers = #tpu.dot_dimension_numbers<[1], [1], [0], [0], [0, 0, 1, 0], [], []>} : vector<4x16xf32>, vector<16x16xf32>, vector<4x16xf32> -> vector<4x16xf32>
    %cst_71 = arith.constant 2.500000e-01 : f32
    %211 = vector.broadcast %cst_71 : f32 to vector<4x16xf32>
    %212 = arith.mulf %210, %211 : vector<4x16xf32>
    %cst_72 = arith.constant dense<0xFF800000> : vector<4xf32>
    %213 = vector.multi_reduction <maximumf>, %212, %cst_72 [1] : vector<4x16xf32> to vector<4xf32>
    %214 = vector.shape_cast %213 : vector<4xf32> to vector<4x1xf32>
    %215 = vector.broadcast %214 : vector<4x1xf32> to vector<4x16xf32>
    %216 = arith.subf %212, %215 : vector<4x16xf32>
    %217 = math.exp %216 : vector<4x16xf32>
    %cst_73 = arith.constant dense<0.000000e+00> : vector<4xf32>
    %218 = vector.multi_reduction <add>, %217, %cst_73 [1] : vector<4x16xf32> to vector<4xf32>
    %219 = vector.shape_cast %218 : vector<4xf32> to vector<4x1xf32>
    %220 = tpu.reciprocal %219 {approx = true} : vector<4x1xf32> -> vector<4x1xf32>
    %221 = vector.broadcast %220 : vector<4x1xf32> to vector<4x16xf32>
    %222 = arith.mulf %217, %221 : vector<4x16xf32>
    %223 = arith.addf %207, %222 : vector<4x16xf32>
    %224 = vector.extract_strided_slice %206 {offsets = [0, 0], sizes = [16, 16], strides = [1, 1]} : vector<16x128xf32> to vector<16x16xf32>
    %cst_74 = arith.constant dense<0.000000e+00> : vector<4x16xf32>
    %225 = tpu.matmul %222, %224, %cst_74 {dimension_numbers = #tpu.dot_dimension_numbers<[1], [0], [0], [1], [0, 0, 1, 1], [], []>} : vector<4x16xf32>, vector<16x16xf32>, vector<4x16xf32> -> vector<4x16xf32>
    %226 = vector.extract_strided_slice %204 {offsets = [0, 16], sizes = [4, 16], strides = [1, 1]} : vector<4x128xf32> to vector<4x16xf32>
    %227 = vector.extract_strided_slice %205 {offsets = [0, 16], sizes = [16, 16], strides = [1, 1]} : vector<16x128xf32> to vector<16x16xf32>
    %cst_75 = arith.constant dense<0.000000e+00> : vector<4x16xf32>
    %228 = tpu.matmul %226, %227, %cst_75 {dimension_numbers = #tpu.dot_dimension_numbers<[1], [1], [0], [0], [0, 0, 1, 0], [], []>} : vector<4x16xf32>, vector<16x16xf32>, vector<4x16xf32> -> vector<4x16xf32>
    %cst_76 = arith.constant 2.500000e-01 : f32
    %229 = vector.broadcast %cst_76 : f32 to vector<4x16xf32>
    %230 = arith.mulf %228, %229 : vector<4x16xf32>
    %cst_77 = arith.constant dense<0xFF800000> : vector<4xf32>
    %231 = vector.multi_reduction <maximumf>, %230, %cst_77 [1] : vector<4x16xf32> to vector<4xf32>
    %232 = vector.shape_cast %231 : vector<4xf32> to vector<4x1xf32>
    %233 = vector.broadcast %232 : vector<4x1xf32> to vector<4x16xf32>
    %234 = arith.subf %230, %233 : vector<4x16xf32>
    %235 = math.exp %234 : vector<4x16xf32>
    %cst_78 = arith.constant dense<0.000000e+00> : vector<4xf32>
    %236 = vector.multi_reduction <add>, %235, %cst_78 [1] : vector<4x16xf32> to vector<4xf32>
    %237 = vector.shape_cast %236 : vector<4xf32> to vector<4x1xf32>
    %238 = tpu.reciprocal %237 {approx = true} : vector<4x1xf32> -> vector<4x1xf32>
    %239 = vector.broadcast %238 : vector<4x1xf32> to vector<4x16xf32>
    %240 = arith.mulf %235, %239 : vector<4x16xf32>
    %241 = arith.addf %223, %240 : vector<4x16xf32>
    %242 = vector.extract_strided_slice %206 {offsets = [0, 16], sizes = [16, 16], strides = [1, 1]} : vector<16x128xf32> to vector<16x16xf32>
    %cst_79 = arith.constant dense<0.000000e+00> : vector<4x16xf32>
    %243 = tpu.matmul %240, %242, %cst_79 {dimension_numbers = #tpu.dot_dimension_numbers<[1], [0], [0], [1], [0, 0, 1, 1], [], []>} : vector<4x16xf32>, vector<16x16xf32>, vector<4x16xf32> -> vector<4x16xf32>
    %244 = vector.extract_strided_slice %204 {offsets = [0, 32], sizes = [4, 16], strides = [1, 1]} : vector<4x128xf32> to vector<4x16xf32>
    %245 = vector.extract_strided_slice %205 {offsets = [0, 32], sizes = [16, 16], strides = [1, 1]} : vector<16x128xf32> to vector<16x16xf32>
    %cst_80 = arith.constant dense<0.000000e+00> : vector<4x16xf32>
    %246 = tpu.matmul %244, %245, %cst_80 {dimension_numbers = #tpu.dot_dimension_numbers<[1], [1], [0], [0], [0, 0, 1, 0], [], []>} : vector<4x16xf32>, vector<16x16xf32>, vector<4x16xf32> -> vector<4x16xf32>
    %cst_81 = arith.constant 2.500000e-01 : f32
    %247 = vector.broadcast %cst_81 : f32 to vector<4x16xf32>
    %248 = arith.mulf %246, %247 : vector<4x16xf32>
    %cst_82 = arith.constant dense<0xFF800000> : vector<4xf32>
    %249 = vector.multi_reduction <maximumf>, %248, %cst_82 [1] : vector<4x16xf32> to vector<4xf32>
    %250 = vector.shape_cast %249 : vector<4xf32> to vector<4x1xf32>
    %251 = vector.broadcast %250 : vector<4x1xf32> to vector<4x16xf32>
    %252 = arith.subf %248, %251 : vector<4x16xf32>
    %253 = math.exp %252 : vector<4x16xf32>
    %cst_83 = arith.constant dense<0.000000e+00> : vector<4xf32>
    %254 = vector.multi_reduction <add>, %253, %cst_83 [1] : vector<4x16xf32> to vector<4xf32>
    %255 = vector.shape_cast %254 : vector<4xf32> to vector<4x1xf32>
    %256 = tpu.reciprocal %255 {approx = true} : vector<4x1xf32> -> vector<4x1xf32>
    %257 = vector.broadcast %256 : vector<4x1xf32> to vector<4x16xf32>
    %258 = arith.mulf %253, %257 : vector<4x16xf32>
    %259 = arith.addf %241, %258 : vector<4x16xf32>
    %260 = vector.extract_strided_slice %206 {offsets = [0, 32], sizes = [16, 16], strides = [1, 1]} : vector<16x128xf32> to vector<16x16xf32>
    %cst_84 = arith.constant dense<0.000000e+00> : vector<4x16xf32>
    %261 = tpu.matmul %258, %260, %cst_84 {dimension_numbers = #tpu.dot_dimension_numbers<[1], [0], [0], [1], [0, 0, 1, 1], [], []>} : vector<4x16xf32>, vector<16x16xf32>, vector<4x16xf32> -> vector<4x16xf32>
    %262 = vector.extract_strided_slice %204 {offsets = [0, 48], sizes = [4, 16], strides = [1, 1]} : vector<4x128xf32> to vector<4x16xf32>
    %263 = vector.extract_strided_slice %205 {offsets = [0, 48], sizes = [16, 16], strides = [1, 1]} : vector<16x128xf32> to vector<16x16xf32>
    %cst_85 = arith.constant dense<0.000000e+00> : vector<4x16xf32>
    %264 = tpu.matmul %262, %263, %cst_85 {dimension_numbers = #tpu.dot_dimension_numbers<[1], [1], [0], [0], [0, 0, 1, 0], [], []>} : vector<4x16xf32>, vector<16x16xf32>, vector<4x16xf32> -> vector<4x16xf32>
    %cst_86 = arith.constant 2.500000e-01 : f32
    %265 = vector.broadcast %cst_86 : f32 to vector<4x16xf32>
    %266 = arith.mulf %264, %265 : vector<4x16xf32>
    %cst_87 = arith.constant dense<0xFF800000> : vector<4xf32>
    %267 = vector.multi_reduction <maximumf>, %266, %cst_87 [1] : vector<4x16xf32> to vector<4xf32>
    %268 = vector.shape_cast %267 : vector<4xf32> to vector<4x1xf32>
    %269 = vector.broadcast %268 : vector<4x1xf32> to vector<4x16xf32>
    %270 = arith.subf %266, %269 : vector<4x16xf32>
    %271 = math.exp %270 : vector<4x16xf32>
    %cst_88 = arith.constant dense<0.000000e+00> : vector<4xf32>
    %272 = vector.multi_reduction <add>, %271, %cst_88 [1] : vector<4x16xf32> to vector<4xf32>
    %273 = vector.shape_cast %272 : vector<4xf32> to vector<4x1xf32>
    %274 = tpu.reciprocal %273 {approx = true} : vector<4x1xf32> -> vector<4x1xf32>
    %275 = vector.broadcast %274 : vector<4x1xf32> to vector<4x16xf32>
    %276 = arith.mulf %271, %275 : vector<4x16xf32>
    %277 = arith.addf %259, %276 : vector<4x16xf32>
    %278 = vector.extract_strided_slice %206 {offsets = [0, 48], sizes = [16, 16], strides = [1, 1]} : vector<16x128xf32> to vector<16x16xf32>
    %cst_89 = arith.constant dense<0.000000e+00> : vector<4x16xf32>
    %279 = tpu.matmul %276, %278, %cst_89 {dimension_numbers = #tpu.dot_dimension_numbers<[1], [0], [0], [1], [0, 0, 1, 1], [], []>} : vector<4x16xf32>, vector<16x16xf32>, vector<4x16xf32> -> vector<4x16xf32>
    %280 = vector.extract_strided_slice %204 {offsets = [0, 64], sizes = [4, 16], strides = [1, 1]} : vector<4x128xf32> to vector<4x16xf32>
    %281 = vector.extract_strided_slice %205 {offsets = [0, 64], sizes = [16, 16], strides = [1, 1]} : vector<16x128xf32> to vector<16x16xf32>
    %cst_90 = arith.constant dense<0.000000e+00> : vector<4x16xf32>
    %282 = tpu.matmul %280, %281, %cst_90 {dimension_numbers = #tpu.dot_dimension_numbers<[1], [1], [0], [0], [0, 0, 1, 0], [], []>} : vector<4x16xf32>, vector<16x16xf32>, vector<4x16xf32> -> vector<4x16xf32>
    %cst_91 = arith.constant 2.500000e-01 : f32
    %283 = vector.broadcast %cst_91 : f32 to vector<4x16xf32>
    %284 = arith.mulf %282, %283 : vector<4x16xf32>
    %cst_92 = arith.constant dense<0xFF800000> : vector<4xf32>
    %285 = vector.multi_reduction <maximumf>, %284, %cst_92 [1] : vector<4x16xf32> to vector<4xf32>
    %286 = vector.shape_cast %285 : vector<4xf32> to vector<4x1xf32>
    %287 = vector.broadcast %286 : vector<4x1xf32> to vector<4x16xf32>
    %288 = arith.subf %284, %287 : vector<4x16xf32>
    %289 = math.exp %288 : vector<4x16xf32>
    %cst_93 = arith.constant dense<0.000000e+00> : vector<4xf32>
    %290 = vector.multi_reduction <add>, %289, %cst_93 [1] : vector<4x16xf32> to vector<4xf32>
    %291 = vector.shape_cast %290 : vector<4xf32> to vector<4x1xf32>
    %292 = tpu.reciprocal %291 {approx = true} : vector<4x1xf32> -> vector<4x1xf32>
    %293 = vector.broadcast %292 : vector<4x1xf32> to vector<4x16xf32>
    %294 = arith.mulf %289, %293 : vector<4x16xf32>
    %295 = arith.addf %277, %294 : vector<4x16xf32>
    %296 = vector.extract_strided_slice %206 {offsets = [0, 64], sizes = [16, 16], strides = [1, 1]} : vector<16x128xf32> to vector<16x16xf32>
    %cst_94 = arith.constant dense<0.000000e+00> : vector<4x16xf32>
    %297 = tpu.matmul %294, %296, %cst_94 {dimension_numbers = #tpu.dot_dimension_numbers<[1], [0], [0], [1], [0, 0, 1, 1], [], []>} : vector<4x16xf32>, vector<16x16xf32>, vector<4x16xf32> -> vector<4x16xf32>
    %298 = vector.extract_strided_slice %204 {offsets = [0, 80], sizes = [4, 16], strides = [1, 1]} : vector<4x128xf32> to vector<4x16xf32>
    %299 = vector.extract_strided_slice %205 {offsets = [0, 80], sizes = [16, 16], strides = [1, 1]} : vector<16x128xf32> to vector<16x16xf32>
    %cst_95 = arith.constant dense<0.000000e+00> : vector<4x16xf32>
    %300 = tpu.matmul %298, %299, %cst_95 {dimension_numbers = #tpu.dot_dimension_numbers<[1], [1], [0], [0], [0, 0, 1, 0], [], []>} : vector<4x16xf32>, vector<16x16xf32>, vector<4x16xf32> -> vector<4x16xf32>
    %cst_96 = arith.constant 2.500000e-01 : f32
    %301 = vector.broadcast %cst_96 : f32 to vector<4x16xf32>
    %302 = arith.mulf %300, %301 : vector<4x16xf32>
    %cst_97 = arith.constant dense<0xFF800000> : vector<4xf32>
    %303 = vector.multi_reduction <maximumf>, %302, %cst_97 [1] : vector<4x16xf32> to vector<4xf32>
    %304 = vector.shape_cast %303 : vector<4xf32> to vector<4x1xf32>
    %305 = vector.broadcast %304 : vector<4x1xf32> to vector<4x16xf32>
    %306 = arith.subf %302, %305 : vector<4x16xf32>
    %307 = math.exp %306 : vector<4x16xf32>
    %cst_98 = arith.constant dense<0.000000e+00> : vector<4xf32>
    %308 = vector.multi_reduction <add>, %307, %cst_98 [1] : vector<4x16xf32> to vector<4xf32>
    %309 = vector.shape_cast %308 : vector<4xf32> to vector<4x1xf32>
    %310 = tpu.reciprocal %309 {approx = true} : vector<4x1xf32> -> vector<4x1xf32>
    %311 = vector.broadcast %310 : vector<4x1xf32> to vector<4x16xf32>
    %312 = arith.mulf %307, %311 : vector<4x16xf32>
    %313 = arith.addf %295, %312 : vector<4x16xf32>
    %314 = vector.extract_strided_slice %206 {offsets = [0, 80], sizes = [16, 16], strides = [1, 1]} : vector<16x128xf32> to vector<16x16xf32>
    %cst_99 = arith.constant dense<0.000000e+00> : vector<4x16xf32>
    %315 = tpu.matmul %312, %314, %cst_99 {dimension_numbers = #tpu.dot_dimension_numbers<[1], [0], [0], [1], [0, 0, 1, 1], [], []>} : vector<4x16xf32>, vector<16x16xf32>, vector<4x16xf32> -> vector<4x16xf32>
    %316 = vector.extract_strided_slice %204 {offsets = [0, 96], sizes = [4, 16], strides = [1, 1]} : vector<4x128xf32> to vector<4x16xf32>
    %317 = vector.extract_strided_slice %205 {offsets = [0, 96], sizes = [16, 16], strides = [1, 1]} : vector<16x128xf32> to vector<16x16xf32>
    %cst_100 = arith.constant dense<0.000000e+00> : vector<4x16xf32>
    %318 = tpu.matmul %316, %317, %cst_100 {dimension_numbers = #tpu.dot_dimension_numbers<[1], [1], [0], [0], [0, 0, 1, 0], [], []>} : vector<4x16xf32>, vector<16x16xf32>, vector<4x16xf32> -> vector<4x16xf32>
    %cst_101 = arith.constant 2.500000e-01 : f32
    %319 = vector.broadcast %cst_101 : f32 to vector<4x16xf32>
    %320 = arith.mulf %318, %319 : vector<4x16xf32>
    %cst_102 = arith.constant dense<0xFF800000> : vector<4xf32>
    %321 = vector.multi_reduction <maximumf>, %320, %cst_102 [1] : vector<4x16xf32> to vector<4xf32>
    %322 = vector.shape_cast %321 : vector<4xf32> to vector<4x1xf32>
    %323 = vector.broadcast %322 : vector<4x1xf32> to vector<4x16xf32>
    %324 = arith.subf %320, %323 : vector<4x16xf32>
    %325 = math.exp %324 : vector<4x16xf32>
    %cst_103 = arith.constant dense<0.000000e+00> : vector<4xf32>
    %326 = vector.multi_reduction <add>, %325, %cst_103 [1] : vector<4x16xf32> to vector<4xf32>
    %327 = vector.shape_cast %326 : vector<4xf32> to vector<4x1xf32>
    %328 = tpu.reciprocal %327 {approx = true} : vector<4x1xf32> -> vector<4x1xf32>
    %329 = vector.broadcast %328 : vector<4x1xf32> to vector<4x16xf32>
    %330 = arith.mulf %325, %329 : vector<4x16xf32>
    %331 = arith.addf %313, %330 : vector<4x16xf32>
    %332 = vector.extract_strided_slice %206 {offsets = [0, 96], sizes = [16, 16], strides = [1, 1]} : vector<16x128xf32> to vector<16x16xf32>
    %cst_104 = arith.constant dense<0.000000e+00> : vector<4x16xf32>
    %333 = tpu.matmul %330, %332, %cst_104 {dimension_numbers = #tpu.dot_dimension_numbers<[1], [0], [0], [1], [0, 0, 1, 1], [], []>} : vector<4x16xf32>, vector<16x16xf32>, vector<4x16xf32> -> vector<4x16xf32>
    %334 = vector.extract_strided_slice %204 {offsets = [0, 112], sizes = [4, 16], strides = [1, 1]} : vector<4x128xf32> to vector<4x16xf32>
    %335 = vector.extract_strided_slice %205 {offsets = [0, 112], sizes = [16, 16], strides = [1, 1]} : vector<16x128xf32> to vector<16x16xf32>
    %cst_105 = arith.constant dense<0.000000e+00> : vector<4x16xf32>
    %336 = tpu.matmul %334, %335, %cst_105 {dimension_numbers = #tpu.dot_dimension_numbers<[1], [1], [0], [0], [0, 0, 1, 0], [], []>} : vector<4x16xf32>, vector<16x16xf32>, vector<4x16xf32> -> vector<4x16xf32>
    %cst_106 = arith.constant 2.500000e-01 : f32
    %337 = vector.broadcast %cst_106 : f32 to vector<4x16xf32>
    %338 = arith.mulf %336, %337 : vector<4x16xf32>
    %cst_107 = arith.constant dense<0xFF800000> : vector<4xf32>
    %339 = vector.multi_reduction <maximumf>, %338, %cst_107 [1] : vector<4x16xf32> to vector<4xf32>
    %340 = vector.shape_cast %339 : vector<4xf32> to vector<4x1xf32>
    %341 = vector.broadcast %340 : vector<4x1xf32> to vector<4x16xf32>
    %342 = arith.subf %338, %341 : vector<4x16xf32>
    %343 = math.exp %342 : vector<4x16xf32>
    %cst_108 = arith.constant dense<0.000000e+00> : vector<4xf32>
    %344 = vector.multi_reduction <add>, %343, %cst_108 [1] : vector<4x16xf32> to vector<4xf32>
    %345 = vector.shape_cast %344 : vector<4xf32> to vector<4x1xf32>
    %346 = tpu.reciprocal %345 {approx = true} : vector<4x1xf32> -> vector<4x1xf32>
    %347 = vector.broadcast %346 : vector<4x1xf32> to vector<4x16xf32>
    %348 = arith.mulf %343, %347 : vector<4x16xf32>
    %349 = arith.addf %331, %348 : vector<4x16xf32>
    %350 = vector.extract_strided_slice %206 {offsets = [0, 112], sizes = [16, 16], strides = [1, 1]} : vector<16x128xf32> to vector<16x16xf32>
    %cst_109 = arith.constant dense<0.000000e+00> : vector<4x16xf32>
    %351 = tpu.matmul %348, %350, %cst_109 {dimension_numbers = #tpu.dot_dimension_numbers<[1], [0], [0], [1], [0, 0, 1, 1], [], []>} : vector<4x16xf32>, vector<16x16xf32>, vector<4x16xf32> -> vector<4x16xf32>
    %cst_110 = arith.constant 1.250000e-01 : f32
    %352 = vector.broadcast %cst_110 : f32 to vector<4x16xf32>
    %353 = arith.mulf %349, %352 : vector<4x16xf32>
    %c1 = arith.constant 1 : index
    %c0_111 = arith.constant 0 : index
    %c0_112 = arith.constant 0 : index
    %354 = vector.load %arg16[%c1, %c0_111, %c0_112] : memref<2x4x16xf32, #tpu.memory_space<vmem>>, vector<1x4x16xf32>
    %355 = vector.shape_cast %354 : vector<1x4x16xf32> to vector<4x16xf32>
    %356 = vector.shape_cast %353 : vector<4x16xf32> to vector<1x4x16xf32>
    tpu.vector_store %arg16[%c1, %c0_111, %c0_112], %356 {strides = array<i32>} : memref<2x4x16xf32, #tpu.memory_space<vmem>>, vector<1x4x16xf32>,
    %357 = tpu.concatenate %225, %243, %261, %279, %297, %315, %333, %351 in 1 : vector<4x16xf32>, vector<4x16xf32>, vector<4x16xf32>, vector<4x16xf32>, vector<4x16xf32>, vector<4x16xf32>, vector<4x16xf32>, vector<4x16xf32> -> vector<4x128xf32>
    %358 = tpu.concatenate %203, %357 in 0 : vector<4x128xf32>, vector<4x128xf32> -> vector<8x128xf32>
    %c0_113 = arith.constant 0 : index
    %c0_114 = arith.constant 0 : index
    %359 = vector.load %arg10[%c0_113, %c0_114] : memref<128x128xf32, #tpu.memory_space<vmem>>, vector<128x128xf32>
    %cst_115 = arith.constant dense<0.000000e+00> : vector<8x128xf32>
    %360 = tpu.matmul %358, %359, %cst_115 {dimension_numbers = #tpu.dot_dimension_numbers<[1], [0], [0], [1], [0, 0, 1, 1], [], []>} : vector<8x128xf32>, vector<128x128xf32>, vector<8x128xf32> -> vector<8x128xf32>
    %c0_116 = arith.constant 0 : index
    %c0_117 = arith.constant 0 : index
    %361 = vector.load %arg11[%c0_116, %c0_117] : memref<1x128xf32, #tpu.memory_space<vmem>>, vector<1x128xf32>
    %362 = vector.broadcast %361 : vector<1x128xf32> to vector<8x128xf32>
    %363 = arith.addf %360, %362 : vector<8x128xf32>
    %364 = vector.extract_strided_slice %363 {offsets = [0, 0], sizes = [4, 128], strides = [1, 1]} : vector<8x128xf32> to vector<4x128xf32>
    %cst_118 = arith.constant dense<0.000000e+00> : vector<128xf32>
    %365 = vector.multi_reduction <add>, %364, %cst_118 [0] : vector<4x128xf32> to vector<128xf32>
    %366 = vector.shape_cast %365 : vector<128xf32> to vector<1x128xf32>
    %cst_119 = arith.constant 4.000000e+00 : f32
    %367 = vector.broadcast %cst_119 : f32 to vector<1x128xf32>
    %368 = arith.divf %366, %367 : vector<1x128xf32>
    %369 = vector.extract_strided_slice %363 {offsets = [4, 0], sizes = [4, 128], strides = [1, 1]} : vector<8x128xf32> to vector<4x128xf32>
    %cst_120 = arith.constant dense<0.000000e+00> : vector<128xf32>
    %370 = vector.multi_reduction <add>, %369, %cst_120 [0] : vector<4x128xf32> to vector<128xf32>
    %371 = vector.shape_cast %370 : vector<128xf32> to vector<1x128xf32>
    %cst_121 = arith.constant 4.000000e+00 : f32
    %372 = vector.broadcast %cst_121 : f32 to vector<1x128xf32>
    %373 = arith.divf %371, %372 : vector<1x128xf32>
    %374 = tpu.concatenate %368, %373 in 0 : vector<1x128xf32>, vector<1x128xf32> -> vector<2x128xf32>
    %c0_122 = arith.constant 0 : index
    %c0_123 = arith.constant 0 : index
    %375 = vector.load %arg12[%c0_122, %c0_123] : memref<128x10xf32, #tpu.memory_space<vmem>>, vector<128x10xf32>
    %cst_124 = arith.constant dense<0.000000e+00> : vector<2x10xf32>
    %376 = tpu.matmul %374, %375, %cst_124 {dimension_numbers = #tpu.dot_dimension_numbers<[1], [0], [0], [1], [0, 0, 1, 1], [], []>} : vector<2x128xf32>, vector<128x10xf32>, vector<2x10xf32> -> vector<2x10xf32>
    %c0_125 = arith.constant 0 : index
    %c0_126 = arith.constant 0 : index
    %377 = vector.load %arg13[%c0_125, %c0_126] : memref<1x10xf32, #tpu.memory_space<vmem>>, vector<1x10xf32>
    %378 = vector.broadcast %377 : vector<1x10xf32> to vector<2x10xf32>
    %379 = arith.addf %376, %378 : vector<2x10xf32>
    %c0_127 = arith.constant 0 : index
    %c0_128 = arith.constant 0 : index
    %380 = vector.load %arg15[%c0_127, %c0_128] : memref<2x10xf32, #tpu.memory_space<vmem>>, vector<2x10xf32>
    tpu.vector_store %arg15[%c0_127, %c0_128], %379 {strides = array<i32>} : memref<2x10xf32, #tpu.memory_space<vmem>>, vector<2x10xf32>,
    return
  }
  func.func @transform_0(%arg0: i32) -> (i32, i32, i32) {
    %c0_i32 = arith.constant 0 : i32
    %c0_i32_0 = arith.constant 0 : i32
    %c0_i32_1 = arith.constant 0 : i32
    %c0_i32_2 = arith.constant 0 : i32
    return %c0_i32, %c0_i32_0, %c0_i32_1 : i32, i32, i32
  }
  func.func @transform_1(%arg0: i32) -> (i32, i32) {
    %c0_i32 = arith.constant 0 : i32
    %c0_i32_0 = arith.constant 0 : i32
    %c0_i32_1 = arith.constant 0 : i32
    return %c0_i32, %c0_i32_0 : i32, i32
  }
  func.func @transform_2(%arg0: i32) -> (i32, i32, i32) {
    %c0_i32 = arith.constant 0 : i32
    %c0_i32_0 = arith.constant 0 : i32
    %c0_i32_1 = arith.constant 0 : i32
    %c0_i32_2 = arith.constant 0 : i32
    return %c0_i32, %c0_i32_0, %c0_i32_1 : i32, i32, i32
  }
  func.func @transform_3(%arg0: i32) -> (i32, i32) {
    %c0_i32 = arith.constant 0 : i32
    %c0_i32_0 = arith.constant 0 : i32
    %c0_i32_1 = arith.constant 0 : i32
    return %c0_i32, %c0_i32_0 : i32, i32
  }
  func.func @transform_4(%arg0: i32) -> (i32, i32) {
    %c0_i32 = arith.constant 0 : i32
    %c0_i32_0 = arith.constant 0 : i32
    %c0_i32_1 = arith.constant 0 : i32
    return %c0_i32, %c0_i32_0 : i32, i32
  }
  func.func @transform_5(%arg0: i32) -> (i32, i32) {
    %c0_i32 = arith.constant 0 : i32
    %c0_i32_0 = arith.constant 0 : i32
    %c0_i32_1 = arith.constant 0 : i32
    return %c0_i32, %c0_i32_0 : i32, i32
  }
  func.func @transform_6(%arg0: i32) -> (i32, i32) {
    %c0_i32 = arith.constant 0 : i32
    %c0_i32_0 = arith.constant 0 : i32
    %c0_i32_1 = arith.constant 0 : i32
    return %c0_i32, %c0_i32_0 : i32, i32
  }
  func.func @transform_7(%arg0: i32) -> (i32, i32) {
    %c0_i32 = arith.constant 0 : i32
    %c0_i32_0 = arith.constant 0 : i32
    %c0_i32_1 = arith.constant 0 : i32
    return %c0_i32, %c0_i32_0 : i32, i32
  }
  func.func @transform_8(%arg0: i32) -> (i32, i32) {
    %c0_i32 = arith.constant 0 : i32
    %c0_i32_0 = arith.constant 0 : i32
    %c0_i32_1 = arith.constant 0 : i32
    return %c0_i32, %c0_i32_0 : i32, i32
  }
  func.func @transform_9(%arg0: i32) -> (i32, i32) {
    %c0_i32 = arith.constant 0 : i32
    %c0_i32_0 = arith.constant 0 : i32
    %c0_i32_1 = arith.constant 0 : i32
    return %c0_i32, %c0_i32_0 : i32, i32
  }
  func.func @transform_10(%arg0: i32) -> (i32, i32) {
    %c0_i32 = arith.constant 0 : i32
    %c0_i32_0 = arith.constant 0 : i32
    %c0_i32_1 = arith.constant 0 : i32
    return %c0_i32, %c0_i32_0 : i32, i32
  }
  func.func @transform_11(%arg0: i32) -> (i32, i32) {
    %c0_i32 = arith.constant 0 : i32
    %c0_i32_0 = arith.constant 0 : i32
    %c0_i32_1 = arith.constant 0 : i32
    return %c0_i32, %c0_i32_0 : i32, i32
  }
  func.func @transform_12(%arg0: i32) -> (i32, i32) {
    %c0_i32 = arith.constant 0 : i32
    %c0_i32_0 = arith.constant 0 : i32
    %c0_i32_1 = arith.constant 0 : i32
    return %c0_i32, %c0_i32_0 : i32, i32
  }
  func.func @transform_13(%arg0: i32) -> (i32, i32) {
    %c0_i32 = arith.constant 0 : i32
    %c0_i32_0 = arith.constant 0 : i32
    %c0_i32_1 = arith.constant 0 : i32
    return %c0_i32, %c0_i32_0 : i32, i32
  }
  func.func @transform_14(%arg0: i32) -> (i32, i32) {
    %c0_i32 = arith.constant 0 : i32
    %c0_i32_0 = arith.constant 0 : i32
    %c0_i32_1 = arith.constant 0 : i32
    return %c0_i32, %c0_i32_0 : i32, i32
  }
  func.func @transform_15(%arg0: i32) -> (i32, i32, i32) {
    %c0_i32 = arith.constant 0 : i32
    %c0_i32_0 = arith.constant 0 : i32
    %c0_i32_1 = arith.constant 0 : i32
    %c0_i32_2 = arith.constant 0 : i32
    return %c0_i32, %c0_i32_0, %c0_i32_1 : i32, i32, i32
  }
}

</mosaic_0001>

<llo_original>
// kernel: dual_head_forward.1
$region0: #{dual_head_forward.1}
  #allocation0 [shape = 'u32[]', space=smem, size = 0x4, offset = 0x4, fixed_abs, tag = 'smem constant byte address 0x4 - core index']
  #allocation1 [shape = 'u32[144,128]{1,0:T(1,128)}', space=vmem, size = 0x12000, scoped, tag = 'internal scratch']
  %s0 = inlined_call_operand.vmem [shape: f32[2,16,128], index: 0, kind: input, shape index: {}]
  %s1 = inlined_call_operand.vmem [shape: f32[2,128], index: 1, kind: input, shape index: {}]
  %s2 = inlined_call_operand.vmem [shape: f32[4,2,128], index: 2, kind: input, shape index: {}]
  %s3 = inlined_call_operand.vmem [shape: f32[128,128], index: 3, kind: input, shape index: {}]
  %s4 = inlined_call_operand.hbm [shape: f32[1,128], index: 4, kind: input, shape index: {}]
  %s5 = inlined_call_operand.hbm [shape: f32[128,128], index: 5, kind: input, shape index: {}]
  %s6 = inlined_call_operand.hbm [shape: f32[1,128], index: 6, kind: input, shape index: {}]
  %s7 = inlined_call_operand.hbm [shape: f32[128,256], index: 7, kind: input, shape index: {}]
  %s8 = inlined_call_operand.hbm [shape: f32[1,256], index: 8, kind: input, shape index: {}]
  %s9 = inlined_call_operand.hbm [shape: f32[128,128], index: 9, kind: input, shape index: {}]
  %s10 = inlined_call_operand.hbm [shape: f32[1,128], index: 10, kind: input, shape index: {}]
  %s11 = inlined_call_operand.vmem [shape: f32[128,10], index: 11, kind: input, shape index: {}]
  %s12 = inlined_call_operand.hbm [shape: f32[1,10], index: 12, kind: input, shape index: {}]
  %s13 = inlined_call_operand.vmem [shape: f32[2,1], index: 13, kind: output, shape index: {0}]
  %s14 = inlined_call_operand.hbm [shape: f32[2,10], index: 14, kind: output, shape index: {1}]
  %s15 = inlined_call_operand.hbm [shape: f32[2,4,16], index: 15, kind: output, shape index: {2}]
  %16 = xla_tuple %s13, %s14, %s15
  %s17 = sld [smem:[#allocation0]]
  $region110: #{dual_head_forward.1} parent=0
    _
  %s19 = ssub.s32 1, %s17
  %s20 = scalar_select 0, %s19, %s17
  $region1: #{dual_head_forward.1} parent=0
    #allocation2 [shape = 'u8[512]{0}', space=vmem, size = 0x400, scoped, tag = 'input window, operand 4, single buffered']
    #allocation3 [shape = 's32[1]{0}', space=sflag, size = 0x4, scoped, tag = 'scoped memory for dual_head_forward.1']
    #allocation4 [shape = 's32[1]{0}', space=sflag, size = 0x4, scoped, tag = 'scoped memory for dual_head_forward.1']
    #allocation5 [shape = 'u8[65536]{0}', space=vmem, size = 0x10000, scoped, tag = 'input window, operand 5, single buffered']
    #allocation6 [shape = 's32[1]{0}', space=sflag, size = 0x4, scoped, tag = 'scoped memory for dual_head_forward.1']
    #allocation7 [shape = 'u8[512]{0}', space=vmem, size = 0x400, scoped, tag = 'input window, operand 6, single buffered']
    #allocation8 [shape = 'u8[131072]{0}', space=vmem, size = 0x20000, scoped, tag = 'input window, operand 7, single buffered']
    #allocation9 [shape = 's32[1]{0}', space=sflag, size = 0x4, scoped, tag = 'scoped memory for dual_head_forward.1']
    #allocation10 [shape = 'u8[1024]{0}', space=vmem, size = 0x400, scoped, tag = 'input window, operand 8, single buffered']
    #allocation11 [shape = 'u8[65536]{0}', space=vmem, size = 0x10000, scoped, tag = 'input window, operand 9, single buffered']
    #allocation12 [shape = 's32[1]{0}', space=sflag, size = 0x4, scoped, tag = 'scoped memory for dual_head_forward.1']
    #allocation13 [shape = 'u8[512]{0}', space=vmem, size = 0x400, scoped, tag = 'input window, operand 10, single buffered']
    #allocation14 [shape = 'u8[512]{0}', space=vmem, size = 0x400, scoped, tag = 'input window, operand 12, single buffered']
    #allocation15 [shape = 's32[1]{0}', space=sflag, size = 0x4, scoped, tag = 'scoped memory for dual_head_forward.1']
    #allocation16 [shape = 'u8[1024]{0}', space=vmem, size = 0x400, scoped, tag = 'output window, operand 1, single buffered']
    #allocation17 [shape = 'u8[4096]{0}', space=vmem, size = 0x1000, scoped, tag = 'output window, operand 2, single buffered']
    #allocation18 [shape = 's32[1]{0}', space=sflag, size = 0x4, scoped, tag = 'scoped memory for dual_head_forward.1']
    %21 = vsyncpa [#allocation3], 0
    %22 = vsyncpa [#allocation6], 0
    %23 = vsyncpa [#allocation9], 0
    %24 = vsyncpa [#allocation12], 0
    %25 = vsyncpa [#allocation15], 0
    %26 = vsyncpa [#allocation4], 0
    %27 = vsyncpa [#allocation18], 0
    // Predicated region
    $region2: #{dual_head_forward.1} parent=1 // pred_check
      _
    $region3: #{dual_head_forward.1} parent=1 // pred_check_branch
      %29 = sbr.rel (0) target = $region5
    $region4: #{dual_head_forward.1} parent=1 // pred_region
      _
    $region5: #{dual_head_forward.1} parent=1 // pred_fallthru
      _
    // Predicated region
    $region6: #{dual_head_forward.1} parent=1 // pred_check
      _
    $region7: #{dual_head_forward.1} parent=1 // pred_check_branch
      %31 = sbr.rel (0) target = $region9
    $region8: #{dual_head_forward.1} parent=1 // pred_region
      _
    $region9: #{dual_head_forward.1} parent=1 // pred_fallthru
      _
    // Predicated region
    $region10: #{dual_head_forward.1} parent=1 // pred_check
      _
    $region11: #{dual_head_forward.1} parent=1 // pred_check_branch
      %33 = sbr.rel (0) target = $region13
    $region12: #{dual_head_forward.1} parent=1 // pred_region
      _
    $region13: #{dual_head_forward.1} parent=1 // pred_fallthru
      _
    // Predicated region
    $region14: #{dual_head_forward.1} parent=1 // pred_check
      _
    $region15: #{dual_head_forward.1} parent=1 // pred_check_branch
      %35 = sbr.rel (0) target = $region17
    $region16: #{dual_head_forward.1} parent=1 // pred_region
      _
    $region17: #{dual_head_forward.1} parent=1 // pred_fallthru
      _
    // Predicated region
    $region18: #{dual_head_forward.1} parent=1 // pred_check
      _
    $region19: #{dual_head_forward.1} parent=1 // pred_check_branch
      %37 = sbr.rel (0) target = $region21
    $region20: #{dual_head_forward.1} parent=1 // pred_region
      %s39 = ssub.s32 16, 16
      %40 = vsyncadd [#allocation3], %s39
      %s42 = sshll.u32 [#allocation2], 4
      %s43 = int_to_ptr.vmem [resolvable:$true] %s42
      %45 = dma.hbm_to_vmem [thread:$0]  %s4, 16, %s43, [#allocation3]
    $region21: #{dual_head_forward.1} parent=1 // pred_fallthru
      _
    // Predicated region
    $region22: #{dual_head_forward.1} parent=1 // pred_check
      _
    $region23: #{dual_head_forward.1} parent=1 // pred_check_branch
      %47 = sbr.rel (0) target = $region25
    $region24: #{dual_head_forward.1} parent=1 // pred_region
      %s49 = ssub.s32 2048, 2048
      %50 = vsyncadd [#allocation6], %s49
      %s51 = sshll.u32 [#allocation5], 4
      %s52 = int_to_ptr.vmem [resolvable:$true] %s51
      %57 = dma.hbm_to_vmem [thread:$0]  %s5, 2048, %s52, [#allocation6], 128, 128, 8
    $region25: #{dual_head_forward.1} parent=1 // pred_fallthru
      _
    // Predicated region
    $region26: #{dual_head_forward.1} parent=1 // pred_check
      _
    $region27: #{dual_head_forward.1} parent=1 // pred_check_branch
      %59 = sbr.rel (0) target = $region29
    $region28: #{dual_head_forward.1} parent=1 // pred_region
      %s61 = ssub.s32 16, 16
      %62 = vsyncadd [#allocation6], %s61
      %s64 = sshll.u32 [#allocation7], 4
      %s65 = int_to_ptr.vmem [resolvable:$true] %s64
      %67 = dma.hbm_to_vmem [thread:$0]  %s6, 16, %s65, [#allocation6]
    $region29: #{dual_head_forward.1} parent=1 // pred_fallthru
      _
    // Predicated region
    $region30: #{dual_head_forward.1} parent=1 // pred_check
      _
    $region31: #{dual_head_forward.1} parent=1 // pred_check_branch
      %69 = sbr.rel (0) target = $region33
    $region32: #{dual_head_forward.1} parent=1 // pred_region
      %s71 = ssub.s32 4096, 4096
      %72 = vsyncadd [#allocation9], %s71
      %s73 = sshll.u32 [#allocation8], 4
      %s74 = int_to_ptr.vmem [resolvable:$true] %s73
      %79 = dma.hbm_to_vmem [thread:$0]  %s7, 4096, %s74, [#allocation9], 256, 256, 16
    $region33: #{dual_head_forward.1} parent=1 // pred_fallthru
      _
    // Predicated region
    $region34: #{dual_head_forward.1} parent=1 // pred_check
      _
    $region35: #{dual_head_forward.1} parent=1 // pred_check_branch
      %81 = sbr.rel (0) target = $region37
    $region36: #{dual_head_forward.1} parent=1 // pred_region
      %s83 = ssub.s32 32, 32
      %84 = vsyncadd [#allocation9], %s83
      %s86 = sshll.u32 [#allocation10], 4
      %s87 = int_to_ptr.vmem [resolvable:$true] %s86
      %89 = dma.hbm_to_vmem [thread:$0]  %s8, 32, %s87, [#allocation9]
    $region37: #{dual_head_forward.1} parent=1 // pred_fallthru
      _
    // Predicated region
    $region38: #{dual_head_forward.1} parent=1 // pred_check
      _
    $region39: #{dual_head_forward.1} parent=1 // pred_check_branch
      %91 = sbr.rel (0) target = $region41
    $region40: #{dual_head_forward.1} parent=1 // pred_region
      %s93 = ssub.s32 2048, 2048
      %94 = vsyncadd [#allocation12], %s93
      %s95 = sshll.u32 [#allocation11], 4
      %s96 = int_to_ptr.vmem [resolvable:$true] %s95
      %101 = dma.hbm_to_vmem [thread:$0]  %s9, 2048, %s96, [#allocation12], 128, 128, 8
    $region41: #{dual_head_forward.1} parent=1 // pred_fallthru
      _
    // Predicated region
    $region42: #{dual_head_forward.1} parent=1 // pred_check
      _
    $region43: #{dual_head_forward.1} parent=1 // pred_check_branch
      %103 = sbr.rel (0) target = $region45
    $region44: #{dual_head_forward.1} parent=1 // pred_region
      %s105 = ssub.s32 16, 16
      %106 = vsyncadd [#allocation12], %s105
      %s108 = sshll.u32 [#allocation13], 4
      %s109 = int_to_ptr.vmem [resolvable:$true] %s108
      %111 = dma.hbm_to_vmem [thread:$0]  %s10, 16, %s109, [#allocation12]
    $region45: #{dual_head_forward.1} parent=1 // pred_fallthru
      _
    // Predicated region
    $region46: #{dual_head_forward.1} parent=1 // pred_check
      _
    $region47: #{dual_head_forward.1} parent=1 // pred_check_branch
      %113 = sbr.rel (0) target = $region49
    $region48: #{dual_head_forward.1} parent=1 // pred_region
      _
    $region49: #{dual_head_forward.1} parent=1 // pred_fallthru
      _
    // Predicated region
    $region50: #{dual_head_forward.1} parent=1 // pred_check
      _
    $region51: #{dual_head_forward.1} parent=1 // pred_check_branch
      %115 = sbr.rel (0) target = $region53
    $region52: #{dual_head_forward.1} parent=1 // pred_region
      %s117 = ssub.s32 16, 16
      %118 = vsyncadd [#allocation15], %s117
      %s120 = sshll.u32 [#allocation14], 4
      %s121 = int_to_ptr.vmem [resolvable:$true] %s120
      %123 = dma.hbm_to_vmem [thread:$0]  %s12, 16, %s121, [#allocation15]
    $region53: #{dual_head_forward.1} parent=1 // pred_fallthru
      _
    // Predicated region
    $region54: #{dual_head_forward.1} parent=1 // pred_check
      _
    $region55: #{dual_head_forward.1} parent=1 // pred_check_branch
      %125 = sbr.rel (0) target = $region57
    $region56: #{dual_head_forward.1} parent=1 // pred_region
      %126 = dma.done [#allocation3], 16
    $region57: #{dual_head_forward.1} parent=1 // pred_fallthru
      _
    // Predicated region
    $region58: #{dual_head_forward.1} parent=1 // pred_check
      _
    $region59: #{dual_head_forward.1} parent=1 // pred_check_branch
      %128 = sbr.rel (0) target = $region61
    $region60: #{dual_head_forward.1} parent=1 // pred_region
      %129 = dma.done [#allocation6], 2048
    $region61: #{dual_head_forward.1} parent=1 // pred_fallthru
      _
    // Predicated region
    $region62: #{dual_head_forward.1} parent=1 // pred_check
      _
    $region63: #{dual_head_forward.1} parent=1 // pred_check_branch
      %131 = sbr.rel (0) target = $region65
    $region64: #{dual_head_forward.1} parent=1 // pred_region
      %132 = dma.done [#allocation6], 16
    $region65: #{dual_head_forward.1} parent=1 // pred_fallthru
      _
    // Predicated region
    $region66: #{dual_head_forward.1} parent=1 // pred_check
      _
    $region67: #{dual_head_forward.1} parent=1 // pred_check_branch
      %134 = sbr.rel (0) target = $region69
    $region68: #{dual_head_forward.1} parent=1 // pred_region
      %135 = dma.done [#allocation9], 4096
    $region69: #{dual_head_forward.1} parent=1 // pred_fallthru
      _
    // Predicated region
    $region70: #{dual_head_forward.1} parent=1 // pred_check
      _
    $region71: #{dual_head_forward.1} parent=1 // pred_check_branch
      %137 = sbr.rel (0) target = $region73
    $region72: #{dual_head_forward.1} parent=1 // pred_region
      %138 = dma.done [#allocation9], 32
    $region73: #{dual_head_forward.1} parent=1 // pred_fallthru
      _
    // Predicated region
    $region74: #{dual_head_forward.1} parent=1 // pred_check
      _
    $region75: #{dual_head_forward.1} parent=1 // pred_check_branch
      %140 = sbr.rel (0) target = $region77
    $region76: #{dual_head_forward.1} parent=1 // pred_region
      %141 = dma.done [#allocation12], 2048
    $region77: #{dual_head_forward.1} parent=1 // pred_fallthru
      _
    // Predicated region
    $region78: #{dual_head_forward.1} parent=1 // pred_check
      _
    $region79: #{dual_head_forward.1} parent=1 // pred_check_branch
      %143 = sbr.rel (0) target = $region81
    $region80: #{dual_head_forward.1} parent=1 // pred_region
      %144 = dma.done [#allocation12], 16
    $region81: #{dual_head_forward.1} parent=1 // pred_fallthru
      _
    // Predicated region
    $region82: #{dual_head_forward.1} parent=1 // pred_check
      _
    $region83: #{dual_head_forward.1} parent=1 // pred_check_branch
      %146 = sbr.rel (0) target = $region85
    $region84: #{dual_head_forward.1} parent=1 // pred_region
      %147 = dma.done [#allocation15], 16
    $region85: #{dual_head_forward.1} parent=1 // pred_fallthru
      _
    %v148 = vld [vmem:[%s1] sm:$0x3]
    %v149 = vld [vmem:[%s3] sm:$0xff]
    %v150 = vld [vmem:[%s3 + $0x8] sm:$0xff]
    %v151 = vld [vmem:[%s3 + $0x10] sm:$0xff]
    %v152 = vld [vmem:[%s3 + $0x18] sm:$0xff]
    %v153 = vld [vmem:[%s3 + $0x20] sm:$0xff]
    %v154 = vld [vmem:[%s3 + $0x28] sm:$0xff]
    %v155 = vld [vmem:[%s3 + $0x30] sm:$0xff]
    %v156 = vld [vmem:[%s3 + $0x38] sm:$0xff]
    %v157 = vld [vmem:[%s3 + $0x40] sm:$0xff]
    %v158 = vld [vmem:[%s3 + $0x48] sm:$0xff]
    %v159 = vld [vmem:[%s3 + $0x50] sm:$0xff]
    %v160 = vld [vmem:[%s3 + $0x58] sm:$0xff]
    %v161 = vld [vmem:[%s3 + $0x60] sm:$0xff]
    %v162 = vld [vmem:[%s3 + $0x68] sm:$0xff]
    %v163 = vld [vmem:[%s3 + $0x70] sm:$0xff]
    %v164 = vld [vmem:[%s3 + $0x78] sm:$0xff]
    %v165 = vld [vmem:[#allocation2] sm:$0x1]
    %v167 = vlaneseq
    %v168 = vshrl.u32 %v167, 7
    %v169 = vsub.s32 0, %v168
    %v170 = vrot.slane %v165, %v169
    %172 = vmatprep.subr.mxu0 0.0
    %173 = vmatpush1.msra.mxu0 %v149
    %174 = vmatprep.subr.mxu0 0.0
    %175 = vmatpush1.msra.mxu0 %v150
    %176 = vmatprep.subr.mxu0 0.0
    %177 = vmatpush1.msra.mxu0 %v151
    %178 = vmatprep.subr.mxu0 0.0
    %179 = vmatpush1.msra.mxu0 %v152
    %180 = vmatprep.subr.mxu0 0.0
    %181 = vmatpush1.msra.mxu0 %v153
    %182 = vmatprep.subr.mxu0 0.0
    %183 = vmatpush1.msra.mxu0 %v154
    %184 = vmatprep.subr.mxu0 0.0
    %185 = vmatpush1.msra.mxu0 %v155
    %186 = vmatprep.subr.mxu0 0.0
    %187 = vmatpush1.msra.mxu0 %v156
    %188 = vmatprep.subr.mxu0 0.0
    %189 = vmatpush1.msra.mxu0 %v157
    %190 = vmatprep.subr.mxu0 0.0
    %191 = vmatpush1.msra.mxu0 %v158
    %192 = vmatprep.subr.mxu0 0.0
    %193 = vmatpush1.msra.mxu0 %v159
    %194 = vmatprep.subr.mxu0 0.0
    %195 = vmatpush1.msra.mxu0 %v160
    %196 = vmatprep.subr.mxu0 0.0
    %197 = vmatpush1.msra.mxu0 %v161
    %198 = vmatprep.subr.mxu0 0.0
    %199 = vmatpush1.msra.mxu0 %v162
    %200 = vmatprep.subr.mxu0 0.0
    %201 = vmatpush1.msra.mxu0 %v163
    %202 = vmatprep.subr.mxu0 0.0
    %203 = vmatpush1.msra.mxu0 %v164
    %204 = vmatprep.subr.mxu0 0.0
    %205 = vmatpush1.msra.mxu0 0.0
    %206 = vmatprep.subr.mxu0 0.0
    %207 = vmatpush1.msra.mxu0 0.0
    %208 = vmatprep.subr.mxu0 0.0
    %209 = vmatpush1.msra.mxu0 0.0
    %210 = vmatprep.subr.mxu0 0.0
    %211 = vmatpush1.msra.mxu0 0.0
    %212 = vmatprep.subr.mxu0 0.0
    %213 = vmatpush1.msra.mxu0 0.0
    %214 = vmatprep.subr.mxu0 0.0
    %215 = vmatpush1.msra.mxu0 0.0
    %216 = vmatprep.subr.mxu0 0.0
    %217 = vmatpush1.msra.mxu0 0.0
    %218 = vmatprep.subr.mxu0 0.0
    %219 = vmatpush1.msra.mxu0 0.0
    %220 = vmatprep.subr.mxu0 0.0
    %221 = vmatpush1.msra.mxu0 0.0
    %222 = vmatprep.subr.mxu0 0.0
    %223 = vmatpush1.msra.mxu0 0.0
    %224 = vmatprep.subr.mxu0 0.0
    %225 = vmatpush1.msra.mxu0 0.0
    %226 = vmatprep.subr.mxu0 0.0
    %227 = vmatpush1.msra.mxu0 0.0
    %228 = vmatprep.subr.mxu0 0.0
    %229 = vmatpush1.msra.mxu0 0.0
    %230 = vmatprep.subr.mxu0 0.0
    %231 = vmatpush1.msra.mxu0 0.0
    %232 = vmatprep.subr.mxu0 0.0
    %233 = vmatpush1.msra.mxu0 0.0
    %234 = vmatprep.subr.mxu0 0.0
    %235 = vmatpush1.msra.mxu0 0.0
    %236 = vmatprep.mubr.f32.mxu0 0.0
    %237 = vmatmul.mubr.f32.gmra.mrb[0].mxu0 %v148
    %v238 = vpop.f32.mrb[0].mxu0
    %v239 = vadd.f32 %v170, %v238
    %v240 = vpop.f32.mrb[0].mxu0
    %241 = vdwg.mxu0
    %v242 = vmul.f32 %v239, %v148
    %vm243 = vcmask 1041408
    %v244 = vsel %vm243, %v242, 0.0
    %245 = vadd.xlane.f32.xlu0 %v244
    %v246 = vpop.xlane.xlu0 %245
    %vm247 = vcmask 1024
    %248 = vst.msk [vmem:[%s13] sm:$0x3] %vm247, %v246
    %v249 = vld [vmem:[%s0] sm:$0xff]
    %v250 = vld [vmem:[%s0 + $0x8] sm:$0xff]
    %v251 = vld [vmem:[%s0 + $0x10] sm:$0xff]
    %v252 = vld [vmem:[%s0 + $0x18] sm:$0xff]
    %v253 = vld [vmem:[#allocation8] sm:$0xff]
    %v254 = vld [vmem:[#allocation8 + $0x8] sm:$0xff]
    %v255 = vld [vmem:[#allocation8 + $0x10] sm:$0xff]
    %v256 = vld [vmem:[#allocation8 + $0x18] sm:$0xff]
    %v257 = vld [vmem:[#allocation8 + $0x20] sm:$0xff]
    %v258 = vld [vmem:[#allocation8 + $0x28] sm:$0xff]
    %v259 = vld [vmem:[#allocation8 + $0x30] sm:$0xff]
    %v260 = vld [vmem:[#allocation8 + $0x38] sm:$0xff]
    %v261 = vld [vmem:[#allocation8 + $0x40] sm:$0xff]
    %v262 = vld [vmem:[#allocation8 + $0x48] sm:$0xff]
    %v263 = vld [vmem:[#allocation8 + $0x50] sm:$0xff]
    %v264 = vld [vmem:[#allocation8 + $0x58] sm:$0xff]
    %v265 = vld [vmem:[#allocation8 + $0x60] sm:$0xff]
    %v266 = vld [vmem:[#allocation8 + $0x68] sm:$0xff]
    %v267 = vld [vmem:[#allocation8 + $0x70] sm:$0xff]
    %v268 = vld [vmem:[#allocation8 + $0x78] sm:$0xff]
    %v269 = vld [vmem:[#allocation8 + $0x80] sm:$0xff]
    %v270 = vld [vmem:[#allocation8 + $0x88] sm:$0xff]
    %v271 = vld [vmem:[#allocation8 + $0x90] sm:$0xff]
    %v272 = vld [vmem:[#allocation8 + $0x98] sm:$0xff]
    %v273 = vld [vmem:[#allocation8 + $0xa0] sm:$0xff]
    %v274 = vld [vmem:[#allocation8 + $0xa8] sm:$0xff]
    %v275 = vld [vmem:[#allocation8 + $0xb0] sm:$0xff]
    %v276 = vld [vmem:[#allocation8 + $0xb8] sm:$0xff]
    %v277 = vld [vmem:[#allocation8 + $0xc0] sm:$0xff]
    %v278 = vld [vmem:[#allocation8 + $0xc8] sm:$0xff]
    %v279 = vld [vmem:[#allocation8 + $0xd0] sm:$0xff]
    %v280 = vld [vmem:[#allocation8 + $0xd8] sm:$0xff]
    %v281 = vld [vmem:[#allocation8 + $0xe0] sm:$0xff]
    %v282 = vld [vmem:[#allocation8 + $0xe8] sm:$0xff]
    %v283 = vld [vmem:[#allocation8 + $0xf0] sm:$0xff]
    %v284 = vld [vmem:[#allocation8 + $0xf8] sm:$0xff]
    %v285 = vld [vmem:[#allocation10] sm:$0x3]
    %v287 = vlaneseq
    %v288 = vshrl.u32 %v287, 7
    %v289 = vsub.s32 0, %v288
    %v290 = vrot.slane %v285, %v289
    %v291 = vlaneseq
    %v292 = vshrl.u32 %v291, 7
    %v293 = vsub.s32 1, %v292
    %v294 = vrot.slane %v285, %v293
    %297 = vmatprep.subr.mxu0 %v254
    %298 = vmatpush1.msra.mxu0 %v253
    %299 = vmatprep.subr.mxu0 %v256
    %300 = vmatpush1.msra.mxu0 %v255
    %301 = vmatprep.subr.mxu0 %v258
    %302 = vmatpush1.msra.mxu0 %v257
    %303 = vmatprep.subr.mxu0 %v260
    %304 = vmatpush1.msra.mxu0 %v259
    %305 = vmatprep.subr.mxu0 %v262
    %306 = vmatpush1.msra.mxu0 %v261
    %307 = vmatprep.subr.mxu0 %v264
    %308 = vmatpush1.msra.mxu0 %v263
    %309 = vmatprep.subr.mxu0 %v266
    %310 = vmatpush1.msra.mxu0 %v265
    %311 = vmatprep.subr.mxu0 %v268
    %312 = vmatpush1.msra.mxu0 %v267
    %313 = vmatprep.subr.mxu0 %v270
    %314 = vmatpush1.msra.mxu0 %v269
    %315 = vmatprep.subr.mxu0 %v272
    %316 = vmatpush1.msra.mxu0 %v271
    %317 = vmatprep.subr.mxu0 %v274
    %318 = vmatpush1.msra.mxu0 %v273
    %319 = vmatprep.subr.mxu0 %v276
    %320 = vmatpush1.msra.mxu0 %v275
    %321 = vmatprep.subr.mxu0 %v278
    %322 = vmatpush1.msra.mxu0 %v277
    %323 = vmatprep.subr.mxu0 %v280
    %324 = vmatpush1.msra.mxu0 %v279
    %325 = vmatprep.subr.mxu0 %v282
    %326 = vmatpush1.msra.mxu0 %v281
    %327 = vmatprep.subr.mxu0 %v284
    %328 = vmatpush1.msra.mxu0 %v283
    %329 = vmatprep.subr.mxu0 0.0
    %330 = vmatpush1.msra.mxu0 0.0
    %331 = vmatprep.subr.mxu0 0.0
    %332 = vmatpush1.msra.mxu0 0.0
    %333 = vmatprep.subr.mxu0 0.0
    %334 = vmatpush1.msra.mxu0 0.0
    %335 = vmatprep.subr.mxu0 0.0
    %336 = vmatpush1.msra.mxu0 0.0
    %337 = vmatprep.subr.mxu0 0.0
    %338 = vmatpush1.msra.mxu0 0.0
    %339 = vmatprep.subr.mxu0 0.0
    %340 = vmatpush1.msra.mxu0 0.0
    %341 = vmatprep.subr.mxu0 0.0
    %342 = vmatpush1.msra.mxu0 0.0
    %343 = vmatprep.subr.mxu0 0.0
    %344 = vmatpush1.msra.mxu0 0.0
    %345 = vmatprep.subr.mxu0 0.0
    %346 = vmatpush1.msra.mxu0 0.0
    %347 = vmatprep.subr.mxu0 0.0
    %348 = vmatpush1.msra.mxu0 0.0
    %349 = vmatprep.subr.mxu0 0.0
    %350 = vmatpush1.msra.mxu0 0.0
    %351 = vmatprep.subr.mxu0 0.0
    %352 = vmatpush1.msra.mxu0 0.0
    %353 = vmatprep.subr.mxu0 0.0
    %354 = vmatpush1.msra.mxu0 0.0
    %355 = vmatprep.subr.mxu0 0.0
    %356 = vmatpush1.msra.mxu0 0.0
    %357 = vmatprep.subr.mxu0 0.0
    %358 = vmatpush1.msra.mxu0 0.0
    %359 = vmatprep.subr.mxu0 0.0
    %360 = vmatpush1.msra.mxu0 0.0
    %361 = vmatprep.mubr.f32.mxu0 0.0
    %362 = vmatmul.mubr.f32.gmra.mrb[0].mxu0 %v249
    %v363 = vpop.f32.mrb[0].mxu0
    %v364 = vadd.f32 %v290, %v363
    %v365 = vpop.f32.mrb[0].mxu0
    %v366 = vadd.f32 %v294, %v365
    %367 = vmatprep.mubr.f32.mxu0 0.0
    %368 = vmatmul.mubr.f32.gmra.mrb[0].mxu0 %v250
    %v369 = vpop.f32.mrb[0].mxu0
    %v370 = vadd.f32 %v290, %v369
    %v371 = vpop.f32.mrb[0].mxu0
    %v372 = vadd.f32 %v294, %v371
    %373 = vmatprep.mubr.f32.mxu0 0.0
    %374 = vmatmul.mubr.f32.gmra.mrb[0].mxu0 %v251
    %v375 = vpop.f32.mrb[0].mxu0
    %v376 = vadd.f32 %v290, %v375
    %v377 = vpop.f32.mrb[0].mxu0
    %v378 = vadd.f32 %v294, %v377
    %379 = vmatprep.mubr.f32.mxu0 0.0
    %380 = vmatmul.mubr.f32.gmra.mrb[0].mxu0 %v252
    %v381 = vpop.f32.mrb[0].mxu0
    %v382 = vadd.f32 %v290, %v381
    %v383 = vpop.f32.mrb[0].mxu0
    %v384 = vadd.f32 %v294, %v383
    %385 = vdwg.mxu0
    %v386 = vld [vmem:[%s2] sm:$0x3]
    %v387 = vld [vmem:[%s2 + $0x2] sm:$0x3]
    %v388 = vld [vmem:[%s2 + $0x4] sm:$0x3]
    %v389 = vld [vmem:[%s2 + $0x6] sm:$0x3]
    %v391 = vrot.slane %v387, 7
    %v394 = vrot.slane %v388, 6
    %v397 = vrot.slane %v389, 5
    %v400 = vrot.slane %v386, 5
    %v402 = vrot.slane %v387, 4
    %v404 = vrot.slane %v388, 3
    %v406 = vrot.slane %v389, 2
    %vm408 = vcmask 1040384
    %v409 = vsel %vm408, %v386, %v391
    %v410 = vsel %vm243, %v409, %v394
    %vm411 = vcmask 1042432
    %v412 = vsel %vm411, %v410, %v397
    %vm413 = vcmask 1043456
    %v414 = vsel %vm413, %v412, %v400
    %vm415 = vcmask 1044480
    %v416 = vsel %vm415, %v414, %v402
    %vm417 = vcmask 1045504
    %v418 = vsel %vm417, %v416, %v404
    %vm419 = vcmask 1046528
    %v420 = vsel %vm419, %v418, %v406
    %v421 = vld [vmem:[#allocation5] sm:$0xff]
    %v422 = vld [vmem:[#allocation5 + $0x8] sm:$0xff]
    %v423 = vld [vmem:[#allocation5 + $0x10] sm:$0xff]
    %v424 = vld [vmem:[#allocation5 + $0x18] sm:$0xff]
    %v425 = vld [vmem:[#allocation5 + $0x20] sm:$0xff]
    %v426 = vld [vmem:[#allocation5 + $0x28] sm:$0xff]
    %v427 = vld [vmem:[#allocation5 + $0x30] sm:$0xff]
    %v428 = vld [vmem:[#allocation5 + $0x38] sm:$0xff]
    %v429 = vld [vmem:[#allocation5 + $0x40] sm:$0xff]
    %v430 = vld [vmem:[#allocation5 + $0x48] sm:$0xff]
    %v431 = vld [vmem:[#allocation5 + $0x50] sm:$0xff]
    %v432 = vld [vmem:[#allocation5 + $0x58] sm:$0xff]
    %v433 = vld [vmem:[#allocation5 + $0x60] sm:$0xff]
    %v434 = vld [vmem:[#allocation5 + $0x68] sm:$0xff]
    %v435 = vld [vmem:[#allocation5 + $0x70] sm:$0xff]
    %v436 = vld [vmem:[#allocation5 + $0x78] sm:$0xff]
    %v437 = vld [vmem:[#allocation7] sm:$0x1]
    %v439 = vlaneseq
    %v440 = vshrl.u32 %v439, 7
    %v441 = vsub.s32 0, %v440
    %v442 = vrot.slane %v437, %v441
    %444 = vmatprep.subr.mxu0 0.0
    %445 = vmatpush1.msra.mxu0 %v421
    %446 = vmatprep.subr.mxu0 0.0
    %447 = vmatpush1.msra.mxu0 %v422
    %448 = vmatprep.subr.mxu0 0.0
    %449 = vmatpush1.msra.mxu0 %v423
    %450 = vmatprep.subr.mxu0 0.0
    %451 = vmatpush1.msra.mxu0 %v424
    %452 = vmatprep.subr.mxu0 0.0
    %453 = vmatpush1.msra.mxu0 %v425
    %454 = vmatprep.subr.mxu0 0.0
    %455 = vmatpush1.msra.mxu0 %v426
    %456 = vmatprep.subr.mxu0 0.0
    %457 = vmatpush1.msra.mxu0 %v427
    %458 = vmatprep.subr.mxu0 0.0
    %459 = vmatpush1.msra.mxu0 %v428
    %460 = vmatprep.subr.mxu0 0.0
    %461 = vmatpush1.msra.mxu0 %v429
    %462 = vmatprep.subr.mxu0 0.0
    %463 = vmatpush1.msra.mxu0 %v430
    %464 = vmatprep.subr.mxu0 0.0
    %465 = vmatpush1.msra.mxu0 %v431
    %466 = vmatprep.subr.mxu0 0.0
    %467 = vmatpush1.msra.mxu0 %v432
    %468 = vmatprep.subr.mxu0 0.0
    %469 = vmatpush1.msra.mxu0 %v433
    %470 = vmatprep.subr.mxu0 0.0
    %471 = vmatpush1.msra.mxu0 %v434
    %472 = vmatprep.subr.mxu0 0.0
    %473 = vmatpush1.msra.mxu0 %v435
    %474 = vmatprep.subr.mxu0 0.0
    %475 = vmatpush1.msra.mxu0 %v436
    %476 = vmatprep.subr.mxu0 0.0
    %477 = vmatpush1.msra.mxu0 0.0
    %478 = vmatprep.subr.mxu0 0.0
    %479 = vmatpush1.msra.mxu0 0.0
    %480 = vmatprep.subr.mxu0 0.0
    %481 = vmatpush1.msra.mxu0 0.0
    %482 = vmatprep.subr.mxu0 0.0
    %483 = vmatpush1.msra.mxu0 0.0
    %484 = vmatprep.subr.mxu0 0.0
    %485 = vmatpush1.msra.mxu0 0.0
    %486 = vmatprep.subr.mxu0 0.0
    %487 = vmatpush1.msra.mxu0 0.0
    %488 = vmatprep.subr.mxu0 0.0
    %489 = vmatpush1.msra.mxu0 0.0
    %490 = vmatprep.subr.mxu0 0.0
    %491 = vmatpush1.msra.mxu0 0.0
    %492 = vmatprep.subr.mxu0 0.0
    %493 = vmatpush1.msra.mxu0 0.0
    %494 = vmatprep.subr.mxu0 0.0
    %495 = vmatpush1.msra.mxu0 0.0
    %496 = vmatprep.subr.mxu0 0.0
    %497 = vmatpush1.msra.mxu0 0.0
    %498 = vmatprep.subr.mxu0 0.0
    %499 = vmatpush1.msra.mxu0 0.0
    %500 = vmatprep.subr.mxu0 0.0
    %501 = vmatpush1.msra.mxu0 0.0
    %502 = vmatprep.subr.mxu0 0.0
    %503 = vmatpush1.msra.mxu0 0.0
    %504 = vmatprep.subr.mxu0 0.0
    %505 = vmatpush1.msra.mxu0 0.0
    %506 = vmatprep.subr.mxu0 0.0
    %507 = vmatpush1.msra.mxu0 0.0
    %508 = vmatprep.mubr.f32.mxu0 0.0
    %509 = vmatmul.mubr.f32.gmra.mrb[0].mxu0 %v420
    %v510 = vpop.f32.mrb[0].mxu0
    %v511 = vadd.f32 %v442, %v510
    %v512 = vpop.f32.mrb[0].mxu0
    %513 = vdwg.mxu0
    %vm514 = vcmask 130048
    %v516 = vsel %vm514, %v511, 0
    %v519 = vsel %vm514, %v364, 0
    %v522 = vsel %vm514, %v370, 0
    %524 = vmatprep.subr.mxu0 0.0
    %525 = vmatpush1.xpose.msra.mxu0 %v519
    %526 = vmatprep.subr.mxu0 0.0
    %527 = vmatpush1.xpose.msra.mxu0 %v522
    %528 = vmatprep.subr.mxu0 0.0
    %529 = vmatpush1.xpose.msra.mxu0 0.0
    %530 = vmatprep.subr.mxu0 0.0
    %531 = vmatpush1.xpose.msra.mxu0 0.0
    %532 = vmatprep.subr.mxu0 0.0
    %533 = vmatpush1.xpose.msra.mxu0 0.0
    %534 = vmatprep.subr.mxu0 0.0
    %535 = vmatpush1.xpose.msra.mxu0 0.0
    %536 = vmatprep.subr.mxu0 0.0
    %537 = vmatpush1.xpose.msra.mxu0 0.0
    %538 = vmatprep.subr.mxu0 0.0
    %539 = vmatpush1.xpose.msra.mxu0 0.0
    %540 = vmatprep.subr.mxu0 0.0
    %541 = vmatpush1.xpose.msra.mxu0 0.0
    %542 = vmatprep.subr.mxu0 0.0
    %543 = vmatpush1.xpose.msra.mxu0 0.0
    %544 = vmatprep.subr.mxu0 0.0
    %545 = vmatpush1.xpose.msra.mxu0 0.0
    %546 = vmatprep.subr.mxu0 0.0
    %547 = vmatpush1.xpose.msra.mxu0 0.0
    %548 = vmatprep.subr.mxu0 0.0
    %549 = vmatpush1.xpose.msra.mxu0 0.0
    %550 = vmatprep.subr.mxu0 0.0
    %551 = vmatpush1.xpose.msra.mxu0 0.0
    %552 = vmatprep.subr.mxu0 0.0
    %553 = vmatpush1.xpose.msra.mxu0 0.0
    %554 = vmatprep.subr.mxu0 0.0
    %555 = vmatpush1.xpose.msra.mxu0 0.0
    %556 = vmatprep.subr.mxu0 0.0
    %557 = vmatpush1.xpose.msra.mxu0 0.0
    %558 = vmatprep.subr.mxu0 0.0
    %559 = vmatpush1.xpose.msra.mxu0 0.0
    %560 = vmatprep.subr.mxu0 0.0
    %561 = vmatpush1.xpose.msra.mxu0 0.0
    %562 = vmatprep.subr.mxu0 0.0
    %563 = vmatpush1.xpose.msra.mxu0 0.0
    %564 = vmatprep.subr.mxu0 0.0
    %565 = vmatpush1.xpose.msra.mxu0 0.0
    %566 = vmatprep.subr.mxu0 0.0
    %567 = vmatpush1.xpose.msra.mxu0 0.0
    %568 = vmatprep.subr.mxu0 0.0
    %569 = vmatpush1.xpose.msra.mxu0 0.0
    %570 = vmatprep.subr.mxu0 0.0
    %571 = vmatpush1.xpose.msra.mxu0 0.0
    %572 = vmatprep.subr.mxu0 0.0
    %573 = vmatpush1.xpose.msra.mxu0 0.0
    %574 = vmatprep.subr.mxu0 0.0
    %575 = vmatpush1.xpose.msra.mxu0 0.0
    %576 = vmatprep.subr.mxu0 0.0
    %577 = vmatpush1.xpose.msra.mxu0 0.0
    %578 = vmatprep.subr.mxu0 0.0
    %579 = vmatpush1.xpose.msra.mxu0 0.0
    %580 = vmatprep.subr.mxu0 0.0
    %581 = vmatpush1.xpose.msra.mxu0 0.0
    %582 = vmatprep.subr.mxu0 0.0
    %583 = vmatpush1.xpose.msra.mxu0 0.0
    %584 = vmatprep.subr.mxu0 0.0
    %585 = vmatpush1.xpose.msra.mxu0 0.0
    %586 = vmatprep.subr.mxu0 0.0
    %587 = vmatpush1.xpose.msra.mxu0 0.0
    %588 = vmatprep.mubr.f32.mxu0 0.0
    %589 = vmatmul.mubr.f32.gmra.mrb[0].mxu0 %v516
    %v590 = vpop.f32.mrb[0].mxu0
    %v591 = vadd.f32 0.0, %v590
    %v592 = vpop.f32.mrb[0].mxu0
    %593 = vdwg.mxu0
    %v594 = vmul.f32 %v591, 0.25
    %vm595 = vcmask 125952
    %v596 = vsel %vm595, %v594, -inf
    %597 = vmax.xlane.f32.xlu0 %v596
    %v598 = vpop.xlane.xlu0 %597
    %v599 = vsub.f32 %v594, %v598
    %v600 = vmul.f32 %v599, 1.442695
    %v601 = vpow.pop %v600
    %v602 = vsel %vm595, %v601, 0.0
    %603 = vadd.xlane.f32.xlu0 %v602
    %v604 = vpop.xlane.xlu0 %603
    %v605 = vrcp.pop %v604
    %v606 = vmul.f32 %v601, %v605
    %v607 = vadd.f32 %v606, 0.0
    %v609 = vsel %vm514, %v606, 0
    %611 = vmatprep.subr.mxu0 0.0
    %612 = vmatpush1.msra.mxu0 %v366
    %613 = vmatprep.subr.mxu0 0.0
    %614 = vmatpush1.msra.mxu0 %v372
    %615 = vmatprep.subr.mxu0 0.0
    %616 = vmatpush1.msra.mxu0 0.0
    %617 = vmatprep.subr.mxu0 0.0
    %618 = vmatpush1.msra.mxu0 0.0
    %619 = vmatprep.subr.mxu0 0.0
    %620 = vmatpush1.msra.mxu0 0.0
    %621 = vmatprep.subr.mxu0 0.0
    %622 = vmatpush1.msra.mxu0 0.0
    %623 = vmatprep.subr.mxu0 0.0
    %624 = vmatpush1.msra.mxu0 0.0
    %625 = vmatprep.subr.mxu0 0.0
    %626 = vmatpush1.msra.mxu0 0.0
    %627 = vmatprep.subr.mxu0 0.0
    %628 = vmatpush1.msra.mxu0 0.0
    %629 = vmatprep.subr.mxu0 0.0
    %630 = vmatpush1.msra.mxu0 0.0
    %631 = vmatprep.subr.mxu0 0.0
    %632 = vmatpush1.msra.mxu0 0.0
    %633 = vmatprep.subr.mxu0 0.0
    %634 = vmatpush1.msra.mxu0 0.0
    %635 = vmatprep.subr.mxu0 0.0
    %636 = vmatpush1.msra.mxu0 0.0
    %637 = vmatprep.subr.mxu0 0.0
    %638 = vmatpush1.msra.mxu0 0.0
    %639 = vmatprep.subr.mxu0 0.0
    %640 = vmatpush1.msra.mxu0 0.0
    %641 = vmatprep.subr.mxu0 0.0
    %642 = vmatpush1.msra.mxu0 0.0
    %643 = vmatprep.subr.mxu0 0.0
    %644 = vmatpush1.msra.mxu0 0.0
    %645 = vmatprep.subr.mxu0 0.0
    %646 = vmatpush1.msra.mxu0 0.0
    %647 = vmatprep.subr.mxu0 0.0
    %648 = vmatpush1.msra.mxu0 0.0
    %649 = vmatprep.subr.mxu0 0.0
    %650 = vmatpush1.msra.mxu0 0.0
    %651 = vmatprep.subr.mxu0 0.0
    %652 = vmatpush1.msra.mxu0 0.0
    %653 = vmatprep.subr.mxu0 0.0
    %654 = vmatpush1.msra.mxu0 0.0
    %655 = vmatprep.subr.mxu0 0.0
    %656 = vmatpush1.msra.mxu0 0.0
    %657 = vmatprep.subr.mxu0 0.0
    %658 = vmatpush1.msra.mxu0 0.0
    %659 = vmatprep.subr.mxu0 0.0
    %660 = vmatpush1.msra.mxu0 0.0
    %661 = vmatprep.subr.mxu0 0.0
    %662 = vmatpush1.msra.mxu0 0.0
    %663 = vmatprep.subr.mxu0 0.0
    %664 = vmatpush1.msra.mxu0 0.0
    %665 = vmatprep.subr.mxu0 0.0
    %666 = vmatpush1.msra.mxu0 0.0
    %667 = vmatprep.subr.mxu0 0.0
    %668 = vmatpush1.msra.mxu0 0.0
    %669 = vmatprep.subr.mxu0 0.0
    %670 = vmatpush1.msra.mxu0 0.0
    %671 = vmatprep.subr.mxu0 0.0
    %672 = vmatpush1.msra.mxu0 0.0
    %673 = vmatprep.subr.mxu0 0.0
    %674 = vmatpush1.msra.mxu0 0.0
    %675 = vmatprep.mubr.f32.mxu0 0.0
    %676 = vmatmul.mubr.f32.gmra.mrb[0].mxu0 %v609
    %v677 = vpop.f32.mrb[0].mxu0
    %v678 = vadd.f32 0.0, %v677
    %v679 = vpop.f32.mrb[0].mxu0
    %680 = vdwg.mxu0
    %681 = vrot.lane.b32.xlu0 %v511, 112
    %v682 = vpop.permute.xlu0 %681
    %683 = vrot.lane.b32.xlu0 %v364, 112
    %v684 = vpop.permute.xlu0 %683
    %685 = vrot.lane.b32.xlu0 %v370, 112
    %v686 = vpop.permute.xlu0 %685
    %v687 = vsel %vm514, %v682, 0
    %v689 = vsel %vm514, %v684, 0
    %v691 = vsel %vm514, %v686, 0
    %693 = vmatprep.subr.mxu0 0.0
    %694 = vmatpush1.xpose.msra.mxu0 %v689
    %695 = vmatprep.subr.mxu0 0.0
    %696 = vmatpush1.xpose.msra.mxu0 %v691
    %697 = vmatprep.subr.mxu0 0.0
    %698 = vmatpush1.xpose.msra.mxu0 0.0
    %699 = vmatprep.subr.mxu0 0.0
    %700 = vmatpush1.xpose.msra.mxu0 0.0
    %701 = vmatprep.subr.mxu0 0.0
    %702 = vmatpush1.xpose.msra.mxu0 0.0
    %703 = vmatprep.subr.mxu0 0.0
    %704 = vmatpush1.xpose.msra.mxu0 0.0
    %705 = vmatprep.subr.mxu0 0.0
    %706 = vmatpush1.xpose.msra.mxu0 0.0
    %707 = vmatprep.subr.mxu0 0.0
    %708 = vmatpush1.xpose.msra.mxu0 0.0
    %709 = vmatprep.subr.mxu0 0.0
    %710 = vmatpush1.xpose.msra.mxu0 0.0
    %711 = vmatprep.subr.mxu0 0.0
    %712 = vmatpush1.xpose.msra.mxu0 0.0
    %713 = vmatprep.subr.mxu0 0.0
    %714 = vmatpush1.xpose.msra.mxu0 0.0
    %715 = vmatprep.subr.mxu0 0.0
    %716 = vmatpush1.xpose.msra.mxu0 0.0
    %717 = vmatprep.subr.mxu0 0.0
    %718 = vmatpush1.xpose.msra.mxu0 0.0
    %719 = vmatprep.subr.mxu0 0.0
    %720 = vmatpush1.xpose.msra.mxu0 0.0
    %721 = vmatprep.subr.mxu0 0.0
    %722 = vmatpush1.xpose.msra.mxu0 0.0
    %723 = vmatprep.subr.mxu0 0.0
    %724 = vmatpush1.xpose.msra.mxu0 0.0
    %725 = vmatprep.subr.mxu0 0.0
    %726 = vmatpush1.xpose.msra.mxu0 0.0
    %727 = vmatprep.subr.mxu0 0.0
    %728 = vmatpush1.xpose.msra.mxu0 0.0
    %729 = vmatprep.subr.mxu0 0.0
    %730 = vmatpush1.xpose.msra.mxu0 0.0
    %731 = vmatprep.subr.mxu0 0.0
    %732 = vmatpush1.xpose.msra.mxu0 0.0
    %733 = vmatprep.subr.mxu0 0.0
    %734 = vmatpush1.xpose.msra.mxu0 0.0
    %735 = vmatprep.subr.mxu0 0.0
    %736 = vmatpush1.xpose.msra.mxu0 0.0
    %737 = vmatprep.subr.mxu0 0.0
    %738 = vmatpush1.xpose.msra.mxu0 0.0
    %739 = vmatprep.subr.mxu0 0.0
    %740 = vmatpush1.xpose.msra.mxu0 0.0
    %741 = vmatprep.subr.mxu0 0.0
    %742 = vmatpush1.xpose.msra.mxu0 0.0
    %743 = vmatprep.subr.mxu0 0.0
    %744 = vmatpush1.xpose.msra.mxu0 0.0
    %745 = vmatprep.subr.mxu0 0.0
    %746 = vmatpush1.xpose.msra.mxu0 0.0
    %747 = vmatprep.subr.mxu0 0.0
    %748 = vmatpush1.xpose.msra.mxu0 0.0
    %749 = vmatprep.subr.mxu0 0.0
    %750 = vmatpush1.xpose.msra.mxu0 0.0
    %751 = vmatprep.subr.mxu0 0.0
    %752 = vmatpush1.xpose.msra.mxu0 0.0
    %753 = vmatprep.subr.mxu0 0.0
    %754 = vmatpush1.xpose.msra.mxu0 0.0
    %755 = vmatprep.subr.mxu0 0.0
    %756 = vmatpush1.xpose.msra.mxu0 0.0
    %757 = vmatprep.mubr.f32.mxu0 0.0
    %758 = vmatmul.mubr.f32.gmra.mrb[0].mxu0 %v687
    %v759 = vpop.f32.mrb[0].mxu0
    %v760 = vadd.f32 0.0, %v759
    %v761 = vpop.f32.mrb[0].mxu0
    %762 = vdwg.mxu0
    %v763 = vmul.f32 %v760, 0.25
    %v764 = vsel %vm595, %v763, -inf
    %765 = vmax.xlane.f32.xlu0 %v764
    %v766 = vpop.xlane.xlu0 %765
    %v767 = vsub.f32 %v763, %v766
    %v768 = vmul.f32 %v767, 1.442695
    %v769 = vpow.pop %v768
    %v770 = vsel %vm595, %v769, 0.0
    %771 = vadd.xlane.f32.xlu0 %v770
    %v772 = vpop.xlane.xlu0 %771
    %v773 = vrcp.pop %v772
    %v774 = vmul.f32 %v769, %v773
    %v775 = vadd.f32 %v607, %v774
    %778 = vrot.lane.b32.xlu0 %v366, 112
    %v779 = vpop.permute.xlu0 %778
    %780 = vrot.lane.b32.xlu0 %v372, 112
    %v781 = vpop.permute.xlu0 %780
    %v785 = vsel %vm514, %v774, 0
    %787 = vmatprep.subr.mxu0 0.0
    %788 = vmatpush1.msra.mxu0 %v779
    %789 = vmatprep.subr.mxu0 0.0
    %790 = vmatpush1.msra.mxu0 %v781
    %791 = vmatprep.subr.mxu0 0.0
    %792 = vmatpush1.msra.mxu0 0.0
    %793 = vmatprep.subr.mxu0 0.0
    %794 = vmatpush1.msra.mxu0 0.0
    %795 = vmatprep.subr.mxu0 0.0
    %796 = vmatpush1.msra.mxu0 0.0
    %797 = vmatprep.subr.mxu0 0.0
    %798 = vmatpush1.msra.mxu0 0.0
    %799 = vmatprep.subr.mxu0 0.0
    %800 = vmatpush1.msra.mxu0 0.0
    %801 = vmatprep.subr.mxu0 0.0
    %802 = vmatpush1.msra.mxu0 0.0
    %803 = vmatprep.subr.mxu0 0.0
    %804 = vmatpush1.msra.mxu0 0.0
    %805 = vmatprep.subr.mxu0 0.0
    %806 = vmatpush1.msra.mxu0 0.0
    %807 = vmatprep.subr.mxu0 0.0
    %808 = vmatpush1.msra.mxu0 0.0
    %809 = vmatprep.subr.mxu0 0.0
    %810 = vmatpush1.msra.mxu0 0.0
    %811 = vmatprep.subr.mxu0 0.0
    %812 = vmatpush1.msra.mxu0 0.0
    %813 = vmatprep.subr.mxu0 0.0
    %814 = vmatpush1.msra.mxu0 0.0
    %815 = vmatprep.subr.mxu0 0.0
    %816 = vmatpush1.msra.mxu0 0.0
    %817 = vmatprep.subr.mxu0 0.0
    %818 = vmatpush1.msra.mxu0 0.0
    %819 = vmatprep.subr.mxu0 0.0
    %820 = vmatpush1.msra.mxu0 0.0
    %821 = vmatprep.subr.mxu0 0.0
    %822 = vmatpush1.msra.mxu0 0.0
    %823 = vmatprep.subr.mxu0 0.0
    %824 = vmatpush1.msra.mxu0 0.0
    %825 = vmatprep.subr.mxu0 0.0
    %826 = vmatpush1.msra.mxu0 0.0
    %827 = vmatprep.subr.mxu0 0.0
    %828 = vmatpush1.msra.mxu0 0.0
    %829 = vmatprep.subr.mxu0 0.0
    %830 = vmatpush1.msra.mxu0 0.0
    %831 = vmatprep.subr.mxu0 0.0
    %832 = vmatpush1.msra.mxu0 0.0
    %833 = vmatprep.subr.mxu0 0.0
    %834 = vmatpush1.msra.mxu0 0.0
    %835 = vmatprep.subr.mxu0 0.0
    %836 = vmatpush1.msra.mxu0 0.0
    %837 = vmatprep.subr.mxu0 0.0
    %838 = vmatpush1.msra.mxu0 0.0
    %839 = vmatprep.subr.mxu0 0.0
    %840 = vmatpush1.msra.mxu0 0.0
    %841 = vmatprep.subr.mxu0 0.0
    %842 = vmatpush1.msra.mxu0 0.0
    %843 = vmatprep.subr.mxu0 0.0
    %844 = vmatpush1.msra.mxu0 0.0
    %845 = vmatprep.subr.mxu0 0.0
    %846 = vmatpush1.msra.mxu0 0.0
    %847 = vmatprep.subr.mxu0 0.0
    %848 = vmatpush1.msra.mxu0 0.0
    %849 = vmatprep.subr.mxu0 0.0
    %850 = vmatpush1.msra.mxu0 0.0
    %851 = vmatprep.mubr.f32.mxu0 0.0
    %852 = vmatmul.mubr.f32.gmra.mrb[0].mxu0 %v785
    %v853 = vpop.f32.mrb[0].mxu0
    %v854 = vadd.f32 0.0, %v853
    %v855 = vpop.f32.mrb[0].mxu0
    %856 = vdwg.mxu0
    %857 = vrot.lane.b32.xlu0 %v511, 96
    %v858 = vpop.permute.xlu0 %857
    %859 = vrot.lane.b32.xlu0 %v364, 96
    %v860 = vpop.permute.xlu0 %859
    %861 = vrot.lane.b32.xlu0 %v370, 96
    %v862 = vpop.permute.xlu0 %861
    %v863 = vsel %vm514, %v858, 0
    %v865 = vsel %vm514, %v860, 0
    %v867 = vsel %vm514, %v862, 0
    %869 = vmatprep.subr.mxu0 0.0
    %870 = vmatpush1.xpose.msra.mxu0 %v865
    %871 = vmatprep.subr.mxu0 0.0
    %872 = vmatpush1.xpose.msra.mxu0 %v867
    %873 = vmatprep.subr.mxu0 0.0
    %874 = vmatpush1.xpose.msra.mxu0 0.0
    %875 = vmatprep.subr.mxu0 0.0
    %876 = vmatpush1.xpose.msra.mxu0 0.0
    %877 = vmatprep.subr.mxu0 0.0
    %878 = vmatpush1.xpose.msra.mxu0 0.0
    %879 = vmatprep.subr.mxu0 0.0
    %880 = vmatpush1.xpose.msra.mxu0 0.0
    %881 = vmatprep.subr.mxu0 0.0
    %882 = vmatpush1.xpose.msra.mxu0 0.0
    %883 = vmatprep.subr.mxu0 0.0
    %884 = vmatpush1.xpose.msra.mxu0 0.0
    %885 = vmatprep.subr.mxu0 0.0
    %886 = vmatpush1.xpose.msra.mxu0 0.0
    %887 = vmatprep.subr.mxu0 0.0
    %888 = vmatpush1.xpose.msra.mxu0 0.0
    %889 = vmatprep.subr.mxu0 0.0
    %890 = vmatpush1.xpose.msra.mxu0 0.0
    %891 = vmatprep.subr.mxu0 0.0
    %892 = vmatpush1.xpose.msra.mxu0 0.0
    %893 = vmatprep.subr.mxu0 0.0
    %894 = vmatpush1.xpose.msra.mxu0 0.0
    %895 = vmatprep.subr.mxu0 0.0
    %896 = vmatpush1.xpose.msra.mxu0 0.0
    %897 = vmatprep.subr.mxu0 0.0
    %898 = vmatpush1.xpose.msra.mxu0 0.0
    %899 = vmatprep.subr.mxu0 0.0
    %900 = vmatpush1.xpose.msra.mxu0 0.0
    %901 = vmatprep.subr.mxu0 0.0
    %902 = vmatpush1.xpose.msra.mxu0 0.0
    %903 = vmatprep.subr.mxu0 0.0
    %904 = vmatpush1.xpose.msra.mxu0 0.0
    %905 = vmatprep.subr.mxu0 0.0
    %906 = vmatpush1.xpose.msra.mxu0 0.0
    %907 = vmatprep.subr.mxu0 0.0
    %908 = vmatpush1.xpose.msra.mxu0 0.0
    %909 = vmatprep.subr.mxu0 0.0
    %910 = vmatpush1.xpose.msra.mxu0 0.0
    %911 = vmatprep.subr.mxu0 0.0
    %912 = vmatpush1.xpose.msra.mxu0 0.0
    %913 = vmatprep.subr.mxu0 0.0
    %914 = vmatpush1.xpose.msra.mxu0 0.0
    %915 = vmatprep.subr.mxu0 0.0
    %916 = vmatpush1.xpose.msra.mxu0 0.0
    %917 = vmatprep.subr.mxu0 0.0
    %918 = vmatpush1.xpose.msra.mxu0 0.0
    %919 = vmatprep.subr.mxu0 0.0
    %920 = vmatpush1.xpose.msra.mxu0 0.0
    %921 = vmatprep.subr.mxu0 0.0
    %922 = vmatpush1.xpose.msra.mxu0 0.0
    %923 = vmatprep.subr.mxu0 0.0
    %924 = vmatpush1.xpose.msra.mxu0 0.0
    %925 = vmatprep.subr.mxu0 0.0
    %926 = vmatpush1.xpose.msra.mxu0 0.0
    %927 = vmatprep.subr.mxu0 0.0
    %928 = vmatpush1.xpose.msra.mxu0 0.0
    %929 = vmatprep.subr.mxu0 0.0
    %930 = vmatpush1.xpose.msra.mxu0 0.0
    %931 = vmatprep.subr.mxu0 0.0
    %932 = vmatpush1.xpose.msra.mxu0 0.0
    %933 = vmatprep.mubr.f32.mxu0 0.0
    %934 = vmatmul.mubr.f32.gmra.mrb[0].mxu0 %v863
    %v935 = vpop.f32.mrb[0].mxu0
    %v936 = vadd.f32 0.0, %v935
    %v937 = vpop.f32.mrb[0].mxu0
    %938 = vdwg.mxu0
    %v939 = vmul.f32 %v936, 0.25
    %v940 = vsel %vm595, %v939, -inf
    %941 = vmax.xlane.f32.xlu0 %v940
    %v942 = vpop.xlane.xlu0 %941
    %v943 = vsub.f32 %v939, %v942
    %v944 = vmul.f32 %v943, 1.442695
    %v945 = vpow.pop %v944
    %v946 = vsel %vm595, %v945, 0.0
    %947 = vadd.xlane.f32.xlu0 %v946
    %v948 = vpop.xlane.xlu0 %947
    %v949 = vrcp.pop %v948
    %v950 = vmul.f32 %v945, %v949
    %v951 = vadd.f32 %v775, %v950
    %952 = vrot.lane.b32.xlu0 %v366, 96
    %v953 = vpop.permute.xlu0 %952
    %954 = vrot.lane.b32.xlu0 %v372, 96
    %v955 = vpop.permute.xlu0 %954
    %v959 = vsel %vm514, %v950, 0
    %961 = vmatprep.subr.mxu0 0.0
    %962 = vmatpush1.msra.mxu0 %v953
    %963 = vmatprep.subr.mxu0 0.0
    %964 = vmatpush1.msra.mxu0 %v955
    %965 = vmatprep.subr.mxu0 0.0
    %966 = vmatpush1.msra.mxu0 0.0
    %967 = vmatprep.subr.mxu0 0.0
    %968 = vmatpush1.msra.mxu0 0.0
    %969 = vmatprep.subr.mxu0 0.0
    %970 = vmatpush1.msra.mxu0 0.0
    %971 = vmatprep.subr.mxu0 0.0
    %972 = vmatpush1.msra.mxu0 0.0
    %973 = vmatprep.subr.mxu0 0.0
    %974 = vmatpush1.msra.mxu0 0.0
    %975 = vmatprep.subr.mxu0 0.0
    %976 = vmatpush1.msra.mxu0 0.0
    %977 = vmatprep.subr.mxu0 0.0
    %978 = vmatpush1.msra.mxu0 0.0
    %979 = vmatprep.subr.mxu0 0.0
    %980 = vmatpush1.msra.mxu0 0.0
    %981 = vmatprep.subr.mxu0 0.0
    %982 = vmatpush1.msra.mxu0 0.0
    %983 = vmatprep.subr.mxu0 0.0
    %984 = vmatpush1.msra.mxu0 0.0
    %985 = vmatprep.subr.mxu0 0.0
    %986 = vmatpush1.msra.mxu0 0.0
    %987 = vmatprep.subr.mxu0 0.0
    %988 = vmatpush1.msra.mxu0 0.0
    %989 = vmatprep.subr.mxu0 0.0
    %990 = vmatpush1.msra.mxu0 0.0
    %991 = vmatprep.subr.mxu0 0.0
    %992 = vmatpush1.msra.mxu0 0.0
    %993 = vmatprep.subr.mxu0 0.0
    %994 = vmatpush1.msra.mxu0 0.0
    %995 = vmatprep.subr.mxu0 0.0
    %996 = vmatpush1.msra.mxu0 0.0
    %997 = vmatprep.subr.mxu0 0.0
    %998 = vmatpush1.msra.mxu0 0.0
    %999 = vmatprep.subr.mxu0 0.0
    %1000 = vmatpush1.msra.mxu0 0.0
    %1001 = vmatprep.subr.mxu0 0.0
    %1002 = vmatpush1.msra.mxu0 0.0
    %1003 = vmatprep.subr.mxu0 0.0
    %1004 = vmatpush1.msra.mxu0 0.0
    %1005 = vmatprep.subr.mxu0 0.0
    %1006 = vmatpush1.msra.mxu0 0.0
    %1007 = vmatprep.subr.mxu0 0.0
    %1008 = vmatpush1.msra.mxu0 0.0
    %1009 = vmatprep.subr.mxu0 0.0
    %1010 = vmatpush1.msra.mxu0 0.0
    %1011 = vmatprep.subr.mxu0 0.0
    %1012 = vmatpush1.msra.mxu0 0.0
    %1013 = vmatprep.subr.mxu0 0.0
    %1014 = vmatpush1.msra.mxu0 0.0
    %1015 = vmatprep.subr.mxu0 0.0
    %1016 = vmatpush1.msra.mxu0 0.0
    %1017 = vmatprep.subr.mxu0 0.0
    %1018 = vmatpush1.msra.mxu0 0.0
    %1019 = vmatprep.subr.mxu0 0.0
    %1020 = vmatpush1.msra.mxu0 0.0
    %1021 = vmatprep.subr.mxu0 0.0
    %1022 = vmatpush1.msra.mxu0 0.0
    %1023 = vmatprep.subr.mxu0 0.0
    %1024 = vmatpush1.msra.mxu0 0.0
    %1025 = vmatprep.mubr.f32.mxu0 0.0
    %1026 = vmatmul.mubr.f32.gmra.mrb[0].mxu0 %v959
    %v1027 = vpop.f32.mrb[0].mxu0
    %v1028 = vadd.f32 0.0, %v1027
    %v1029 = vpop.f32.mrb[0].mxu0
    %1030 = vdwg.mxu0
    %1031 = vrot.lane.b32.xlu0 %v511, 80
    %v1032 = vpop.permute.xlu0 %1031
    %1033 = vrot.lane.b32.xlu0 %v364, 80
    %v1034 = vpop.permute.xlu0 %1033
    %1035 = vrot.lane.b32.xlu0 %v370, 80
    %v1036 = vpop.permute.xlu0 %1035
    %v1037 = vsel %vm514, %v1032, 0
    %v1039 = vsel %vm514, %v1034, 0
    %v1041 = vsel %vm514, %v1036, 0
    %1043 = vmatprep.subr.mxu0 0.0
    %1044 = vmatpush1.xpose.msra.mxu0 %v1039
    %1045 = vmatprep.subr.mxu0 0.0
    %1046 = vmatpush1.xpose.msra.mxu0 %v1041
    %1047 = vmatprep.subr.mxu0 0.0
    %1048 = vmatpush1.xpose.msra.mxu0 0.0
    %1049 = vmatprep.subr.mxu0 0.0
    %1050 = vmatpush1.xpose.msra.mxu0 0.0
    %1051 = vmatprep.subr.mxu0 0.0
    %1052 = vmatpush1.xpose.msra.mxu0 0.0
    %1053 = vmatprep.subr.mxu0 0.0
    %1054 = vmatpush1.xpose.msra.mxu0 0.0
    %1055 = vmatprep.subr.mxu0 0.0
    %1056 = vmatpush1.xpose.msra.mxu0 0.0
    %1057 = vmatprep.subr.mxu0 0.0
    %1058 = vmatpush1.xpose.msra.mxu0 0.0
    %1059 = vmatprep.subr.mxu0 0.0
    %1060 = vmatpush1.xpose.msra.mxu0 0.0
    %1061 = vmatprep.subr.mxu0 0.0
    %1062 = vmatpush1.xpose.msra.mxu0 0.0
    %1063 = vmatprep.subr.mxu0 0.0
    %1064 = vmatpush1.xpose.msra.mxu0 0.0
    %1065 = vmatprep.subr.mxu0 0.0
    %1066 = vmatpush1.xpose.msra.mxu0 0.0
    %1067 = vmatprep.subr.mxu0 0.0
    %1068 = vmatpush1.xpose.msra.mxu0 0.0
    %1069 = vmatprep.subr.mxu0 0.0
    %1070 = vmatpush1.xpose.msra.mxu0 0.0
    %1071 = vmatprep.subr.mxu0 0.0
    %1072 = vmatpush1.xpose.msra.mxu0 0.0
    %1073 = vmatprep.subr.mxu0 0.0
    %1074 = vmatpush1.xpose.msra.mxu0 0.0
    %1075 = vmatprep.subr.mxu0 0.0
    %1076 = vmatpush1.xpose.msra.mxu0 0.0
    %1077 = vmatprep.subr.mxu0 0.0
    %1078 = vmatpush1.xpose.msra.mxu0 0.0
    %1079 = vmatprep.subr.mxu0 0.0
    %1080 = vmatpush1.xpose.msra.mxu0 0.0
    %1081 = vmatprep.subr.mxu0 0.0
    %1082 = vmatpush1.xpose.msra.mxu0 0.0
    %1083 = vmatprep.subr.mxu0 0.0
    %1084 = vmatpush1.xpose.msra.mxu0 0.0
    %1085 = vmatprep.subr.mxu0 0.0
    %1086 = vmatpush1.xpose.msra.mxu0 0.0
    %1087 = vmatprep.subr.mxu0 0.0
    %1088 = vmatpush1.xpose.msra.mxu0 0.0
    %1089 = vmatprep.subr.mxu0 0.0
    %1090 = vmatpush1.xpose.msra.mxu0 0.0
    %1091 = vmatprep.subr.mxu0 0.0
    %1092 = vmatpush1.xpose.msra.mxu0 0.0
    %1093 = vmatprep.subr.mxu0 0.0
    %1094 = vmatpush1.xpose.msra.mxu0 0.0
    %1095 = vmatprep.subr.mxu0 0.0
    %1096 = vmatpush1.xpose.msra.mxu0 0.0
    %1097 = vmatprep.subr.mxu0 0.0
    %1098 = vmatpush1.xpose.msra.mxu0 0.0
    %1099 = vmatprep.subr.mxu0 0.0
    %1100 = vmatpush1.xpose.msra.mxu0 0.0
    %1101 = vmatprep.subr.mxu0 0.0
    %1102 = vmatpush1.xpose.msra.mxu0 0.0
    %1103 = vmatprep.subr.mxu0 0.0
    %1104 = vmatpush1.xpose.msra.mxu0 0.0
    %1105 = vmatprep.subr.mxu0 0.0
    %1106 = vmatpush1.xpose.msra.mxu0 0.0
    %1107 = vmatprep.mubr.f32.mxu0 0.0
    %1108 = vmatmul.mubr.f32.gmra.mrb[0].mxu0 %v1037
    %v1109 = vpop.f32.mrb[0].mxu0
    %v1110 = vadd.f32 0.0, %v1109
    %v1111 = vpop.f32.mrb[0].mxu0
    %1112 = vdwg.mxu0
    %v1113 = vmul.f32 %v1110, 0.25
    %v1114 = vsel %vm595, %v1113, -inf
    %1115 = vmax.xlane.f32.xlu0 %v1114
    %v1116 = vpop.xlane.xlu0 %1115
    %v1117 = vsub.f32 %v1113, %v1116
    %v1118 = vmul.f32 %v1117, 1.442695
    %v1119 = vpow.pop %v1118
    %v1120 = vsel %vm595, %v1119, 0.0
    %1121 = vadd.xlane.f32.xlu0 %v1120
    %v1122 = vpop.xlane.xlu0 %1121
    %v1123 = vrcp.pop %v1122
    %v1124 = vmul.f32 %v1119, %v1123
    %v1125 = vadd.f32 %v951, %v1124
    %1126 = vrot.lane.b32.xlu0 %v366, 80
    %v1127 = vpop.permute.xlu0 %1126
    %1128 = vrot.lane.b32.xlu0 %v372, 80
    %v1129 = vpop.permute.xlu0 %1128
    %v1133 = vsel %vm514, %v1124, 0
    %1135 = vmatprep.subr.mxu0 0.0
    %1136 = vmatpush1.msra.mxu0 %v1127
    %1137 = vmatprep.subr.mxu0 0.0
    %1138 = vmatpush1.msra.mxu0 %v1129
    %1139 = vmatprep.subr.mxu0 0.0
    %1140 = vmatpush1.msra.mxu0 0.0
    %1141 = vmatprep.subr.mxu0 0.0
    %1142 = vmatpush1.msra.mxu0 0.0
    %1143 = vmatprep.subr.mxu0 0.0
    %1144 = vmatpush1.msra.mxu0 0.0
    %1145 = vmatprep.subr.mxu0 0.0
    %1146 = vmatpush1.msra.mxu0 0.0
    %1147 = vmatprep.subr.mxu0 0.0
    %1148 = vmatpush1.msra.mxu0 0.0
    %1149 = vmatprep.subr.mxu0 0.0
    %1150 = vmatpush1.msra.mxu0 0.0
    %1151 = vmatprep.subr.mxu0 0.0
    %1152 = vmatpush1.msra.mxu0 0.0
    %1153 = vmatprep.subr.mxu0 0.0
    %1154 = vmatpush1.msra.mxu0 0.0
    %1155 = vmatprep.subr.mxu0 0.0
    %1156 = vmatpush1.msra.mxu0 0.0
    %1157 = vmatprep.subr.mxu0 0.0
    %1158 = vmatpush1.msra.mxu0 0.0
    %1159 = vmatprep.subr.mxu0 0.0
    %1160 = vmatpush1.msra.mxu0 0.0
    %1161 = vmatprep.subr.mxu0 0.0
    %1162 = vmatpush1.msra.mxu0 0.0
    %1163 = vmatprep.subr.mxu0 0.0
    %1164 = vmatpush1.msra.mxu0 0.0
    %1165 = vmatprep.subr.mxu0 0.0
    %1166 = vmatpush1.msra.mxu0 0.0
    %1167 = vmatprep.subr.mxu0 0.0
    %1168 = vmatpush1.msra.mxu0 0.0
    %1169 = vmatprep.subr.mxu0 0.0
    %1170 = vmatpush1.msra.mxu0 0.0
    %1171 = vmatprep.subr.mxu0 0.0
    %1172 = vmatpush1.msra.mxu0 0.0
    %1173 = vmatprep.subr.mxu0 0.0
    %1174 = vmatpush1.msra.mxu0 0.0
    %1175 = vmatprep.subr.mxu0 0.0
    %1176 = vmatpush1.msra.mxu0 0.0
    %1177 = vmatprep.subr.mxu0 0.0
    %1178 = vmatpush1.msra.mxu0 0.0
    %1179 = vmatprep.subr.mxu0 0.0
    %1180 = vmatpush1.msra.mxu0 0.0
    %1181 = vmatprep.subr.mxu0 0.0
    %1182 = vmatpush1.msra.mxu0 0.0
    %1183 = vmatprep.subr.mxu0 0.0
    %1184 = vmatpush1.msra.mxu0 0.0
    %1185 = vmatprep.subr.mxu0 0.0
    %1186 = vmatpush1.msra.mxu0 0.0
    %1187 = vmatprep.subr.mxu0 0.0
    %1188 = vmatpush1.msra.mxu0 0.0
    %1189 = vmatprep.subr.mxu0 0.0
    %1190 = vmatpush1.msra.mxu0 0.0
    %1191 = vmatprep.subr.mxu0 0.0
    %1192 = vmatpush1.msra.mxu0 0.0
    %1193 = vmatprep.subr.mxu0 0.0
    %1194 = vmatpush1.msra.mxu0 0.0
    %1195 = vmatprep.subr.mxu0 0.0
    %1196 = vmatpush1.msra.mxu0 0.0
    %1197 = vmatprep.subr.mxu0 0.0
    %1198 = vmatpush1.msra.mxu0 0.0
    %1199 = vmatprep.mubr.f32.mxu0 0.0
    %1200 = vmatmul.mubr.f32.gmra.mrb[0].mxu0 %v1133
    %v1201 = vpop.f32.mrb[0].mxu0
    %v1202 = vadd.f32 0.0, %v1201
    %v1203 = vpop.f32.mrb[0].mxu0
    %1204 = vdwg.mxu0
    %1205 = vrot.lane.b32.xlu0 %v511, 64
    %v1206 = vpop.permute.xlu0 %1205
    %1207 = vrot.lane.b32.xlu0 %v364, 64
    %v1208 = vpop.permute.xlu0 %1207
    %1209 = vrot.lane.b32.xlu0 %v370, 64
    %v1210 = vpop.permute.xlu0 %1209
    %v1211 = vsel %vm514, %v1206, 0
    %v1213 = vsel %vm514, %v1208, 0
    %v1215 = vsel %vm514, %v1210, 0
    %1217 = vmatprep.subr.mxu0 0.0
    %1218 = vmatpush1.xpose.msra.mxu0 %v1213
    %1219 = vmatprep.subr.mxu0 0.0
    %1220 = vmatpush1.xpose.msra.mxu0 %v1215
    %1221 = vmatprep.subr.mxu0 0.0
    %1222 = vmatpush1.xpose.msra.mxu0 0.0
    %1223 = vmatprep.subr.mxu0 0.0
    %1224 = vmatpush1.xpose.msra.mxu0 0.0
    %1225 = vmatprep.subr.mxu0 0.0
    %1226 = vmatpush1.xpose.msra.mxu0 0.0
    %1227 = vmatprep.subr.mxu0 0.0
    %1228 = vmatpush1.xpose.msra.mxu0 0.0
    %1229 = vmatprep.subr.mxu0 0.0
    %1230 = vmatpush1.xpose.msra.mxu0 0.0
    %1231 = vmatprep.subr.mxu0 0.0
    %1232 = vmatpush1.xpose.msra.mxu0 0.0
    %1233 = vmatprep.subr.mxu0 0.0
    %1234 = vmatpush1.xpose.msra.mxu0 0.0
    %1235 = vmatprep.subr.mxu0 0.0
    %1236 = vmatpush1.xpose.msra.mxu0 0.0
    %1237 = vmatprep.subr.mxu0 0.0
    %1238 = vmatpush1.xpose.msra.mxu0 0.0
    %1239 = vmatprep.subr.mxu0 0.0
    %1240 = vmatpush1.xpose.msra.mxu0 0.0
    %1241 = vmatprep.subr.mxu0 0.0
    %1242 = vmatpush1.xpose.msra.mxu0 0.0
    %1243 = vmatprep.subr.mxu0 0.0
    %1244 = vmatpush1.xpose.msra.mxu0 0.0
    %1245 = vmatprep.subr.mxu0 0.0
    %1246 = vmatpush1.xpose.msra.mxu0 0.0
    %1247 = vmatprep.subr.mxu0 0.0
    %1248 = vmatpush1.xpose.msra.mxu0 0.0
    %1249 = vmatprep.subr.mxu0 0.0
    %1250 = vmatpush1.xpose.msra.mxu0 0.0
    %1251 = vmatprep.subr.mxu0 0.0
    %1252 = vmatpush1.xpose.msra.mxu0 0.0
    %1253 = vmatprep.subr.mxu0 0.0
    %1254 = vmatpush1.xpose.msra.mxu0 0.0
    %1255 = vmatprep.subr.mxu0 0.0
    %1256 = vmatpush1.xpose.msra.mxu0 0.0
    %1257 = vmatprep.subr.mxu0 0.0
    %1258 = vmatpush1.xpose.msra.mxu0 0.0
    %1259 = vmatprep.subr.mxu0 0.0
    %1260 = vmatpush1.xpose.msra.mxu0 0.0
    %1261 = vmatprep.subr.mxu0 0.0
    %1262 = vmatpush1.xpose.msra.mxu0 0.0
    %1263 = vmatprep.subr.mxu0 0.0
    %1264 = vmatpush1.xpose.msra.mxu0 0.0
    %1265 = vmatprep.subr.mxu0 0.0
    %1266 = vmatpush1.xpose.msra.mxu0 0.0
    %1267 = vmatprep.subr.mxu0 0.0
    %1268 = vmatpush1.xpose.msra.mxu0 0.0
    %1269 = vmatprep.subr.mxu0 0.0
    %1270 = vmatpush1.xpose.msra.mxu0 0.0
    %1271 = vmatprep.subr.mxu0 0.0
    %1272 = vmatpush1.xpose.msra.mxu0 0.0
    %1273 = vmatprep.subr.mxu0 0.0
    %1274 = vmatpush1.xpose.msra.mxu0 0.0
    %1275 = vmatprep.subr.mxu0 0.0
    %1276 = vmatpush1.xpose.msra.mxu0 0.0
    %1277 = vmatprep.subr.mxu0 0.0
    %1278 = vmatpush1.xpose.msra.mxu0 0.0
    %1279 = vmatprep.subr.mxu0 0.0
    %1280 = vmatpush1.xpose.msra.mxu0 0.0
    %1281 = vmatprep.mubr.f32.mxu0 0.0
    %1282 = vmatmul.mubr.f32.gmra.mrb[0].mxu0 %v1211
    %v1283 = vpop.f32.mrb[0].mxu0
    %v1284 = vadd.f32 0.0, %v1283
    %v1285 = vpop.f32.mrb[0].mxu0
    %1286 = vdwg.mxu0
    %v1287 = vmul.f32 %v1284, 0.25
    %v1288 = vsel %vm595, %v1287, -inf
    %1289 = vmax.xlane.f32.xlu0 %v1288
    %v1290 = vpop.xlane.xlu0 %1289
    %v1291 = vsub.f32 %v1287, %v1290
    %v1292 = vmul.f32 %v1291, 1.442695
    %v1293 = vpow.pop %v1292
    %v1294 = vsel %vm595, %v1293, 0.0
    %1295 = vadd.xlane.f32.xlu0 %v1294
    %v1296 = vpop.xlane.xlu0 %1295
    %v1297 = vrcp.pop %v1296
    %v1298 = vmul.f32 %v1293, %v1297
    %v1299 = vadd.f32 %v1125, %v1298
    %1300 = vrot.lane.b32.xlu0 %v366, 64
    %v1301 = vpop.permute.xlu0 %1300
    %1302 = vrot.lane.b32.xlu0 %v372, 64
    %v1303 = vpop.permute.xlu0 %1302
    %v1307 = vsel %vm514, %v1298, 0
    %1309 = vmatprep.subr.mxu0 0.0
    %1310 = vmatpush1.msra.mxu0 %v1301
    %1311 = vmatprep.subr.mxu0 0.0
    %1312 = vmatpush1.msra.mxu0 %v1303
    %1313 = vmatprep.subr.mxu0 0.0
    %1314 = vmatpush1.msra.mxu0 0.0
    %1315 = vmatprep.subr.mxu0 0.0
    %1316 = vmatpush1.msra.mxu0 0.0
    %1317 = vmatprep.subr.mxu0 0.0
    %1318 = vmatpush1.msra.mxu0 0.0
    %1319 = vmatprep.subr.mxu0 0.0
    %1320 = vmatpush1.msra.mxu0 0.0
    %1321 = vmatprep.subr.mxu0 0.0
    %1322 = vmatpush1.msra.mxu0 0.0
    %1323 = vmatprep.subr.mxu0 0.0
    %1324 = vmatpush1.msra.mxu0 0.0
    %1325 = vmatprep.subr.mxu0 0.0
    %1326 = vmatpush1.msra.mxu0 0.0
    %1327 = vmatprep.subr.mxu0 0.0
    %1328 = vmatpush1.msra.mxu0 0.0
    %1329 = vmatprep.subr.mxu0 0.0
    %1330 = vmatpush1.msra.mxu0 0.0
    %1331 = vmatprep.subr.mxu0 0.0
    %1332 = vmatpush1.msra.mxu0 0.0
    %1333 = vmatprep.subr.mxu0 0.0
    %1334 = vmatpush1.msra.mxu0 0.0
    %1335 = vmatprep.subr.mxu0 0.0
    %1336 = vmatpush1.msra.mxu0 0.0
    %1337 = vmatprep.subr.mxu0 0.0
    %1338 = vmatpush1.msra.mxu0 0.0
    %1339 = vmatprep.subr.mxu0 0.0
    %1340 = vmatpush1.msra.mxu0 0.0
    %1341 = vmatprep.subr.mxu0 0.0
    %1342 = vmatpush1.msra.mxu0 0.0
    %1343 = vmatprep.subr.mxu0 0.0
    %1344 = vmatpush1.msra.mxu0 0.0
    %1345 = vmatprep.subr.mxu0 0.0
    %1346 = vmatpush1.msra.mxu0 0.0
    %1347 = vmatprep.subr.mxu0 0.0
    %1348 = vmatpush1.msra.mxu0 0.0
    %1349 = vmatprep.subr.mxu0 0.0
    %1350 = vmatpush1.msra.mxu0 0.0
    %1351 = vmatprep.subr.mxu0 0.0
    %1352 = vmatpush1.msra.mxu0 0.0
    %1353 = vmatprep.subr.mxu0 0.0
    %1354 = vmatpush1.msra.mxu0 0.0
    %1355 = vmatprep.subr.mxu0 0.0
    %1356 = vmatpush1.msra.mxu0 0.0
    %1357 = vmatprep.subr.mxu0 0.0
    %1358 = vmatpush1.msra.mxu0 0.0
    %1359 = vmatprep.subr.mxu0 0.0
    %1360 = vmatpush1.msra.mxu0 0.0
    %1361 = vmatprep.subr.mxu0 0.0
    %1362 = vmatpush1.msra.mxu0 0.0
    %1363 = vmatprep.subr.mxu0 0.0
    %1364 = vmatpush1.msra.mxu0 0.0
    %1365 = vmatprep.subr.mxu0 0.0
    %1366 = vmatpush1.msra.mxu0 0.0
    %1367 = vmatprep.subr.mxu0 0.0
    %1368 = vmatpush1.msra.mxu0 0.0
    %1369 = vmatprep.subr.mxu0 0.0
    %1370 = vmatpush1.msra.mxu0 0.0
    %1371 = vmatprep.subr.mxu0 0.0
    %1372 = vmatpush1.msra.mxu0 0.0
    %1373 = vmatprep.mubr.f32.mxu0 0.0
    %1374 = vmatmul.mubr.f32.gmra.mrb[0].mxu0 %v1307
    %v1375 = vpop.f32.mrb[0].mxu0
    %v1376 = vadd.f32 0.0, %v1375
    %v1377 = vpop.f32.mrb[0].mxu0
    %1378 = vdwg.mxu0
    %1379 = vrot.lane.b32.xlu0 %v511, 48
    %v1380 = vpop.permute.xlu0 %1379
    %1381 = vrot.lane.b32.xlu0 %v364, 48
    %v1382 = vpop.permute.xlu0 %1381
    %1383 = vrot.lane.b32.xlu0 %v370, 48
    %v1384 = vpop.permute.xlu0 %1383
    %v1385 = vsel %vm514, %v1380, 0
    %v1387 = vsel %vm514, %v1382, 0
    %v1389 = vsel %vm514, %v1384, 0
    %1391 = vmatprep.subr.mxu0 0.0
    %1392 = vmatpush1.xpose.msra.mxu0 %v1387
    %1393 = vmatprep.subr.mxu0 0.0
    %1394 = vmatpush1.xpose.msra.mxu0 %v1389
    %1395 = vmatprep.subr.mxu0 0.0
    %1396 = vmatpush1.xpose.msra.mxu0 0.0
    %1397 = vmatprep.subr.mxu0 0.0
    %1398 = vmatpush1.xpose.msra.mxu0 0.0
    %1399 = vmatprep.subr.mxu0 0.0
    %1400 = vmatpush1.xpose.msra.mxu0 0.0
    %1401 = vmatprep.subr.mxu0 0.0
    %1402 = vmatpush1.xpose.msra.mxu0 0.0
    %1403 = vmatprep.subr.mxu0 0.0
    %1404 = vmatpush1.xpose.msra.mxu0 0.0
    %1405 = vmatprep.subr.mxu0 0.0
    %1406 = vmatpush1.xpose.msra.mxu0 0.0
    %1407 = vmatprep.subr.mxu0 0.0
    %1408 = vmatpush1.xpose.msra.mxu0 0.0
    %1409 = vmatprep.subr.mxu0 0.0
    %1410 = vmatpush1.xpose.msra.mxu0 0.0
    %1411 = vmatprep.subr.mxu0 0.0
    %1412 = vmatpush1.xpose.msra.mxu0 0.0
    %1413 = vmatprep.subr.mxu0 0.0
    %1414 = vmatpush1.xpose.msra.mxu0 0.0
    %1415 = vmatprep.subr.mxu0 0.0
    %1416 = vmatpush1.xpose.msra.mxu0 0.0
    %1417 = vmatprep.subr.mxu0 0.0
    %1418 = vmatpush1.xpose.msra.mxu0 0.0
    %1419 = vmatprep.subr.mxu0 0.0
    %1420 = vmatpush1.xpose.msra.mxu0 0.0
    %1421 = vmatprep.subr.mxu0 0.0
    %1422 = vmatpush1.xpose.msra.mxu0 0.0
    %1423 = vmatprep.subr.mxu0 0.0
    %1424 = vmatpush1.xpose.msra.mxu0 0.0
    %1425 = vmatprep.subr.mxu0 0.0
    %1426 = vmatpush1.xpose.msra.mxu0 0.0
    %1427 = vmatprep.subr.mxu0 0.0
    %1428 = vmatpush1.xpose.msra.mxu0 0.0
    %1429 = vmatprep.subr.mxu0 0.0
    %1430 = vmatpush1.xpose.msra.mxu0 0.0
    %1431 = vmatprep.subr.mxu0 0.0
    %1432 = vmatpush1.xpose.msra.mxu0 0.0
    %1433 = vmatprep.subr.mxu0 0.0
    %1434 = vmatpush1.xpose.msra.mxu0 0.0
    %1435 = vmatprep.subr.mxu0 0.0
    %1436 = vmatpush1.xpose.msra.mxu0 0.0
    %1437 = vmatprep.subr.mxu0 0.0
    %1438 = vmatpush1.xpose.msra.mxu0 0.0
    %1439 = vmatprep.subr.mxu0 0.0
    %1440 = vmatpush1.xpose.msra.mxu0 0.0
    %1441 = vmatprep.subr.mxu0 0.0
    %1442 = vmatpush1.xpose.msra.mxu0 0.0
    %1443 = vmatprep.subr.mxu0 0.0
    %1444 = vmatpush1.xpose.msra.mxu0 0.0
    %1445 = vmatprep.subr.mxu0 0.0
    %1446 = vmatpush1.xpose.msra.mxu0 0.0
    %1447 = vmatprep.subr.mxu0 0.0
    %1448 = vmatpush1.xpose.msra.mxu0 0.0
    %1449 = vmatprep.subr.mxu0 0.0
    %1450 = vmatpush1.xpose.msra.mxu0 0.0
    %1451 = vmatprep.subr.mxu0 0.0
    %1452 = vmatpush1.xpose.msra.mxu0 0.0
    %1453 = vmatprep.subr.mxu0 0.0
    %1454 = vmatpush1.xpose.msra.mxu0 0.0
    %1455 = vmatprep.mubr.f32.mxu0 0.0
    %1456 = vmatmul.mubr.f32.gmra.mrb[0].mxu0 %v1385
    %v1457 = vpop.f32.mrb[0].mxu0
    %v1458 = vadd.f32 0.0, %v1457
    %v1459 = vpop.f32.mrb[0].mxu0
    %1460 = vdwg.mxu0
    %v1461 = vmul.f32 %v1458, 0.25
    %v1462 = vsel %vm595, %v1461, -inf
    %1463 = vmax.xlane.f32.xlu0 %v1462
    %v1464 = vpop.xlane.xlu0 %1463
    %v1465 = vsub.f32 %v1461, %v1464
    %v1466 = vmul.f32 %v1465, 1.442695
    %v1467 = vpow.pop %v1466
    %v1468 = vsel %vm595, %v1467, 0.0
    %1469 = vadd.xlane.f32.xlu0 %v1468
    %v1470 = vpop.xlane.xlu0 %1469
    %v1471 = vrcp.pop %v1470
    %v1472 = vmul.f32 %v1467, %v1471
    %v1473 = vadd.f32 %v1299, %v1472
    %1474 = vrot.lane.b32.xlu0 %v366, 48
    %v1475 = vpop.permute.xlu0 %1474
    %1476 = vrot.lane.b32.xlu0 %v372, 48
    %v1477 = vpop.permute.xlu0 %1476
    %v1481 = vsel %vm514, %v1472, 0
    %1483 = vmatprep.subr.mxu0 0.0
    %1484 = vmatpush1.msra.mxu0 %v1475
    %1485 = vmatprep.subr.mxu0 0.0
    %1486 = vmatpush1.msra.mxu0 %v1477
    %1487 = vmatprep.subr.mxu0 0.0
    %1488 = vmatpush1.msra.mxu0 0.0
    %1489 = vmatprep.subr.mxu0 0.0
    %1490 = vmatpush1.msra.mxu0 0.0
    %1491 = vmatprep.subr.mxu0 0.0
    %1492 = vmatpush1.msra.mxu0 0.0
    %1493 = vmatprep.subr.mxu0 0.0
    %1494 = vmatpush1.msra.mxu0 0.0
    %1495 = vmatprep.subr.mxu0 0.0
    %1496 = vmatpush1.msra.mxu0 0.0
    %1497 = vmatprep.subr.mxu0 0.0
    %1498 = vmatpush1.msra.mxu0 0.0
    %1499 = vmatprep.subr.mxu0 0.0
    %1500 = vmatpush1.msra.mxu0 0.0
    %1501 = vmatprep.subr.mxu0 0.0
    %1502 = vmatpush1.msra.mxu0 0.0
    %1503 = vmatprep.subr.mxu0 0.0
    %1504 = vmatpush1.msra.mxu0 0.0
    %1505 = vmatprep.subr.mxu0 0.0
    %1506 = vmatpush1.msra.mxu0 0.0
    %1507 = vmatprep.subr.mxu0 0.0
    %1508 = vmatpush1.msra.mxu0 0.0
    %1509 = vmatprep.subr.mxu0 0.0
    %1510 = vmatpush1.msra.mxu0 0.0
    %1511 = vmatprep.subr.mxu0 0.0
    %1512 = vmatpush1.msra.mxu0 0.0
    %1513 = vmatprep.subr.mxu0 0.0
    %1514 = vmatpush1.msra.mxu0 0.0
    %1515 = vmatprep.subr.mxu0 0.0
    %1516 = vmatpush1.msra.mxu0 0.0
    %1517 = vmatprep.subr.mxu0 0.0
    %1518 = vmatpush1.msra.mxu0 0.0
    %1519 = vmatprep.subr.mxu0 0.0
    %1520 = vmatpush1.msra.mxu0 0.0
    %1521 = vmatprep.subr.mxu0 0.0
    %1522 = vmatpush1.msra.mxu0 0.0
    %1523 = vmatprep.subr.mxu0 0.0
    %1524 = vmatpush1.msra.mxu0 0.0
    %1525 = vmatprep.subr.mxu0 0.0
    %1526 = vmatpush1.msra.mxu0 0.0
    %1527 = vmatprep.subr.mxu0 0.0
    %1528 = vmatpush1.msra.mxu0 0.0
    %1529 = vmatprep.subr.mxu0 0.0
    %1530 = vmatpush1.msra.mxu0 0.0
    %1531 = vmatprep.subr.mxu0 0.0
    %1532 = vmatpush1.msra.mxu0 0.0
    %1533 = vmatprep.subr.mxu0 0.0
    %1534 = vmatpush1.msra.mxu0 0.0
    %1535 = vmatprep.subr.mxu0 0.0
    %1536 = vmatpush1.msra.mxu0 0.0
    %1537 = vmatprep.subr.mxu0 0.0
    %1538 = vmatpush1.msra.mxu0 0.0
    %1539 = vmatprep.subr.mxu0 0.0
    %1540 = vmatpush1.msra.mxu0 0.0
    %1541 = vmatprep.subr.mxu0 0.0
    %1542 = vmatpush1.msra.mxu0 0.0
    %1543 = vmatprep.subr.mxu0 0.0
    %1544 = vmatpush1.msra.mxu0 0.0
    %1545 = vmatprep.subr.mxu0 0.0
    %1546 = vmatpush1.msra.mxu0 0.0
    %1547 = vmatprep.mubr.f32.mxu0 0.0
    %1548 = vmatmul.mubr.f32.gmra.mrb[0].mxu0 %v1481
    %v1549 = vpop.f32.mrb[0].mxu0
    %v1550 = vadd.f32 0.0, %v1549
    %v1551 = vpop.f32.mrb[0].mxu0
    %1552 = vdwg.mxu0
    %1553 = vrot.lane.b32.xlu0 %v511, 32
    %v1554 = vpop.permute.xlu0 %1553
    %1555 = vrot.lane.b32.xlu0 %v364, 32
    %v1556 = vpop.permute.xlu0 %1555
    %1557 = vrot.lane.b32.xlu0 %v370, 32
    %v1558 = vpop.permute.xlu0 %1557
    %v1559 = vsel %vm514, %v1554, 0
    %v1561 = vsel %vm514, %v1556, 0
    %v1563 = vsel %vm514, %v1558, 0
    %1565 = vmatprep.subr.mxu0 0.0
    %1566 = vmatpush1.xpose.msra.mxu0 %v1561
    %1567 = vmatprep.subr.mxu0 0.0
    %1568 = vmatpush1.xpose.msra.mxu0 %v1563
    %1569 = vmatprep.subr.mxu0 0.0
    %1570 = vmatpush1.xpose.msra.mxu0 0.0
    %1571 = vmatprep.subr.mxu0 0.0
    %1572 = vmatpush1.xpose.msra.mxu0 0.0
    %1573 = vmatprep.subr.mxu0 0.0
    %1574 = vmatpush1.xpose.msra.mxu0 0.0
    %1575 = vmatprep.subr.mxu0 0.0
    %1576 = vmatpush1.xpose.msra.mxu0 0.0
    %1577 = vmatprep.subr.mxu0 0.0
    %1578 = vmatpush1.xpose.msra.mxu0 0.0
    %1579 = vmatprep.subr.mxu0 0.0
    %1580 = vmatpush1.xpose.msra.mxu0 0.0
    %1581 = vmatprep.subr.mxu0 0.0
    %1582 = vmatpush1.xpose.msra.mxu0 0.0
    %1583 = vmatprep.subr.mxu0 0.0
    %1584 = vmatpush1.xpose.msra.mxu0 0.0
    %1585 = vmatprep.subr.mxu0 0.0
    %1586 = vmatpush1.xpose.msra.mxu0 0.0
    %1587 = vmatprep.subr.mxu0 0.0
    %1588 = vmatpush1.xpose.msra.mxu0 0.0
    %1589 = vmatprep.subr.mxu0 0.0
    %1590 = vmatpush1.xpose.msra.mxu0 0.0
    %1591 = vmatprep.subr.mxu0 0.0
    %1592 = vmatpush1.xpose.msra.mxu0 0.0
    %1593 = vmatprep.subr.mxu0 0.0
    %1594 = vmatpush1.xpose.msra.mxu0 0.0
    %1595 = vmatprep.subr.mxu0 0.0
    %1596 = vmatpush1.xpose.msra.mxu0 0.0
    %1597 = vmatprep.subr.mxu0 0.0
    %1598 = vmatpush1.xpose.msra.mxu0 0.0
    %1599 = vmatprep.subr.mxu0 0.0
    %1600 = vmatpush1.xpose.msra.mxu0 0.0
    %1601 = vmatprep.subr.mxu0 0.0
    %1602 = vmatpush1.xpose.msra.mxu0 0.0
    %1603 = vmatprep.subr.mxu0 0.0
    %1604 = vmatpush1.xpose.msra.mxu0 0.0
    %1605 = vmatprep.subr.mxu0 0.0
    %1606 = vmatpush1.xpose.msra.mxu0 0.0
    %1607 = vmatprep.subr.mxu0 0.0
    %1608 = vmatpush1.xpose.msra.mxu0 0.0
    %1609 = vmatprep.subr.mxu0 0.0
    %1610 = vmatpush1.xpose.msra.mxu0 0.0
    %1611 = vmatprep.subr.mxu0 0.0
    %1612 = vmatpush1.xpose.msra.mxu0 0.0
    %1613 = vmatprep.subr.mxu0 0.0
    %1614 = vmatpush1.xpose.msra.mxu0 0.0
    %1615 = vmatprep.subr.mxu0 0.0
    %1616 = vmatpush1.xpose.msra.mxu0 0.0
    %1617 = vmatprep.subr.mxu0 0.0
    %1618 = vmatpush1.xpose.msra.mxu0 0.0
    %1619 = vmatprep.subr.mxu0 0.0
    %1620 = vmatpush1.xpose.msra.mxu0 0.0
    %1621 = vmatprep.subr.mxu0 0.0
    %1622 = vmatpush1.xpose.msra.mxu0 0.0
    %1623 = vmatprep.subr.mxu0 0.0
    %1624 = vmatpush1.xpose.msra.mxu0 0.0
    %1625 = vmatprep.subr.mxu0 0.0
    %1626 = vmatpush1.xpose.msra.mxu0 0.0
    %1627 = vmatprep.subr.mxu0 0.0
    %1628 = vmatpush1.xpose.msra.mxu0 0.0
    %1629 = vmatprep.mubr.f32.mxu0 0.0
    %1630 = vmatmul.mubr.f32.gmra.mrb[0].mxu0 %v1559
    %v1631 = vpop.f32.mrb[0].mxu0
    %v1632 = vadd.f32 0.0, %v1631
    %v1633 = vpop.f32.mrb[0].mxu0
    %1634 = vdwg.mxu0
    %v1635 = vmul.f32 %v1632, 0.25
    %v1636 = vsel %vm595, %v1635, -inf
    %1637 = vmax.xlane.f32.xlu0 %v1636
    %v1638 = vpop.xlane.xlu0 %1637
    %v1639 = vsub.f32 %v1635, %v1638
    %v1640 = vmul.f32 %v1639, 1.442695
    %v1641 = vpow.pop %v1640
    %v1642 = vsel %vm595, %v1641, 0.0
    %1643 = vadd.xlane.f32.xlu0 %v1642
    %v1644 = vpop.xlane.xlu0 %1643
    %v1645 = vrcp.pop %v1644
    %v1646 = vmul.f32 %v1641, %v1645
    %v1647 = vadd.f32 %v1473, %v1646
    %1648 = vrot.lane.b32.xlu0 %v366, 32
    %v1649 = vpop.permute.xlu0 %1648
    %1650 = vrot.lane.b32.xlu0 %v372, 32
    %v1651 = vpop.permute.xlu0 %1650
    %v1655 = vsel %vm514, %v1646, 0
    %1657 = vmatprep.subr.mxu0 0.0
    %1658 = vmatpush1.msra.mxu0 %v1649
    %1659 = vmatprep.subr.mxu0 0.0
    %1660 = vmatpush1.msra.mxu0 %v1651
    %1661 = vmatprep.subr.mxu0 0.0
    %1662 = vmatpush1.msra.mxu0 0.0
    %1663 = vmatprep.subr.mxu0 0.0
    %1664 = vmatpush1.msra.mxu0 0.0
    %1665 = vmatprep.subr.mxu0 0.0
    %1666 = vmatpush1.msra.mxu0 0.0
    %1667 = vmatprep.subr.mxu0 0.0
    %1668 = vmatpush1.msra.mxu0 0.0
    %1669 = vmatprep.subr.mxu0 0.0
    %1670 = vmatpush1.msra.mxu0 0.0
    %1671 = vmatprep.subr.mxu0 0.0
    %1672 = vmatpush1.msra.mxu0 0.0
    %1673 = vmatprep.subr.mxu0 0.0
    %1674 = vmatpush1.msra.mxu0 0.0
    %1675 = vmatprep.subr.mxu0 0.0
    %1676 = vmatpush1.msra.mxu0 0.0
    %1677 = vmatprep.subr.mxu0 0.0
    %1678 = vmatpush1.msra.mxu0 0.0
    %1679 = vmatprep.subr.mxu0 0.0
    %1680 = vmatpush1.msra.mxu0 0.0
    %1681 = vmatprep.subr.mxu0 0.0
    %1682 = vmatpush1.msra.mxu0 0.0
    %1683 = vmatprep.subr.mxu0 0.0
    %1684 = vmatpush1.msra.mxu0 0.0
    %1685 = vmatprep.subr.mxu0 0.0
    %1686 = vmatpush1.msra.mxu0 0.0
    %1687 = vmatprep.subr.mxu0 0.0
    %1688 = vmatpush1.msra.mxu0 0.0
    %1689 = vmatprep.subr.mxu0 0.0
    %1690 = vmatpush1.msra.mxu0 0.0
    %1691 = vmatprep.subr.mxu0 0.0
    %1692 = vmatpush1.msra.mxu0 0.0
    %1693 = vmatprep.subr.mxu0 0.0
    %1694 = vmatpush1.msra.mxu0 0.0
    %1695 = vmatprep.subr.mxu0 0.0
    %1696 = vmatpush1.msra.mxu0 0.0
    %1697 = vmatprep.subr.mxu0 0.0
    %1698 = vmatpush1.msra.mxu0 0.0
    %1699 = vmatprep.subr.mxu0 0.0
    %1700 = vmatpush1.msra.mxu0 0.0
    %1701 = vmatprep.subr.mxu0 0.0
    %1702 = vmatpush1.msra.mxu0 0.0
    %1703 = vmatprep.subr.mxu0 0.0
    %1704 = vmatpush1.msra.mxu0 0.0
    %1705 = vmatprep.subr.mxu0 0.0
    %1706 = vmatpush1.msra.mxu0 0.0
    %1707 = vmatprep.subr.mxu0 0.0
    %1708 = vmatpush1.msra.mxu0 0.0
    %1709 = vmatprep.subr.mxu0 0.0
    %1710 = vmatpush1.msra.mxu0 0.0
    %1711 = vmatprep.subr.mxu0 0.0
    %1712 = vmatpush1.msra.mxu0 0.0
    %1713 = vmatprep.subr.mxu0 0.0
    %1714 = vmatpush1.msra.mxu0 0.0
    %1715 = vmatprep.subr.mxu0 0.0
    %1716 = vmatpush1.msra.mxu0 0.0
    %1717 = vmatprep.subr.mxu0 0.0
    %1718 = vmatpush1.msra.mxu0 0.0
    %1719 = vmatprep.subr.mxu0 0.0
    %1720 = vmatpush1.msra.mxu0 0.0
    %1721 = vmatprep.mubr.f32.mxu0 0.0
    %1722 = vmatmul.mubr.f32.gmra.mrb[0].mxu0 %v1655
    %v1723 = vpop.f32.mrb[0].mxu0
    %v1724 = vadd.f32 0.0, %v1723
    %v1725 = vpop.f32.mrb[0].mxu0
    %1726 = vdwg.mxu0
    %1727 = vrot.lane.b32.xlu0 %v511, 16
    %v1728 = vpop.permute.xlu0 %1727
    %1729 = vrot.lane.b32.xlu0 %v364, 16
    %v1730 = vpop.permute.xlu0 %1729
    %1731 = vrot.lane.b32.xlu0 %v370, 16
    %v1732 = vpop.permute.xlu0 %1731
    %v1733 = vsel %vm514, %v1728, 0
    %v1735 = vsel %vm514, %v1730, 0
    %v1737 = vsel %vm514, %v1732, 0
    %1739 = vmatprep.subr.mxu0 0.0
    %1740 = vmatpush1.xpose.msra.mxu0 %v1735
    %1741 = vmatprep.subr.mxu0 0.0
    %1742 = vmatpush1.xpose.msra.mxu0 %v1737
    %1743 = vmatprep.subr.mxu0 0.0
    %1744 = vmatpush1.xpose.msra.mxu0 0.0
    %1745 = vmatprep.subr.mxu0 0.0
    %1746 = vmatpush1.xpose.msra.mxu0 0.0
    %1747 = vmatprep.subr.mxu0 0.0
    %1748 = vmatpush1.xpose.msra.mxu0 0.0
    %1749 = vmatprep.subr.mxu0 0.0
    %1750 = vmatpush1.xpose.msra.mxu0 0.0
    %1751 = vmatprep.subr.mxu0 0.0
    %1752 = vmatpush1.xpose.msra.mxu0 0.0
    %1753 = vmatprep.subr.mxu0 0.0
    %1754 = vmatpush1.xpose.msra.mxu0 0.0
    %1755 = vmatprep.subr.mxu0 0.0
    %1756 = vmatpush1.xpose.msra.mxu0 0.0
    %1757 = vmatprep.subr.mxu0 0.0
    %1758 = vmatpush1.xpose.msra.mxu0 0.0
    %1759 = vmatprep.subr.mxu0 0.0
    %1760 = vmatpush1.xpose.msra.mxu0 0.0
    %1761 = vmatprep.subr.mxu0 0.0
    %1762 = vmatpush1.xpose.msra.mxu0 0.0
    %1763 = vmatprep.subr.mxu0 0.0
    %1764 = vmatpush1.xpose.msra.mxu0 0.0
    %1765 = vmatprep.subr.mxu0 0.0
    %1766 = vmatpush1.xpose.msra.mxu0 0.0
    %1767 = vmatprep.subr.mxu0 0.0
    %1768 = vmatpush1.xpose.msra.mxu0 0.0
    %1769 = vmatprep.subr.mxu0 0.0
    %1770 = vmatpush1.xpose.msra.mxu0 0.0
    %1771 = vmatprep.subr.mxu0 0.0
    %1772 = vmatpush1.xpose.msra.mxu0 0.0
    %1773 = vmatprep.subr.mxu0 0.0
    %1774 = vmatpush1.xpose.msra.mxu0 0.0
    %1775 = vmatprep.subr.mxu0 0.0
    %1776 = vmatpush1.xpose.msra.mxu0 0.0
    %1777 = vmatprep.subr.mxu0 0.0
    %1778 = vmatpush1.xpose.msra.mxu0 0.0
    %1779 = vmatprep.subr.mxu0 0.0
    %1780 = vmatpush1.xpose.msra.mxu0 0.0
    %1781 = vmatprep.subr.mxu0 0.0
    %1782 = vmatpush1.xpose.msra.mxu0 0.0
    %1783 = vmatprep.subr.mxu0 0.0
    %1784 = vmatpush1.xpose.msra.mxu0 0.0
    %1785 = vmatprep.subr.mxu0 0.0
    %1786 = vmatpush1.xpose.msra.mxu0 0.0
    %1787 = vmatprep.subr.mxu0 0.0
    %1788 = vmatpush1.xpose.msra.mxu0 0.0
    %1789 = vmatprep.subr.mxu0 0.0
    %1790 = vmatpush1.xpose.msra.mxu0 0.0
    %1791 = vmatprep.subr.mxu0 0.0
    %1792 = vmatpush1.xpose.msra.mxu0 0.0
    %1793 = vmatprep.subr.mxu0 0.0
    %1794 = vmatpush1.xpose.msra.mxu0 0.0
    %1795 = vmatprep.subr.mxu0 0.0
    %1796 = vmatpush1.xpose.msra.mxu0 0.0
    %1797 = vmatprep.subr.mxu0 0.0
    %1798 = vmatpush1.xpose.msra.mxu0 0.0
    %1799 = vmatprep.subr.mxu0 0.0
    %1800 = vmatpush1.xpose.msra.mxu0 0.0
    %1801 = vmatprep.subr.mxu0 0.0
    %1802 = vmatpush1.xpose.msra.mxu0 0.0
    %1803 = vmatprep.mubr.f32.mxu0 0.0
    %1804 = vmatmul.mubr.f32.gmra.mrb[0].mxu0 %v1733
    %v1805 = vpop.f32.mrb[0].mxu0
    %v1806 = vadd.f32 0.0, %v1805
    %v1807 = vpop.f32.mrb[0].mxu0
    %1808 = vdwg.mxu0
    %v1809 = vmul.f32 %v1806, 0.25
    %v1810 = vsel %vm595, %v1809, -inf
    %1811 = vmax.xlane.f32.xlu0 %v1810
    %v1812 = vpop.xlane.xlu0 %1811
    %v1813 = vsub.f32 %v1809, %v1812
    %v1814 = vmul.f32 %v1813, 1.442695
    %v1815 = vpow.pop %v1814
    %v1816 = vsel %vm595, %v1815, 0.0
    %1817 = vadd.xlane.f32.xlu0 %v1816
    %v1818 = vpop.xlane.xlu0 %1817
    %v1819 = vrcp.pop %v1818
    %v1820 = vmul.f32 %v1815, %v1819
    %v1821 = vadd.f32 %v1647, %v1820
    %1822 = vrot.lane.b32.xlu0 %v366, 16
    %v1823 = vpop.permute.xlu0 %1822
    %1824 = vrot.lane.b32.xlu0 %v372, 16
    %v1825 = vpop.permute.xlu0 %1824
    %v1829 = vsel %vm514, %v1820, 0
    %1831 = vmatprep.subr.mxu0 0.0
    %1832 = vmatpush1.msra.mxu0 %v1823
    %1833 = vmatprep.subr.mxu0 0.0
    %1834 = vmatpush1.msra.mxu0 %v1825
    %1835 = vmatprep.subr.mxu0 0.0
    %1836 = vmatpush1.msra.mxu0 0.0
    %1837 = vmatprep.subr.mxu0 0.0
    %1838 = vmatpush1.msra.mxu0 0.0
    %1839 = vmatprep.subr.mxu0 0.0
    %1840 = vmatpush1.msra.mxu0 0.0
    %1841 = vmatprep.subr.mxu0 0.0
    %1842 = vmatpush1.msra.mxu0 0.0
    %1843 = vmatprep.subr.mxu0 0.0
    %1844 = vmatpush1.msra.mxu0 0.0
    %1845 = vmatprep.subr.mxu0 0.0
    %1846 = vmatpush1.msra.mxu0 0.0
    %1847 = vmatprep.subr.mxu0 0.0
    %1848 = vmatpush1.msra.mxu0 0.0
    %1849 = vmatprep.subr.mxu0 0.0
    %1850 = vmatpush1.msra.mxu0 0.0
    %1851 = vmatprep.subr.mxu0 0.0
    %1852 = vmatpush1.msra.mxu0 0.0
    %1853 = vmatprep.subr.mxu0 0.0
    %1854 = vmatpush1.msra.mxu0 0.0
    %1855 = vmatprep.subr.mxu0 0.0
    %1856 = vmatpush1.msra.mxu0 0.0
    %1857 = vmatprep.subr.mxu0 0.0
    %1858 = vmatpush1.msra.mxu0 0.0
    %1859 = vmatprep.subr.mxu0 0.0
    %1860 = vmatpush1.msra.mxu0 0.0
    %1861 = vmatprep.subr.mxu0 0.0
    %1862 = vmatpush1.msra.mxu0 0.0
    %1863 = vmatprep.subr.mxu0 0.0
    %1864 = vmatpush1.msra.mxu0 0.0
    %1865 = vmatprep.subr.mxu0 0.0
    %1866 = vmatpush1.msra.mxu0 0.0
    %1867 = vmatprep.subr.mxu0 0.0
    %1868 = vmatpush1.msra.mxu0 0.0
    %1869 = vmatprep.subr.mxu0 0.0
    %1870 = vmatpush1.msra.mxu0 0.0
    %1871 = vmatprep.subr.mxu0 0.0
    %1872 = vmatpush1.msra.mxu0 0.0
    %1873 = vmatprep.subr.mxu0 0.0
    %1874 = vmatpush1.msra.mxu0 0.0
    %1875 = vmatprep.subr.mxu0 0.0
    %1876 = vmatpush1.msra.mxu0 0.0
    %1877 = vmatprep.subr.mxu0 0.0
    %1878 = vmatpush1.msra.mxu0 0.0
    %1879 = vmatprep.subr.mxu0 0.0
    %1880 = vmatpush1.msra.mxu0 0.0
    %1881 = vmatprep.subr.mxu0 0.0
    %1882 = vmatpush1.msra.mxu0 0.0
    %1883 = vmatprep.subr.mxu0 0.0
    %1884 = vmatpush1.msra.mxu0 0.0
    %1885 = vmatprep.subr.mxu0 0.0
    %1886 = vmatpush1.msra.mxu0 0.0
    %1887 = vmatprep.subr.mxu0 0.0
    %1888 = vmatpush1.msra.mxu0 0.0
    %1889 = vmatprep.subr.mxu0 0.0
    %1890 = vmatpush1.msra.mxu0 0.0
    %1891 = vmatprep.subr.mxu0 0.0
    %1892 = vmatpush1.msra.mxu0 0.0
    %1893 = vmatprep.subr.mxu0 0.0
    %1894 = vmatpush1.msra.mxu0 0.0
    %1895 = vmatprep.mubr.f32.mxu0 0.0
    %1896 = vmatmul.mubr.f32.gmra.mrb[0].mxu0 %v1829
    %v1897 = vpop.f32.mrb[0].mxu0
    %v1898 = vadd.f32 0.0, %v1897
    %v1899 = vpop.f32.mrb[0].mxu0
    %1900 = vdwg.mxu0
    %v1901 = vmul.f32 %v1821, 0.125
    %1902 = vst.msk [vmem:[#allocation17] sm:$0xf] %vm595, %v1901
    %1904 = vrot.lane.b32.xlu0 %v854, 16
    %v1905 = vpop.permute.xlu0 %1904
    %1908 = vrot.lane.b32.xlu0 %v1028, 32
    %v1909 = vpop.permute.xlu0 %1908
    %1912 = vrot.lane.b32.xlu0 %v1202, 48
    %v1913 = vpop.permute.xlu0 %1912
    %1916 = vrot.lane.b32.xlu0 %v1376, 64
    %v1917 = vpop.permute.xlu0 %1916
    %1920 = vrot.lane.b32.xlu0 %v1550, 80
    %v1921 = vpop.permute.xlu0 %1920
    %1924 = vrot.lane.b32.xlu0 %v1724, 96
    %v1925 = vpop.permute.xlu0 %1924
    %1928 = vrot.lane.b32.xlu0 %v1898, 112
    %v1929 = vpop.permute.xlu0 %1928
    %v1931 = vsel %vm514, %v678, %v1905
    %vm1932 = vcmask 261120
    %v1933 = vsel %vm1932, %v1931, %v1909
    %vm1934 = vcmask 392192
    %v1935 = vsel %vm1934, %v1933, %v1913
    %vm1936 = vcmask 523264
    %v1937 = vsel %vm1936, %v1935, %v1917
    %vm1938 = vcmask 654336
    %v1939 = vsel %vm1938, %v1937, %v1921
    %vm1940 = vcmask 785408
    %v1941 = vsel %vm1940, %v1939, %v1925
    %vm1942 = vcmask 916480
    %v1943 = vsel %vm1942, %v1941, %v1929
    %v1944 = vrot.slane %v511, 4
    %v1945 = vsel %vm514, %v1944, 0
    %v1948 = vsel %vm514, %v376, 0
    %v1951 = vsel %vm514, %v382, 0
    %1953 = vmatprep.subr.mxu0 0.0
    %1954 = vmatpush1.xpose.msra.mxu0 %v1948
    %1955 = vmatprep.subr.mxu0 0.0
    %1956 = vmatpush1.xpose.msra.mxu0 %v1951
    %1957 = vmatprep.subr.mxu0 0.0
    %1958 = vmatpush1.xpose.msra.mxu0 0.0
    %1959 = vmatprep.subr.mxu0 0.0
    %1960 = vmatpush1.xpose.msra.mxu0 0.0
    %1961 = vmatprep.subr.mxu0 0.0
    %1962 = vmatpush1.xpose.msra.mxu0 0.0
    %1963 = vmatprep.subr.mxu0 0.0
    %1964 = vmatpush1.xpose.msra.mxu0 0.0
    %1965 = vmatprep.subr.mxu0 0.0
    %1966 = vmatpush1.xpose.msra.mxu0 0.0
    %1967 = vmatprep.subr.mxu0 0.0
    %1968 = vmatpush1.xpose.msra.mxu0 0.0
    %1969 = vmatprep.subr.mxu0 0.0
    %1970 = vmatpush1.xpose.msra.mxu0 0.0
    %1971 = vmatprep.subr.mxu0 0.0
    %1972 = vmatpush1.xpose.msra.mxu0 0.0
    %1973 = vmatprep.subr.mxu0 0.0
    %1974 = vmatpush1.xpose.msra.mxu0 0.0
    %1975 = vmatprep.subr.mxu0 0.0
    %1976 = vmatpush1.xpose.msra.mxu0 0.0
    %1977 = vmatprep.subr.mxu0 0.0
    %1978 = vmatpush1.xpose.msra.mxu0 0.0
    %1979 = vmatprep.subr.mxu0 0.0
    %1980 = vmatpush1.xpose.msra.mxu0 0.0
    %1981 = vmatprep.subr.mxu0 0.0
    %1982 = vmatpush1.xpose.msra.mxu0 0.0
    %1983 = vmatprep.subr.mxu0 0.0
    %1984 = vmatpush1.xpose.msra.mxu0 0.0
    %1985 = vmatprep.subr.mxu0 0.0
    %1986 = vmatpush1.xpose.msra.mxu0 0.0
    %1987 = vmatprep.subr.mxu0 0.0
    %1988 = vmatpush1.xpose.msra.mxu0 0.0
    %1989 = vmatprep.subr.mxu0 0.0
    %1990 = vmatpush1.xpose.msra.mxu0 0.0
    %1991 = vmatprep.subr.mxu0 0.0
    %1992 = vmatpush1.xpose.msra.mxu0 0.0
    %1993 = vmatprep.subr.mxu0 0.0
    %1994 = vmatpush1.xpose.msra.mxu0 0.0
    %1995 = vmatprep.subr.mxu0 0.0
    %1996 = vmatpush1.xpose.msra.mxu0 0.0
    %1997 = vmatprep.subr.mxu0 0.0
    %1998 = vmatpush1.xpose.msra.mxu0 0.0
    %1999 = vmatprep.subr.mxu0 0.0
    %2000 = vmatpush1.xpose.msra.mxu0 0.0
    %2001 = vmatprep.subr.mxu0 0.0
    %2002 = vmatpush1.xpose.msra.mxu0 0.0
    %2003 = vmatprep.subr.mxu0 0.0
    %2004 = vmatpush1.xpose.msra.mxu0 0.0
    %2005 = vmatprep.subr.mxu0 0.0
    %2006 = vmatpush1.xpose.msra.mxu0 0.0
    %2007 = vmatprep.subr.mxu0 0.0
    %2008 = vmatpush1.xpose.msra.mxu0 0.0
    %2009 = vmatprep.subr.mxu0 0.0
    %2010 = vmatpush1.xpose.msra.mxu0 0.0
    %2011 = vmatprep.subr.mxu0 0.0
    %2012 = vmatpush1.xpose.msra.mxu0 0.0
    %2013 = vmatprep.subr.mxu0 0.0
    %2014 = vmatpush1.xpose.msra.mxu0 0.0
    %2015 = vmatprep.subr.mxu0 0.0
    %2016 = vmatpush1.xpose.msra.mxu0 0.0
    %2017 = vmatprep.mubr.f32.mxu0 0.0
    %2018 = vmatmul.mubr.f32.gmra.mrb[0].mxu0 %v1945
    %v2019 = vpop.f32.mrb[0].mxu0
    %v2020 = vadd.f32 0.0, %v2019
    %v2021 = vpop.f32.mrb[0].mxu0
    %2022 = vdwg.mxu0
    %v2023 = vmul.f32 %v2020, 0.25
    %v2024 = vsel %vm595, %v2023, -inf
    %2025 = vmax.xlane.f32.xlu0 %v2024
    %v2026 = vpop.xlane.xlu0 %2025
    %v2027 = vsub.f32 %v2023, %v2026
    %v2028 = vmul.f32 %v2027, 1.442695
    %v2029 = vpow.pop %v2028
    %v2030 = vsel %vm595, %v2029, 0.0
    %2031 = vadd.xlane.f32.xlu0 %v2030
    %v2032 = vpop.xlane.xlu0 %2031
    %v2033 = vrcp.pop %v2032
    %v2034 = vmul.f32 %v2029, %v2033
    %v2035 = vadd.f32 %v2034, 0.0
    %v2037 = vsel %vm514, %v2034, 0
    %2039 = vmatprep.subr.mxu0 0.0
    %2040 = vmatpush1.msra.mxu0 %v378
    %2041 = vmatprep.subr.mxu0 0.0
    %2042 = vmatpush1.msra.mxu0 %v384
    %2043 = vmatprep.subr.mxu0 0.0
    %2044 = vmatpush1.msra.mxu0 0.0
    %2045 = vmatprep.subr.mxu0 0.0
    %2046 = vmatpush1.msra.mxu0 0.0
    %2047 = vmatprep.subr.mxu0 0.0
    %2048 = vmatpush1.msra.mxu0 0.0
    %2049 = vmatprep.subr.mxu0 0.0
    %2050 = vmatpush1.msra.mxu0 0.0
    %2051 = vmatprep.subr.mxu0 0.0
    %2052 = vmatpush1.msra.mxu0 0.0
    %2053 = vmatprep.subr.mxu0 0.0
    %2054 = vmatpush1.msra.mxu0 0.0
    %2055 = vmatprep.subr.mxu0 0.0
    %2056 = vmatpush1.msra.mxu0 0.0
    %2057 = vmatprep.subr.mxu0 0.0
    %2058 = vmatpush1.msra.mxu0 0.0
    %2059 = vmatprep.subr.mxu0 0.0
    %2060 = vmatpush1.msra.mxu0 0.0
    %2061 = vmatprep.subr.mxu0 0.0
    %2062 = vmatpush1.msra.mxu0 0.0
    %2063 = vmatprep.subr.mxu0 0.0
    %2064 = vmatpush1.msra.mxu0 0.0
    %2065 = vmatprep.subr.mxu0 0.0
    %2066 = vmatpush1.msra.mxu0 0.0
    %2067 = vmatprep.subr.mxu0 0.0
    %2068 = vmatpush1.msra.mxu0 0.0
    %2069 = vmatprep.subr.mxu0 0.0
    %2070 = vmatpush1.msra.mxu0 0.0
    %2071 = vmatprep.subr.mxu0 0.0
    %2072 = vmatpush1.msra.mxu0 0.0
    %2073 = vmatprep.subr.mxu0 0.0
    %2074 = vmatpush1.msra.mxu0 0.0
    %2075 = vmatprep.subr.mxu0 0.0
    %2076 = vmatpush1.msra.mxu0 0.0
    %2077 = vmatprep.subr.mxu0 0.0
    %2078 = vmatpush1.msra.mxu0 0.0
    %2079 = vmatprep.subr.mxu0 0.0
    %2080 = vmatpush1.msra.mxu0 0.0
    %2081 = vmatprep.subr.mxu0 0.0
    %2082 = vmatpush1.msra.mxu0 0.0
    %2083 = vmatprep.subr.mxu0 0.0
    %2084 = vmatpush1.msra.mxu0 0.0
    %2085 = vmatprep.subr.mxu0 0.0
    %2086 = vmatpush1.msra.mxu0 0.0
    %2087 = vmatprep.subr.mxu0 0.0
    %2088 = vmatpush1.msra.mxu0 0.0
    %2089 = vmatprep.subr.mxu0 0.0
    %2090 = vmatpush1.msra.mxu0 0.0
    %2091 = vmatprep.subr.mxu0 0.0
    %2092 = vmatpush1.msra.mxu0 0.0
    %2093 = vmatprep.subr.mxu0 0.0
    %2094 = vmatpush1.msra.mxu0 0.0
    %2095 = vmatprep.subr.mxu0 0.0
    %2096 = vmatpush1.msra.mxu0 0.0
    %2097 = vmatprep.subr.mxu0 0.0
    %2098 = vmatpush1.msra.mxu0 0.0
    %2099 = vmatprep.subr.mxu0 0.0
    %2100 = vmatpush1.msra.mxu0 0.0
    %2101 = vmatprep.subr.mxu0 0.0
    %2102 = vmatpush1.msra.mxu0 0.0
    %2103 = vmatprep.mubr.f32.mxu0 0.0
    %2104 = vmatmul.mubr.f32.gmra.mrb[0].mxu0 %v2037
    %v2105 = vpop.f32.mrb[0].mxu0
    %v2106 = vadd.f32 0.0, %v2105
    %v2107 = vpop.f32.mrb[0].mxu0
    %2108 = vdwg.mxu0
    %2109 = vrot.lane.b32.xlu0 %v1944, 112
    %v2110 = vpop.permute.xlu0 %2109
    %2111 = vrot.lane.b32.xlu0 %v376, 112
    %v2112 = vpop.permute.xlu0 %2111
    %2113 = vrot.lane.b32.xlu0 %v382, 112
    %v2114 = vpop.permute.xlu0 %2113
    %v2115 = vsel %vm514, %v2110, 0
    %v2117 = vsel %vm514, %v2112, 0
    %v2119 = vsel %vm514, %v2114, 0
    %2121 = vmatprep.subr.mxu0 0.0
    %2122 = vmatpush1.xpose.msra.mxu0 %v2117
    %2123 = vmatprep.subr.mxu0 0.0
    %2124 = vmatpush1.xpose.msra.mxu0 %v2119
    %2125 = vmatprep.subr.mxu0 0.0
    %2126 = vmatpush1.xpose.msra.mxu0 0.0
    %2127 = vmatprep.subr.mxu0 0.0
    %2128 = vmatpush1.xpose.msra.mxu0 0.0
    %2129 = vmatprep.subr.mxu0 0.0
    %2130 = vmatpush1.xpose.msra.mxu0 0.0
    %2131 = vmatprep.subr.mxu0 0.0
    %2132 = vmatpush1.xpose.msra.mxu0 0.0
    %2133 = vmatprep.subr.mxu0 0.0
    %2134 = vmatpush1.xpose.msra.mxu0 0.0
    %2135 = vmatprep.subr.mxu0 0.0
    %2136 = vmatpush1.xpose.msra.mxu0 0.0
    %2137 = vmatprep.subr.mxu0 0.0
    %2138 = vmatpush1.xpose.msra.mxu0 0.0
    %2139 = vmatprep.subr.mxu0 0.0
    %2140 = vmatpush1.xpose.msra.mxu0 0.0
    %2141 = vmatprep.subr.mxu0 0.0
    %2142 = vmatpush1.xpose.msra.mxu0 0.0
    %2143 = vmatprep.subr.mxu0 0.0
    %2144 = vmatpush1.xpose.msra.mxu0 0.0
    %2145 = vmatprep.subr.mxu0 0.0
    %2146 = vmatpush1.xpose.msra.mxu0 0.0
    %2147 = vmatprep.subr.mxu0 0.0
    %2148 = vmatpush1.xpose.msra.mxu0 0.0
    %2149 = vmatprep.subr.mxu0 0.0
    %2150 = vmatpush1.xpose.msra.mxu0 0.0
    %2151 = vmatprep.subr.mxu0 0.0
    %2152 = vmatpush1.xpose.msra.mxu0 0.0
    %2153 = vmatprep.subr.mxu0 0.0
    %2154 = vmatpush1.xpose.msra.mxu0 0.0
    %2155 = vmatprep.subr.mxu0 0.0
    %2156 = vmatpush1.xpose.msra.mxu0 0.0
    %2157 = vmatprep.subr.mxu0 0.0
    %2158 = vmatpush1.xpose.msra.mxu0 0.0
    %2159 = vmatprep.subr.mxu0 0.0
    %2160 = vmatpush1.xpose.msra.mxu0 0.0
    %2161 = vmatprep.subr.mxu0 0.0
    %2162 = vmatpush1.xpose.msra.mxu0 0.0
    %2163 = vmatprep.subr.mxu0 0.0
    %2164 = vmatpush1.xpose.msra.mxu0 0.0
    %2165 = vmatprep.subr.mxu0 0.0
    %2166 = vmatpush1.xpose.msra.mxu0 0.0
    %2167 = vmatprep.subr.mxu0 0.0
    %2168 = vmatpush1.xpose.msra.mxu0 0.0
    %2169 = vmatprep.subr.mxu0 0.0
    %2170 = vmatpush1.xpose.msra.mxu0 0.0
    %2171 = vmatprep.subr.mxu0 0.0
    %2172 = vmatpush1.xpose.msra.mxu0 0.0
    %2173 = vmatprep.subr.mxu0 0.0
    %2174 = vmatpush1.xpose.msra.mxu0 0.0
    %2175 = vmatprep.subr.mxu0 0.0
    %2176 = vmatpush1.xpose.msra.mxu0 0.0
    %2177 = vmatprep.subr.mxu0 0.0
    %2178 = vmatpush1.xpose.msra.mxu0 0.0
    %2179 = vmatprep.subr.mxu0 0.0
    %2180 = vmatpush1.xpose.msra.mxu0 0.0
    %2181 = vmatprep.subr.mxu0 0.0
    %2182 = vmatpush1.xpose.msra.mxu0 0.0
    %2183 = vmatprep.subr.mxu0 0.0
    %2184 = vmatpush1.xpose.msra.mxu0 0.0
    %2185 = vmatprep.mubr.f32.mxu0 0.0
    %2186 = vmatmul.mubr.f32.gmra.mrb[0].mxu0 %v2115
    %v2187 = vpop.f32.mrb[0].mxu0
    %v2188 = vadd.f32 0.0, %v2187
    %v2189 = vpop.f32.mrb[0].mxu0
    %2190 = vdwg.mxu0
    %v2191 = vmul.f32 %v2188, 0.25
    %v2192 = vsel %vm595, %v2191, -inf
    %2193 = vmax.xlane.f32.xlu0 %v2192
    %v2194 = vpop.xlane.xlu0 %2193
    %v2195 = vsub.f32 %v2191, %v2194
    %v2196 = vmul.f32 %v2195, 1.442695
    %v2197 = vpow.pop %v2196
    %v2198 = vsel %vm595, %v2197, 0.0
    %2199 = vadd.xlane.f32.xlu0 %v2198
    %v2200 = vpop.xlane.xlu0 %2199
    %v2201 = vrcp.pop %v2200
    %v2202 = vmul.f32 %v2197, %v2201
    %v2203 = vadd.f32 %v2035, %v2202
    %2206 = vrot.lane.b32.xlu0 %v378, 112
    %v2207 = vpop.permute.xlu0 %2206
    %2208 = vrot.lane.b32.xlu0 %v384, 112
    %v2209 = vpop.permute.xlu0 %2208
    %v2213 = vsel %vm514, %v2202, 0
    %2215 = vmatprep.subr.mxu0 0.0
    %2216 = vmatpush1.msra.mxu0 %v2207
    %2217 = vmatprep.subr.mxu0 0.0
    %2218 = vmatpush1.msra.mxu0 %v2209
    %2219 = vmatprep.subr.mxu0 0.0
    %2220 = vmatpush1.msra.mxu0 0.0
    %2221 = vmatprep.subr.mxu0 0.0
    %2222 = vmatpush1.msra.mxu0 0.0
    %2223 = vmatprep.subr.mxu0 0.0
    %2224 = vmatpush1.msra.mxu0 0.0
    %2225 = vmatprep.subr.mxu0 0.0
    %2226 = vmatpush1.msra.mxu0 0.0
    %2227 = vmatprep.subr.mxu0 0.0
    %2228 = vmatpush1.msra.mxu0 0.0
    %2229 = vmatprep.subr.mxu0 0.0
    %2230 = vmatpush1.msra.mxu0 0.0
    %2231 = vmatprep.subr.mxu0 0.0
    %2232 = vmatpush1.msra.mxu0 0.0
    %2233 = vmatprep.subr.mxu0 0.0
    %2234 = vmatpush1.msra.mxu0 0.0
    %2235 = vmatprep.subr.mxu0 0.0
    %2236 = vmatpush1.msra.mxu0 0.0
    %2237 = vmatprep.subr.mxu0 0.0
    %2238 = vmatpush1.msra.mxu0 0.0
    %2239 = vmatprep.subr.mxu0 0.0
    %2240 = vmatpush1.msra.mxu0 0.0
    %2241 = vmatprep.subr.mxu0 0.0
    %2242 = vmatpush1.msra.mxu0 0.0
    %2243 = vmatprep.subr.mxu0 0.0
    %2244 = vmatpush1.msra.mxu0 0.0
    %2245 = vmatprep.subr.mxu0 0.0
    %2246 = vmatpush1.msra.mxu0 0.0
    %2247 = vmatprep.subr.mxu0 0.0
    %2248 = vmatpush1.msra.mxu0 0.0
    %2249 = vmatprep.subr.mxu0 0.0
    %2250 = vmatpush1.msra.mxu0 0.0
    %2251 = vmatprep.subr.mxu0 0.0
    %2252 = vmatpush1.msra.mxu0 0.0
    %2253 = vmatprep.subr.mxu0 0.0
    %2254 = vmatpush1.msra.mxu0 0.0
    %2255 = vmatprep.subr.mxu0 0.0
    %2256 = vmatpush1.msra.mxu0 0.0
    %2257 = vmatprep.subr.mxu0 0.0
    %2258 = vmatpush1.msra.mxu0 0.0
    %2259 = vmatprep.subr.mxu0 0.0
    %2260 = vmatpush1.msra.mxu0 0.0
    %2261 = vmatprep.subr.mxu0 0.0
    %2262 = vmatpush1.msra.mxu0 0.0
    %2263 = vmatprep.subr.mxu0 0.0
    %2264 = vmatpush1.msra.mxu0 0.0
    %2265 = vmatprep.subr.mxu0 0.0
    %2266 = vmatpush1.msra.mxu0 0.0
    %2267 = vmatprep.subr.mxu0 0.0
    %2268 = vmatpush1.msra.mxu0 0.0
    %2269 = vmatprep.subr.mxu0 0.0
    %2270 = vmatpush1.msra.mxu0 0.0
    %2271 = vmatprep.subr.mxu0 0.0
    %2272 = vmatpush1.msra.mxu0 0.0
    %2273 = vmatprep.subr.mxu0 0.0
    %2274 = vmatpush1.msra.mxu0 0.0
    %2275 = vmatprep.subr.mxu0 0.0
    %2276 = vmatpush1.msra.mxu0 0.0
    %2277 = vmatprep.subr.mxu0 0.0
    %2278 = vmatpush1.msra.mxu0 0.0
    %2279 = vmatprep.mubr.f32.mxu0 0.0
    %2280 = vmatmul.mubr.f32.gmra.mrb[0].mxu0 %v2213
    %v2281 = vpop.f32.mrb[0].mxu0
    %v2282 = vadd.f32 0.0, %v2281
    %v2283 = vpop.f32.mrb[0].mxu0
    %2284 = vdwg.mxu0
    %2285 = vrot.lane.b32.xlu0 %v1944, 96
    %v2286 = vpop.permute.xlu0 %2285
    %2287 = vrot.lane.b32.xlu0 %v376, 96
    %v2288 = vpop.permute.xlu0 %2287
    %2289 = vrot.lane.b32.xlu0 %v382, 96
    %v2290 = vpop.permute.xlu0 %2289
    %v2291 = vsel %vm514, %v2286, 0
    %v2293 = vsel %vm514, %v2288, 0
    %v2295 = vsel %vm514, %v2290, 0
    %2297 = vmatprep.subr.mxu0 0.0
    %2298 = vmatpush1.xpose.msra.mxu0 %v2293
    %2299 = vmatprep.subr.mxu0 0.0
    %2300 = vmatpush1.xpose.msra.mxu0 %v2295
    %2301 = vmatprep.subr.mxu0 0.0
    %2302 = vmatpush1.xpose.msra.mxu0 0.0
    %2303 = vmatprep.subr.mxu0 0.0
    %2304 = vmatpush1.xpose.msra.mxu0 0.0
    %2305 = vmatprep.subr.mxu0 0.0
    %2306 = vmatpush1.xpose.msra.mxu0 0.0
    %2307 = vmatprep.subr.mxu0 0.0
    %2308 = vmatpush1.xpose.msra.mxu0 0.0
    %2309 = vmatprep.subr.mxu0 0.0
    %2310 = vmatpush1.xpose.msra.mxu0 0.0
    %2311 = vmatprep.subr.mxu0 0.0
    %2312 = vmatpush1.xpose.msra.mxu0 0.0
    %2313 = vmatprep.subr.mxu0 0.0
    %2314 = vmatpush1.xpose.msra.mxu0 0.0
    %2315 = vmatprep.subr.mxu0 0.0
    %2316 = vmatpush1.xpose.msra.mxu0 0.0
    %2317 = vmatprep.subr.mxu0 0.0
    %2318 = vmatpush1.xpose.msra.mxu0 0.0
    %2319 = vmatprep.subr.mxu0 0.0
    %2320 = vmatpush1.xpose.msra.mxu0 0.0
    %2321 = vmatprep.subr.mxu0 0.0
    %2322 = vmatpush1.xpose.msra.mxu0 0.0
    %2323 = vmatprep.subr.mxu0 0.0
    %2324 = vmatpush1.xpose.msra.mxu0 0.0
    %2325 = vmatprep.subr.mxu0 0.0
    %2326 = vmatpush1.xpose.msra.mxu0 0.0
    %2327 = vmatprep.subr.mxu0 0.0
    %2328 = vmatpush1.xpose.msra.mxu0 0.0
    %2329 = vmatprep.subr.mxu0 0.0
    %2330 = vmatpush1.xpose.msra.mxu0 0.0
    %2331 = vmatprep.subr.mxu0 0.0
    %2332 = vmatpush1.xpose.msra.mxu0 0.0
    %2333 = vmatprep.subr.mxu0 0.0
    %2334 = vmatpush1.xpose.msra.mxu0 0.0
    %2335 = vmatprep.subr.mxu0 0.0
    %2336 = vmatpush1.xpose.msra.mxu0 0.0
    %2337 = vmatprep.subr.mxu0 0.0
    %2338 = vmatpush1.xpose.msra.mxu0 0.0
    %2339 = vmatprep.subr.mxu0 0.0
    %2340 = vmatpush1.xpose.msra.mxu0 0.0
    %2341 = vmatprep.subr.mxu0 0.0
    %2342 = vmatpush1.xpose.msra.mxu0 0.0
    %2343 = vmatprep.subr.mxu0 0.0
    %2344 = vmatpush1.xpose.msra.mxu0 0.0
    %2345 = vmatprep.subr.mxu0 0.0
    %2346 = vmatpush1.xpose.msra.mxu0 0.0
    %2347 = vmatprep.subr.mxu0 0.0
    %2348 = vmatpush1.xpose.msra.mxu0 0.0
    %2349 = vmatprep.subr.mxu0 0.0
    %2350 = vmatpush1.xpose.msra.mxu0 0.0
    %2351 = vmatprep.subr.mxu0 0.0
    %2352 = vmatpush1.xpose.msra.mxu0 0.0
    %2353 = vmatprep.subr.mxu0 0.0
    %2354 = vmatpush1.xpose.msra.mxu0 0.0
    %2355 = vmatprep.subr.mxu0 0.0
    %2356 = vmatpush1.xpose.msra.mxu0 0.0
    %2357 = vmatprep.subr.mxu0 0.0
    %2358 = vmatpush1.xpose.msra.mxu0 0.0
    %2359 = vmatprep.subr.mxu0 0.0
    %2360 = vmatpush1.xpose.msra.mxu0 0.0
    %2361 = vmatprep.mubr.f32.mxu0 0.0
    %2362 = vmatmul.mubr.f32.gmra.mrb[0].mxu0 %v2291
    %v2363 = vpop.f32.mrb[0].mxu0
    %v2364 = vadd.f32 0.0, %v2363
    %v2365 = vpop.f32.mrb[0].mxu0
    %2366 = vdwg.mxu0
    %v2367 = vmul.f32 %v2364, 0.25
    %v2368 = vsel %vm595, %v2367, -inf
    %2369 = vmax.xlane.f32.xlu0 %v2368
    %v2370 = vpop.xlane.xlu0 %2369
    %v2371 = vsub.f32 %v2367, %v2370
    %v2372 = vmul.f32 %v2371, 1.442695
    %v2373 = vpow.pop %v2372
    %v2374 = vsel %vm595, %v2373, 0.0
    %2375 = vadd.xlane.f32.xlu0 %v2374
    %v2376 = vpop.xlane.xlu0 %2375
    %v2377 = vrcp.pop %v2376
    %v2378 = vmul.f32 %v2373, %v2377
    %v2379 = vadd.f32 %v2203, %v2378
    %2380 = vrot.lane.b32.xlu0 %v378, 96
    %v2381 = vpop.permute.xlu0 %2380
    %2382 = vrot.lane.b32.xlu0 %v384, 96
    %v2383 = vpop.permute.xlu0 %2382
    %v2387 = vsel %vm514, %v2378, 0
    %2389 = vmatprep.subr.mxu0 0.0
    %2390 = vmatpush1.msra.mxu0 %v2381
    %2391 = vmatprep.subr.mxu0 0.0
    %2392 = vmatpush1.msra.mxu0 %v2383
    %2393 = vmatprep.subr.mxu0 0.0
    %2394 = vmatpush1.msra.mxu0 0.0
    %2395 = vmatprep.subr.mxu0 0.0
    %2396 = vmatpush1.msra.mxu0 0.0
    %2397 = vmatprep.subr.mxu0 0.0
    %2398 = vmatpush1.msra.mxu0 0.0
    %2399 = vmatprep.subr.mxu0 0.0
    %2400 = vmatpush1.msra.mxu0 0.0
    %2401 = vmatprep.subr.mxu0 0.0
    %2402 = vmatpush1.msra.mxu0 0.0
    %2403 = vmatprep.subr.mxu0 0.0
    %2404 = vmatpush1.msra.mxu0 0.0
    %2405 = vmatprep.subr.mxu0 0.0
    %2406 = vmatpush1.msra.mxu0 0.0
    %2407 = vmatprep.subr.mxu0 0.0
    %2408 = vmatpush1.msra.mxu0 0.0
    %2409 = vmatprep.subr.mxu0 0.0
    %2410 = vmatpush1.msra.mxu0 0.0
    %2411 = vmatprep.subr.mxu0 0.0
    %2412 = vmatpush1.msra.mxu0 0.0
    %2413 = vmatprep.subr.mxu0 0.0
    %2414 = vmatpush1.msra.mxu0 0.0
    %2415 = vmatprep.subr.mxu0 0.0
    %2416 = vmatpush1.msra.mxu0 0.0
    %2417 = vmatprep.subr.mxu0 0.0
    %2418 = vmatpush1.msra.mxu0 0.0
    %2419 = vmatprep.subr.mxu0 0.0
    %2420 = vmatpush1.msra.mxu0 0.0
    %2421 = vmatprep.subr.mxu0 0.0
    %2422 = vmatpush1.msra.mxu0 0.0
    %2423 = vmatprep.subr.mxu0 0.0
    %2424 = vmatpush1.msra.mxu0 0.0
    %2425 = vmatprep.subr.mxu0 0.0
    %2426 = vmatpush1.msra.mxu0 0.0
    %2427 = vmatprep.subr.mxu0 0.0
    %2428 = vmatpush1.msra.mxu0 0.0
    %2429 = vmatprep.subr.mxu0 0.0
    %2430 = vmatpush1.msra.mxu0 0.0
    %2431 = vmatprep.subr.mxu0 0.0
    %2432 = vmatpush1.msra.mxu0 0.0
    %2433 = vmatprep.subr.mxu0 0.0
    %2434 = vmatpush1.msra.mxu0 0.0
    %2435 = vmatprep.subr.mxu0 0.0
    %2436 = vmatpush1.msra.mxu0 0.0
    %2437 = vmatprep.subr.mxu0 0.0
    %2438 = vmatpush1.msra.mxu0 0.0
    %2439 = vmatprep.subr.mxu0 0.0
    %2440 = vmatpush1.msra.mxu0 0.0
    %2441 = vmatprep.subr.mxu0 0.0
    %2442 = vmatpush1.msra.mxu0 0.0
    %2443 = vmatprep.subr.mxu0 0.0
    %2444 = vmatpush1.msra.mxu0 0.0
    %2445 = vmatprep.subr.mxu0 0.0
    %2446 = vmatpush1.msra.mxu0 0.0
    %2447 = vmatprep.subr.mxu0 0.0
    %2448 = vmatpush1.msra.mxu0 0.0
    %2449 = vmatprep.subr.mxu0 0.0
    %2450 = vmatpush1.msra.mxu0 0.0
    %2451 = vmatprep.subr.mxu0 0.0
    %2452 = vmatpush1.msra.mxu0 0.0
    %2453 = vmatprep.mubr.f32.mxu0 0.0
    %2454 = vmatmul.mubr.f32.gmra.mrb[0].mxu0 %v2387
    %v2455 = vpop.f32.mrb[0].mxu0
    %v2456 = vadd.f32 0.0, %v2455
    %v2457 = vpop.f32.mrb[0].mxu0
    %2458 = vdwg.mxu0
    %2459 = vrot.lane.b32.xlu0 %v1944, 80
    %v2460 = vpop.permute.xlu0 %2459
    %2461 = vrot.lane.b32.xlu0 %v376, 80
    %v2462 = vpop.permute.xlu0 %2461
    %2463 = vrot.lane.b32.xlu0 %v382, 80
    %v2464 = vpop.permute.xlu0 %2463
    %v2465 = vsel %vm514, %v2460, 0
    %v2467 = vsel %vm514, %v2462, 0
    %v2469 = vsel %vm514, %v2464, 0
    %2471 = vmatprep.subr.mxu0 0.0
    %2472 = vmatpush1.xpose.msra.mxu0 %v2467
    %2473 = vmatprep.subr.mxu0 0.0
    %2474 = vmatpush1.xpose.msra.mxu0 %v2469
    %2475 = vmatprep.subr.mxu0 0.0
    %2476 = vmatpush1.xpose.msra.mxu0 0.0
    %2477 = vmatprep.subr.mxu0 0.0
    %2478 = vmatpush1.xpose.msra.mxu0 0.0
    %2479 = vmatprep.subr.mxu0 0.0
    %2480 = vmatpush1.xpose.msra.mxu0 0.0
    %2481 = vmatprep.subr.mxu0 0.0
    %2482 = vmatpush1.xpose.msra.mxu0 0.0
    %2483 = vmatprep.subr.mxu0 0.0
    %2484 = vmatpush1.xpose.msra.mxu0 0.0
    %2485 = vmatprep.subr.mxu0 0.0
    %2486 = vmatpush1.xpose.msra.mxu0 0.0
    %2487 = vmatprep.subr.mxu0 0.0
    %2488 = vmatpush1.xpose.msra.mxu0 0.0
    %2489 = vmatprep.subr.mxu0 0.0
    %2490 = vmatpush1.xpose.msra.mxu0 0.0
    %2491 = vmatprep.subr.mxu0 0.0
    %2492 = vmatpush1.xpose.msra.mxu0 0.0
    %2493 = vmatprep.subr.mxu0 0.0
    %2494 = vmatpush1.xpose.msra.mxu0 0.0
    %2495 = vmatprep.subr.mxu0 0.0
    %2496 = vmatpush1.xpose.msra.mxu0 0.0
    %2497 = vmatprep.subr.mxu0 0.0
    %2498 = vmatpush1.xpose.msra.mxu0 0.0
    %2499 = vmatprep.subr.mxu0 0.0
    %2500 = vmatpush1.xpose.msra.mxu0 0.0
    %2501 = vmatprep.subr.mxu0 0.0
    %2502 = vmatpush1.xpose.msra.mxu0 0.0
    %2503 = vmatprep.subr.mxu0 0.0
    %2504 = vmatpush1.xpose.msra.mxu0 0.0
    %2505 = vmatprep.subr.mxu0 0.0
    %2506 = vmatpush1.xpose.msra.mxu0 0.0
    %2507 = vmatprep.subr.mxu0 0.0
    %2508 = vmatpush1.xpose.msra.mxu0 0.0
    %2509 = vmatprep.subr.mxu0 0.0
    %2510 = vmatpush1.xpose.msra.mxu0 0.0
    %2511 = vmatprep.subr.mxu0 0.0
    %2512 = vmatpush1.xpose.msra.mxu0 0.0
    %2513 = vmatprep.subr.mxu0 0.0
    %2514 = vmatpush1.xpose.msra.mxu0 0.0
    %2515 = vmatprep.subr.mxu0 0.0
    %2516 = vmatpush1.xpose.msra.mxu0 0.0
    %2517 = vmatprep.subr.mxu0 0.0
    %2518 = vmatpush1.xpose.msra.mxu0 0.0
    %2519 = vmatprep.subr.mxu0 0.0
    %2520 = vmatpush1.xpose.msra.mxu0 0.0
    %2521 = vmatprep.subr.mxu0 0.0
    %2522 = vmatpush1.xpose.msra.mxu0 0.0
    %2523 = vmatprep.subr.mxu0 0.0
    %2524 = vmatpush1.xpose.msra.mxu0 0.0
    %2525 = vmatprep.subr.mxu0 0.0
    %2526 = vmatpush1.xpose.msra.mxu0 0.0
    %2527 = vmatprep.subr.mxu0 0.0
    %2528 = vmatpush1.xpose.msra.mxu0 0.0
    %2529 = vmatprep.subr.mxu0 0.0
    %2530 = vmatpush1.xpose.msra.mxu0 0.0
    %2531 = vmatprep.subr.mxu0 0.0
    %2532 = vmatpush1.xpose.msra.mxu0 0.0
    %2533 = vmatprep.subr.mxu0 0.0
    %2534 = vmatpush1.xpose.msra.mxu0 0.0
    %2535 = vmatprep.mubr.f32.mxu0 0.0
    %2536 = vmatmul.mubr.f32.gmra.mrb[0].mxu0 %v2465
    %v2537 = vpop.f32.mrb[0].mxu0
    %v2538 = vadd.f32 0.0, %v2537
    %v2539 = vpop.f32.mrb[0].mxu0
    %2540 = vdwg.mxu0
    %v2541 = vmul.f32 %v2538, 0.25
    %v2542 = vsel %vm595, %v2541, -inf
    %2543 = vmax.xlane.f32.xlu0 %v2542
    %v2544 = vpop.xlane.xlu0 %2543
    %v2545 = vsub.f32 %v2541, %v2544
    %v2546 = vmul.f32 %v2545, 1.442695
    %v2547 = vpow.pop %v2546
    %v2548 = vsel %vm595, %v2547, 0.0
    %2549 = vadd.xlane.f32.xlu0 %v2548
    %v2550 = vpop.xlane.xlu0 %2549
    %v2551 = vrcp.pop %v2550
    %v2552 = vmul.f32 %v2547, %v2551
    %v2553 = vadd.f32 %v2379, %v2552
    %2554 = vrot.lane.b32.xlu0 %v378, 80
    %v2555 = vpop.permute.xlu0 %2554
    %2556 = vrot.lane.b32.xlu0 %v384, 80
    %v2557 = vpop.permute.xlu0 %2556
    %v2561 = vsel %vm514, %v2552, 0
    %2563 = vmatprep.subr.mxu0 0.0
    %2564 = vmatpush1.msra.mxu0 %v2555
    %2565 = vmatprep.subr.mxu0 0.0
    %2566 = vmatpush1.msra.mxu0 %v2557
    %2567 = vmatprep.subr.mxu0 0.0
    %2568 = vmatpush1.msra.mxu0 0.0
    %2569 = vmatprep.subr.mxu0 0.0
    %2570 = vmatpush1.msra.mxu0 0.0
    %2571 = vmatprep.subr.mxu0 0.0
    %2572 = vmatpush1.msra.mxu0 0.0
    %2573 = vmatprep.subr.mxu0 0.0
    %2574 = vmatpush1.msra.mxu0 0.0
    %2575 = vmatprep.subr.mxu0 0.0
    %2576 = vmatpush1.msra.mxu0 0.0
    %2577 = vmatprep.subr.mxu0 0.0
    %2578 = vmatpush1.msra.mxu0 0.0
    %2579 = vmatprep.subr.mxu0 0.0
    %2580 = vmatpush1.msra.mxu0 0.0
    %2581 = vmatprep.subr.mxu0 0.0
    %2582 = vmatpush1.msra.mxu0 0.0
    %2583 = vmatprep.subr.mxu0 0.0
    %2584 = vmatpush1.msra.mxu0 0.0
    %2585 = vmatprep.subr.mxu0 0.0
    %2586 = vmatpush1.msra.mxu0 0.0
    %2587 = vmatprep.subr.mxu0 0.0
    %2588 = vmatpush1.msra.mxu0 0.0
    %2589 = vmatprep.subr.mxu0 0.0
    %2590 = vmatpush1.msra.mxu0 0.0
    %2591 = vmatprep.subr.mxu0 0.0
    %2592 = vmatpush1.msra.mxu0 0.0
    %2593 = vmatprep.subr.mxu0 0.0
    %2594 = vmatpush1.msra.mxu0 0.0
    %2595 = vmatprep.subr.mxu0 0.0
    %2596 = vmatpush1.msra.mxu0 0.0
    %2597 = vmatprep.subr.mxu0 0.0
    %2598 = vmatpush1.msra.mxu0 0.0
    %2599 = vmatprep.subr.mxu0 0.0
    %2600 = vmatpush1.msra.mxu0 0.0
    %2601 = vmatprep.subr.mxu0 0.0
    %2602 = vmatpush1.msra.mxu0 0.0
    %2603 = vmatprep.subr.mxu0 0.0
    %2604 = vmatpush1.msra.mxu0 0.0
    %2605 = vmatprep.subr.mxu0 0.0
    %2606 = vmatpush1.msra.mxu0 0.0
    %2607 = vmatprep.subr.mxu0 0.0
    %2608 = vmatpush1.msra.mxu0 0.0
    %2609 = vmatprep.subr.mxu0 0.0
    %2610 = vmatpush1.msra.mxu0 0.0
    %2611 = vmatprep.subr.mxu0 0.0
    %2612 = vmatpush1.msra.mxu0 0.0
    %2613 = vmatprep.subr.mxu0 0.0
    %2614 = vmatpush1.msra.mxu0 0.0
    %2615 = vmatprep.subr.mxu0 0.0
    %2616 = vmatpush1.msra.mxu0 0.0
    %2617 = vmatprep.subr.mxu0 0.0
    %2618 = vmatpush1.msra.mxu0 0.0
    %2619 = vmatprep.subr.mxu0 0.0
    %2620 = vmatpush1.msra.mxu0 0.0
    %2621 = vmatprep.subr.mxu0 0.0
    %2622 = vmatpush1.msra.mxu0 0.0
    %2623 = vmatprep.subr.mxu0 0.0
    %2624 = vmatpush1.msra.mxu0 0.0
    %2625 = vmatprep.subr.mxu0 0.0
    %2626 = vmatpush1.msra.mxu0 0.0
    %2627 = vmatprep.mubr.f32.mxu0 0.0
    %2628 = vmatmul.mubr.f32.gmra.mrb[0].mxu0 %v2561
    %v2629 = vpop.f32.mrb[0].mxu0
    %v2630 = vadd.f32 0.0, %v2629
    %v2631 = vpop.f32.mrb[0].mxu0
    %2632 = vdwg.mxu0
    %2633 = vrot.lane.b32.xlu0 %v1944, 64
    %v2634 = vpop.permute.xlu0 %2633
    %2635 = vrot.lane.b32.xlu0 %v376, 64
    %v2636 = vpop.permute.xlu0 %2635
    %2637 = vrot.lane.b32.xlu0 %v382, 64
    %v2638 = vpop.permute.xlu0 %2637
    %v2639 = vsel %vm514, %v2634, 0
    %v2641 = vsel %vm514, %v2636, 0
    %v2643 = vsel %vm514, %v2638, 0
    %2645 = vmatprep.subr.mxu0 0.0
    %2646 = vmatpush1.xpose.msra.mxu0 %v2641
    %2647 = vmatprep.subr.mxu0 0.0
    %2648 = vmatpush1.xpose.msra.mxu0 %v2643
    %2649 = vmatprep.subr.mxu0 0.0
    %2650 = vmatpush1.xpose.msra.mxu0 0.0
    %2651 = vmatprep.subr.mxu0 0.0
    %2652 = vmatpush1.xpose.msra.mxu0 0.0
    %2653 = vmatprep.subr.mxu0 0.0
    %2654 = vmatpush1.xpose.msra.mxu0 0.0
    %2655 = vmatprep.subr.mxu0 0.0
    %2656 = vmatpush1.xpose.msra.mxu0 0.0
    %2657 = vmatprep.subr.mxu0 0.0
    %2658 = vmatpush1.xpose.msra.mxu0 0.0
    %2659 = vmatprep.subr.mxu0 0.0
    %2660 = vmatpush1.xpose.msra.mxu0 0.0
    %2661 = vmatprep.subr.mxu0 0.0
    %2662 = vmatpush1.xpose.msra.mxu0 0.0
    %2663 = vmatprep.subr.mxu0 0.0
    %2664 = vmatpush1.xpose.msra.mxu0 0.0
    %2665 = vmatprep.subr.mxu0 0.0
    %2666 = vmatpush1.xpose.msra.mxu0 0.0
    %2667 = vmatprep.subr.mxu0 0.0
    %2668 = vmatpush1.xpose.msra.mxu0 0.0
    %2669 = vmatprep.subr.mxu0 0.0
    %2670 = vmatpush1.xpose.msra.mxu0 0.0
    %2671 = vmatprep.subr.mxu0 0.0
    %2672 = vmatpush1.xpose.msra.mxu0 0.0
    %2673 = vmatprep.subr.mxu0 0.0
    %2674 = vmatpush1.xpose.msra.mxu0 0.0
    %2675 = vmatprep.subr.mxu0 0.0
    %2676 = vmatpush1.xpose.msra.mxu0 0.0
    %2677 = vmatprep.subr.mxu0 0.0
    %2678 = vmatpush1.xpose.msra.mxu0 0.0
    %2679 = vmatprep.subr.mxu0 0.0
    %2680 = vmatpush1.xpose.msra.mxu0 0.0
    %2681 = vmatprep.subr.mxu0 0.0
    %2682 = vmatpush1.xpose.msra.mxu0 0.0
    %2683 = vmatprep.subr.mxu0 0.0
    %2684 = vmatpush1.xpose.msra.mxu0 0.0
    %2685 = vmatprep.subr.mxu0 0.0
    %2686 = vmatpush1.xpose.msra.mxu0 0.0
    %2687 = vmatprep.subr.mxu0 0.0
    %2688 = vmatpush1.xpose.msra.mxu0 0.0
    %2689 = vmatprep.subr.mxu0 0.0
    %2690 = vmatpush1.xpose.msra.mxu0 0.0
    %2691 = vmatprep.subr.mxu0 0.0
    %2692 = vmatpush1.xpose.msra.mxu0 0.0
    %2693 = vmatprep.subr.mxu0 0.0
    %2694 = vmatpush1.xpose.msra.mxu0 0.0
    %2695 = vmatprep.subr.mxu0 0.0
    %2696 = vmatpush1.xpose.msra.mxu0 0.0
    %2697 = vmatprep.subr.mxu0 0.0
    %2698 = vmatpush1.xpose.msra.mxu0 0.0
    %2699 = vmatprep.subr.mxu0 0.0
    %2700 = vmatpush1.xpose.msra.mxu0 0.0
    %2701 = vmatprep.subr.mxu0 0.0
    %2702 = vmatpush1.xpose.msra.mxu0 0.0
    %2703 = vmatprep.subr.mxu0 0.0
    %2704 = vmatpush1.xpose.msra.mxu0 0.0
    %2705 = vmatprep.subr.mxu0 0.0
    %2706 = vmatpush1.xpose.msra.mxu0 0.0
    %2707 = vmatprep.subr.mxu0 0.0
    %2708 = vmatpush1.xpose.msra.mxu0 0.0
    %2709 = vmatprep.mubr.f32.mxu0 0.0
    %2710 = vmatmul.mubr.f32.gmra.mrb[0].mxu0 %v2639
    %v2711 = vpop.f32.mrb[0].mxu0
    %v2712 = vadd.f32 0.0, %v2711
    %v2713 = vpop.f32.mrb[0].mxu0
    %2714 = vdwg.mxu0
    %v2715 = vmul.f32 %v2712, 0.25
    %v2716 = vsel %vm595, %v2715, -inf
    %2717 = vmax.xlane.f32.xlu0 %v2716
    %v2718 = vpop.xlane.xlu0 %2717
    %v2719 = vsub.f32 %v2715, %v2718
    %v2720 = vmul.f32 %v2719, 1.442695
    %v2721 = vpow.pop %v2720
    %v2722 = vsel %vm595, %v2721, 0.0
    %2723 = vadd.xlane.f32.xlu0 %v2722
    %v2724 = vpop.xlane.xlu0 %2723
    %v2725 = vrcp.pop %v2724
    %v2726 = vmul.f32 %v2721, %v2725
    %v2727 = vadd.f32 %v2553, %v2726
    %2728 = vrot.lane.b32.xlu0 %v378, 64
    %v2729 = vpop.permute.xlu0 %2728
    %2730 = vrot.lane.b32.xlu0 %v384, 64
    %v2731 = vpop.permute.xlu0 %2730
    %v2735 = vsel %vm514, %v2726, 0
    %2737 = vmatprep.subr.mxu0 0.0
    %2738 = vmatpush1.msra.mxu0 %v2729
    %2739 = vmatprep.subr.mxu0 0.0
    %2740 = vmatpush1.msra.mxu0 %v2731
    %2741 = vmatprep.subr.mxu0 0.0
    %2742 = vmatpush1.msra.mxu0 0.0
    %2743 = vmatprep.subr.mxu0 0.0
    %2744 = vmatpush1.msra.mxu0 0.0
    %2745 = vmatprep.subr.mxu0 0.0
    %2746 = vmatpush1.msra.mxu0 0.0
    %2747 = vmatprep.subr.mxu0 0.0
    %2748 = vmatpush1.msra.mxu0 0.0
    %2749 = vmatprep.subr.mxu0 0.0
    %2750 = vmatpush1.msra.mxu0 0.0
    %2751 = vmatprep.subr.mxu0 0.0
    %2752 = vmatpush1.msra.mxu0 0.0
    %2753 = vmatprep.subr.mxu0 0.0
    %2754 = vmatpush1.msra.mxu0 0.0
    %2755 = vmatprep.subr.mxu0 0.0
    %2756 = vmatpush1.msra.mxu0 0.0
    %2757 = vmatprep.subr.mxu0 0.0
    %2758 = vmatpush1.msra.mxu0 0.0
    %2759 = vmatprep.subr.mxu0 0.0
    %2760 = vmatpush1.msra.mxu0 0.0
    %2761 = vmatprep.subr.mxu0 0.0
    %2762 = vmatpush1.msra.mxu0 0.0
    %2763 = vmatprep.subr.mxu0 0.0
    %2764 = vmatpush1.msra.mxu0 0.0
    %2765 = vmatprep.subr.mxu0 0.0
    %2766 = vmatpush1.msra.mxu0 0.0
    %2767 = vmatprep.subr.mxu0 0.0
    %2768 = vmatpush1.msra.mxu0 0.0
    %2769 = vmatprep.subr.mxu0 0.0
    %2770 = vmatpush1.msra.mxu0 0.0
    %2771 = vmatprep.subr.mxu0 0.0
    %2772 = vmatpush1.msra.mxu0 0.0
    %2773 = vmatprep.subr.mxu0 0.0
    %2774 = vmatpush1.msra.mxu0 0.0
    %2775 = vmatprep.subr.mxu0 0.0
    %2776 = vmatpush1.msra.mxu0 0.0
    %2777 = vmatprep.subr.mxu0 0.0
    %2778 = vmatpush1.msra.mxu0 0.0
    %2779 = vmatprep.subr.mxu0 0.0
    %2780 = vmatpush1.msra.mxu0 0.0
    %2781 = vmatprep.subr.mxu0 0.0
    %2782 = vmatpush1.msra.mxu0 0.0
    %2783 = vmatprep.subr.mxu0 0.0
    %2784 = vmatpush1.msra.mxu0 0.0
    %2785 = vmatprep.subr.mxu0 0.0
    %2786 = vmatpush1.msra.mxu0 0.0
    %2787 = vmatprep.subr.mxu0 0.0
    %2788 = vmatpush1.msra.mxu0 0.0
    %2789 = vmatprep.subr.mxu0 0.0
    %2790 = vmatpush1.msra.mxu0 0.0
    %2791 = vmatprep.subr.mxu0 0.0
    %2792 = vmatpush1.msra.mxu0 0.0
    %2793 = vmatprep.subr.mxu0 0.0
    %2794 = vmatpush1.msra.mxu0 0.0
    %2795 = vmatprep.subr.mxu0 0.0
    %2796 = vmatpush1.msra.mxu0 0.0
    %2797 = vmatprep.subr.mxu0 0.0
    %2798 = vmatpush1.msra.mxu0 0.0
    %2799 = vmatprep.subr.mxu0 0.0
    %2800 = vmatpush1.msra.mxu0 0.0
    %2801 = vmatprep.mubr.f32.mxu0 0.0
    %2802 = vmatmul.mubr.f32.gmra.mrb[0].mxu0 %v2735
    %v2803 = vpop.f32.mrb[0].mxu0
    %v2804 = vadd.f32 0.0, %v2803
    %v2805 = vpop.f32.mrb[0].mxu0
    %2806 = vdwg.mxu0
    %2807 = vrot.lane.b32.xlu0 %v1944, 48
    %v2808 = vpop.permute.xlu0 %2807
    %2809 = vrot.lane.b32.xlu0 %v376, 48
    %v2810 = vpop.permute.xlu0 %2809
    %2811 = vrot.lane.b32.xlu0 %v382, 48
    %v2812 = vpop.permute.xlu0 %2811
    %v2813 = vsel %vm514, %v2808, 0
    %v2815 = vsel %vm514, %v2810, 0
    %v2817 = vsel %vm514, %v2812, 0
    %2819 = vmatprep.subr.mxu0 0.0
    %2820 = vmatpush1.xpose.msra.mxu0 %v2815
    %2821 = vmatprep.subr.mxu0 0.0
    %2822 = vmatpush1.xpose.msra.mxu0 %v2817
    %2823 = vmatprep.subr.mxu0 0.0
    %2824 = vmatpush1.xpose.msra.mxu0 0.0
    %2825 = vmatprep.subr.mxu0 0.0
    %2826 = vmatpush1.xpose.msra.mxu0 0.0
    %2827 = vmatprep.subr.mxu0 0.0
    %2828 = vmatpush1.xpose.msra.mxu0 0.0
    %2829 = vmatprep.subr.mxu0 0.0
    %2830 = vmatpush1.xpose.msra.mxu0 0.0
    %2831 = vmatprep.subr.mxu0 0.0
    %2832 = vmatpush1.xpose.msra.mxu0 0.0
    %2833 = vmatprep.subr.mxu0 0.0
    %2834 = vmatpush1.xpose.msra.mxu0 0.0
    %2835 = vmatprep.subr.mxu0 0.0
    %2836 = vmatpush1.xpose.msra.mxu0 0.0
    %2837 = vmatprep.subr.mxu0 0.0
    %2838 = vmatpush1.xpose.msra.mxu0 0.0
    %2839 = vmatprep.subr.mxu0 0.0
    %2840 = vmatpush1.xpose.msra.mxu0 0.0
    %2841 = vmatprep.subr.mxu0 0.0
    %2842 = vmatpush1.xpose.msra.mxu0 0.0
    %2843 = vmatprep.subr.mxu0 0.0
    %2844 = vmatpush1.xpose.msra.mxu0 0.0
    %2845 = vmatprep.subr.mxu0 0.0
    %2846 = vmatpush1.xpose.msra.mxu0 0.0
    %2847 = vmatprep.subr.mxu0 0.0
    %2848 = vmatpush1.xpose.msra.mxu0 0.0
    %2849 = vmatprep.subr.mxu0 0.0
    %2850 = vmatpush1.xpose.msra.mxu0 0.0
    %2851 = vmatprep.subr.mxu0 0.0
    %2852 = vmatpush1.xpose.msra.mxu0 0.0
    %2853 = vmatprep.subr.mxu0 0.0
    %2854 = vmatpush1.xpose.msra.mxu0 0.0
    %2855 = vmatprep.subr.mxu0 0.0
    %2856 = vmatpush1.xpose.msra.mxu0 0.0
    %2857 = vmatprep.subr.mxu0 0.0
    %2858 = vmatpush1.xpose.msra.mxu0 0.0
    %2859 = vmatprep.subr.mxu0 0.0
    %2860 = vmatpush1.xpose.msra.mxu0 0.0
    %2861 = vmatprep.subr.mxu0 0.0
    %2862 = vmatpush1.xpose.msra.mxu0 0.0
    %2863 = vmatprep.subr.mxu0 0.0
    %2864 = vmatpush1.xpose.msra.mxu0 0.0
    %2865 = vmatprep.subr.mxu0 0.0
    %2866 = vmatpush1.xpose.msra.mxu0 0.0
    %2867 = vmatprep.subr.mxu0 0.0
    %2868 = vmatpush1.xpose.msra.mxu0 0.0
    %2869 = vmatprep.subr.mxu0 0.0
    %2870 = vmatpush1.xpose.msra.mxu0 0.0
    %2871 = vmatprep.subr.mxu0 0.0
    %2872 = vmatpush1.xpose.msra.mxu0 0.0
    %2873 = vmatprep.subr.mxu0 0.0
    %2874 = vmatpush1.xpose.msra.mxu0 0.0
    %2875 = vmatprep.subr.mxu0 0.0
    %2876 = vmatpush1.xpose.msra.mxu0 0.0
    %2877 = vmatprep.subr.mxu0 0.0
    %2878 = vmatpush1.xpose.msra.mxu0 0.0
    %2879 = vmatprep.subr.mxu0 0.0
    %2880 = vmatpush1.xpose.msra.mxu0 0.0
    %2881 = vmatprep.subr.mxu0 0.0
    %2882 = vmatpush1.xpose.msra.mxu0 0.0
    %2883 = vmatprep.mubr.f32.mxu0 0.0
    %2884 = vmatmul.mubr.f32.gmra.mrb[0].mxu0 %v2813
    %v2885 = vpop.f32.mrb[0].mxu0
    %v2886 = vadd.f32 0.0, %v2885
    %v2887 = vpop.f32.mrb[0].mxu0
    %2888 = vdwg.mxu0
    %v2889 = vmul.f32 %v2886, 0.25
    %v2890 = vsel %vm595, %v2889, -inf
    %2891 = vmax.xlane.f32.xlu0 %v2890
    %v2892 = vpop.xlane.xlu0 %2891
    %v2893 = vsub.f32 %v2889, %v2892
    %v2894 = vmul.f32 %v2893, 1.442695
    %v2895 = vpow.pop %v2894
    %v2896 = vsel %vm595, %v2895, 0.0
    %2897 = vadd.xlane.f32.xlu0 %v2896
    %v2898 = vpop.xlane.xlu0 %2897
    %v2899 = vrcp.pop %v2898
    %v2900 = vmul.f32 %v2895, %v2899
    %v2901 = vadd.f32 %v2727, %v2900
    %2902 = vrot.lane.b32.xlu0 %v378, 48
    %v2903 = vpop.permute.xlu0 %2902
    %2904 = vrot.lane.b32.xlu0 %v384, 48
    %v2905 = vpop.permute.xlu0 %2904
    %v2909 = vsel %vm514, %v2900, 0
    %2911 = vmatprep.subr.mxu0 0.0
    %2912 = vmatpush1.msra.mxu0 %v2903
    %2913 = vmatprep.subr.mxu0 0.0
    %2914 = vmatpush1.msra.mxu0 %v2905
    %2915 = vmatprep.subr.mxu0 0.0
    %2916 = vmatpush1.msra.mxu0 0.0
    %2917 = vmatprep.subr.mxu0 0.0
    %2918 = vmatpush1.msra.mxu0 0.0
    %2919 = vmatprep.subr.mxu0 0.0
    %2920 = vmatpush1.msra.mxu0 0.0
    %2921 = vmatprep.subr.mxu0 0.0
    %2922 = vmatpush1.msra.mxu0 0.0
    %2923 = vmatprep.subr.mxu0 0.0
    %2924 = vmatpush1.msra.mxu0 0.0
    %2925 = vmatprep.subr.mxu0 0.0
    %2926 = vmatpush1.msra.mxu0 0.0
    %2927 = vmatprep.subr.mxu0 0.0
    %2928 = vmatpush1.msra.mxu0 0.0
    %2929 = vmatprep.subr.mxu0 0.0
    %2930 = vmatpush1.msra.mxu0 0.0
    %2931 = vmatprep.subr.mxu0 0.0
    %2932 = vmatpush1.msra.mxu0 0.0
    %2933 = vmatprep.subr.mxu0 0.0
    %2934 = vmatpush1.msra.mxu0 0.0
    %2935 = vmatprep.subr.mxu0 0.0
    %2936 = vmatpush1.msra.mxu0 0.0
    %2937 = vmatprep.subr.mxu0 0.0
    %2938 = vmatpush1.msra.mxu0 0.0
    %2939 = vmatprep.subr.mxu0 0.0
    %2940 = vmatpush1.msra.mxu0 0.0
    %2941 = vmatprep.subr.mxu0 0.0
    %2942 = vmatpush1.msra.mxu0 0.0
    %2943 = vmatprep.subr.mxu0 0.0
    %2944 = vmatpush1.msra.mxu0 0.0
    %2945 = vmatprep.subr.mxu0 0.0
    %2946 = vmatpush1.msra.mxu0 0.0
    %2947 = vmatprep.subr.mxu0 0.0
    %2948 = vmatpush1.msra.mxu0 0.0
    %2949 = vmatprep.subr.mxu0 0.0
    %2950 = vmatpush1.msra.mxu0 0.0
    %2951 = vmatprep.subr.mxu0 0.0
    %2952 = vmatpush1.msra.mxu0 0.0
    %2953 = vmatprep.subr.mxu0 0.0
    %2954 = vmatpush1.msra.mxu0 0.0
    %2955 = vmatprep.subr.mxu0 0.0
    %2956 = vmatpush1.msra.mxu0 0.0
    %2957 = vmatprep.subr.mxu0 0.0
    %2958 = vmatpush1.msra.mxu0 0.0
    %2959 = vmatprep.subr.mxu0 0.0
    %2960 = vmatpush1.msra.mxu0 0.0
    %2961 = vmatprep.subr.mxu0 0.0
    %2962 = vmatpush1.msra.mxu0 0.0
    %2963 = vmatprep.subr.mxu0 0.0
    %2964 = vmatpush1.msra.mxu0 0.0
    %2965 = vmatprep.subr.mxu0 0.0
    %2966 = vmatpush1.msra.mxu0 0.0
    %2967 = vmatprep.subr.mxu0 0.0
    %2968 = vmatpush1.msra.mxu0 0.0
    %2969 = vmatprep.subr.mxu0 0.0
    %2970 = vmatpush1.msra.mxu0 0.0
    %2971 = vmatprep.subr.mxu0 0.0
    %2972 = vmatpush1.msra.mxu0 0.0
    %2973 = vmatprep.subr.mxu0 0.0
    %2974 = vmatpush1.msra.mxu0 0.0
    %2975 = vmatprep.mubr.f32.mxu0 0.0
    %2976 = vmatmul.mubr.f32.gmra.mrb[0].mxu0 %v2909
    %v2977 = vpop.f32.mrb[0].mxu0
    %v2978 = vadd.f32 0.0, %v2977
    %v2979 = vpop.f32.mrb[0].mxu0
    %2980 = vdwg.mxu0
    %2981 = vrot.lane.b32.xlu0 %v1944, 32
    %v2982 = vpop.permute.xlu0 %2981
    %2983 = vrot.lane.b32.xlu0 %v376, 32
    %v2984 = vpop.permute.xlu0 %2983
    %2985 = vrot.lane.b32.xlu0 %v382, 32
    %v2986 = vpop.permute.xlu0 %2985
    %v2987 = vsel %vm514, %v2982, 0
    %v2989 = vsel %vm514, %v2984, 0
    %v2991 = vsel %vm514, %v2986, 0
    %2993 = vmatprep.subr.mxu0 0.0
    %2994 = vmatpush1.xpose.msra.mxu0 %v2989
    %2995 = vmatprep.subr.mxu0 0.0
    %2996 = vmatpush1.xpose.msra.mxu0 %v2991
    %2997 = vmatprep.subr.mxu0 0.0
    %2998 = vmatpush1.xpose.msra.mxu0 0.0
    %2999 = vmatprep.subr.mxu0 0.0
    %3000 = vmatpush1.xpose.msra.mxu0 0.0
    %3001 = vmatprep.subr.mxu0 0.0
    %3002 = vmatpush1.xpose.msra.mxu0 0.0
    %3003 = vmatprep.subr.mxu0 0.0
    %3004 = vmatpush1.xpose.msra.mxu0 0.0
    %3005 = vmatprep.subr.mxu0 0.0
    %3006 = vmatpush1.xpose.msra.mxu0 0.0
    %3007 = vmatprep.subr.mxu0 0.0
    %3008 = vmatpush1.xpose.msra.mxu0 0.0
    %3009 = vmatprep.subr.mxu0 0.0
    %3010 = vmatpush1.xpose.msra.mxu0 0.0
    %3011 = vmatprep.subr.mxu0 0.0
    %3012 = vmatpush1.xpose.msra.mxu0 0.0
    %3013 = vmatprep.subr.mxu0 0.0
    %3014 = vmatpush1.xpose.msra.mxu0 0.0
    %3015 = vmatprep.subr.mxu0 0.0
    %3016 = vmatpush1.xpose.msra.mxu0 0.0
    %3017 = vmatprep.subr.mxu0 0.0
    %3018 = vmatpush1.xpose.msra.mxu0 0.0
    %3019 = vmatprep.subr.mxu0 0.0
    %3020 = vmatpush1.xpose.msra.mxu0 0.0
    %3021 = vmatprep.subr.mxu0 0.0
    %3022 = vmatpush1.xpose.msra.mxu0 0.0
    %3023 = vmatprep.subr.mxu0 0.0
    %3024 = vmatpush1.xpose.msra.mxu0 0.0
    %3025 = vmatprep.subr.mxu0 0.0
    %3026 = vmatpush1.xpose.msra.mxu0 0.0
    %3027 = vmatprep.subr.mxu0 0.0
    %3028 = vmatpush1.xpose.msra.mxu0 0.0
    %3029 = vmatprep.subr.mxu0 0.0
    %3030 = vmatpush1.xpose.msra.mxu0 0.0
    %3031 = vmatprep.subr.mxu0 0.0
    %3032 = vmatpush1.xpose.msra.mxu0 0.0
    %3033 = vmatprep.subr.mxu0 0.0
    %3034 = vmatpush1.xpose.msra.mxu0 0.0
    %3035 = vmatprep.subr.mxu0 0.0
    %3036 = vmatpush1.xpose.msra.mxu0 0.0
    %3037 = vmatprep.subr.mxu0 0.0
    %3038 = vmatpush1.xpose.msra.mxu0 0.0
    %3039 = vmatprep.subr.mxu0 0.0
    %3040 = vmatpush1.xpose.msra.mxu0 0.0
    %3041 = vmatprep.subr.mxu0 0.0
    %3042 = vmatpush1.xpose.msra.mxu0 0.0
    %3043 = vmatprep.subr.mxu0 0.0
    %3044 = vmatpush1.xpose.msra.mxu0 0.0
    %3045 = vmatprep.subr.mxu0 0.0
    %3046 = vmatpush1.xpose.msra.mxu0 0.0
    %3047 = vmatprep.subr.mxu0 0.0
    %3048 = vmatpush1.xpose.msra.mxu0 0.0
    %3049 = vmatprep.subr.mxu0 0.0
    %3050 = vmatpush1.xpose.msra.mxu0 0.0
    %3051 = vmatprep.subr.mxu0 0.0
    %3052 = vmatpush1.xpose.msra.mxu0 0.0
    %3053 = vmatprep.subr.mxu0 0.0
    %3054 = vmatpush1.xpose.msra.mxu0 0.0
    %3055 = vmatprep.subr.mxu0 0.0
    %3056 = vmatpush1.xpose.msra.mxu0 0.0
    %3057 = vmatprep.mubr.f32.mxu0 0.0
    %3058 = vmatmul.mubr.f32.gmra.mrb[0].mxu0 %v2987
    %v3059 = vpop.f32.mrb[0].mxu0
    %v3060 = vadd.f32 0.0, %v3059
    %v3061 = vpop.f32.mrb[0].mxu0
    %3062 = vdwg.mxu0
    %v3063 = vmul.f32 %v3060, 0.25
    %v3064 = vsel %vm595, %v3063, -inf
    %3065 = vmax.xlane.f32.xlu0 %v3064
    %v3066 = vpop.xlane.xlu0 %3065
    %v3067 = vsub.f32 %v3063, %v3066
    %v3068 = vmul.f32 %v3067, 1.442695
    %v3069 = vpow.pop %v3068
    %v3070 = vsel %vm595, %v3069, 0.0
    %3071 = vadd.xlane.f32.xlu0 %v3070
    %v3072 = vpop.xlane.xlu0 %3071
    %v3073 = vrcp.pop %v3072
    %v3074 = vmul.f32 %v3069, %v3073
    %v3075 = vadd.f32 %v2901, %v3074
    %3076 = vrot.lane.b32.xlu0 %v378, 32
    %v3077 = vpop.permute.xlu0 %3076
    %3078 = vrot.lane.b32.xlu0 %v384, 32
    %v3079 = vpop.permute.xlu0 %3078
    %v3083 = vsel %vm514, %v3074, 0
    %3085 = vmatprep.subr.mxu0 0.0
    %3086 = vmatpush1.msra.mxu0 %v3077
    %3087 = vmatprep.subr.mxu0 0.0
    %3088 = vmatpush1.msra.mxu0 %v3079
    %3089 = vmatprep.subr.mxu0 0.0
    %3090 = vmatpush1.msra.mxu0 0.0
    %3091 = vmatprep.subr.mxu0 0.0
    %3092 = vmatpush1.msra.mxu0 0.0
    %3093 = vmatprep.subr.mxu0 0.0
    %3094 = vmatpush1.msra.mxu0 0.0
    %3095 = vmatprep.subr.mxu0 0.0
    %3096 = vmatpush1.msra.mxu0 0.0
    %3097 = vmatprep.subr.mxu0 0.0
    %3098 = vmatpush1.msra.mxu0 0.0
    %3099 = vmatprep.subr.mxu0 0.0
    %3100 = vmatpush1.msra.mxu0 0.0
    %3101 = vmatprep.subr.mxu0 0.0
    %3102 = vmatpush1.msra.mxu0 0.0
    %3103 = vmatprep.subr.mxu0 0.0
    %3104 = vmatpush1.msra.mxu0 0.0
    %3105 = vmatprep.subr.mxu0 0.0
    %3106 = vmatpush1.msra.mxu0 0.0
    %3107 = vmatprep.subr.mxu0 0.0
    %3108 = vmatpush1.msra.mxu0 0.0
    %3109 = vmatprep.subr.mxu0 0.0
    %3110 = vmatpush1.msra.mxu0 0.0
    %3111 = vmatprep.subr.mxu0 0.0
    %3112 = vmatpush1.msra.mxu0 0.0
    %3113 = vmatprep.subr.mxu0 0.0
    %3114 = vmatpush1.msra.mxu0 0.0
    %3115 = vmatprep.subr.mxu0 0.0
    %3116 = vmatpush1.msra.mxu0 0.0
    %3117 = vmatprep.subr.mxu0 0.0
    %3118 = vmatpush1.msra.mxu0 0.0
    %3119 = vmatprep.subr.mxu0 0.0
    %3120 = vmatpush1.msra.mxu0 0.0
    %3121 = vmatprep.subr.mxu0 0.0
    %3122 = vmatpush1.msra.mxu0 0.0
    %3123 = vmatprep.subr.mxu0 0.0
    %3124 = vmatpush1.msra.mxu0 0.0
    %3125 = vmatprep.subr.mxu0 0.0
    %3126 = vmatpush1.msra.mxu0 0.0
    %3127 = vmatprep.subr.mxu0 0.0
    %3128 = vmatpush1.msra.mxu0 0.0
    %3129 = vmatprep.subr.mxu0 0.0
    %3130 = vmatpush1.msra.mxu0 0.0
    %3131 = vmatprep.subr.mxu0 0.0
    %3132 = vmatpush1.msra.mxu0 0.0
    %3133 = vmatprep.subr.mxu0 0.0
    %3134 = vmatpush1.msra.mxu0 0.0
    %3135 = vmatprep.subr.mxu0 0.0
    %3136 = vmatpush1.msra.mxu0 0.0
    %3137 = vmatprep.subr.mxu0 0.0
    %3138 = vmatpush1.msra.mxu0 0.0
    %3139 = vmatprep.subr.mxu0 0.0
    %3140 = vmatpush1.msra.mxu0 0.0
    %3141 = vmatprep.subr.mxu0 0.0
    %3142 = vmatpush1.msra.mxu0 0.0
    %3143 = vmatprep.subr.mxu0 0.0
    %3144 = vmatpush1.msra.mxu0 0.0
    %3145 = vmatprep.subr.mxu0 0.0
    %3146 = vmatpush1.msra.mxu0 0.0
    %3147 = vmatprep.subr.mxu0 0.0
    %3148 = vmatpush1.msra.mxu0 0.0
    %3149 = vmatprep.mubr.f32.mxu0 0.0
    %3150 = vmatmul.mubr.f32.gmra.mrb[0].mxu0 %v3083
    %v3151 = vpop.f32.mrb[0].mxu0
    %v3152 = vadd.f32 0.0, %v3151
    %v3153 = vpop.f32.mrb[0].mxu0
    %3154 = vdwg.mxu0
    %3155 = vrot.lane.b32.xlu0 %v1944, 16
    %v3156 = vpop.permute.xlu0 %3155
    %3157 = vrot.lane.b32.xlu0 %v376, 16
    %v3158 = vpop.permute.xlu0 %3157
    %3159 = vrot.lane.b32.xlu0 %v382, 16
    %v3160 = vpop.permute.xlu0 %3159
    %v3161 = vsel %vm514, %v3156, 0
    %v3163 = vsel %vm514, %v3158, 0
    %v3165 = vsel %vm514, %v3160, 0
    %3167 = vmatprep.subr.mxu0 0.0
    %3168 = vmatpush1.xpose.msra.mxu0 %v3163
    %3169 = vmatprep.subr.mxu0 0.0
    %3170 = vmatpush1.xpose.msra.mxu0 %v3165
    %3171 = vmatprep.subr.mxu0 0.0
    %3172 = vmatpush1.xpose.msra.mxu0 0.0
    %3173 = vmatprep.subr.mxu0 0.0
    %3174 = vmatpush1.xpose.msra.mxu0 0.0
    %3175 = vmatprep.subr.mxu0 0.0
    %3176 = vmatpush1.xpose.msra.mxu0 0.0
    %3177 = vmatprep.subr.mxu0 0.0
    %3178 = vmatpush1.xpose.msra.mxu0 0.0
    %3179 = vmatprep.subr.mxu0 0.0
    %3180 = vmatpush1.xpose.msra.mxu0 0.0
    %3181 = vmatprep.subr.mxu0 0.0
    %3182 = vmatpush1.xpose.msra.mxu0 0.0
    %3183 = vmatprep.subr.mxu0 0.0
    %3184 = vmatpush1.xpose.msra.mxu0 0.0
    %3185 = vmatprep.subr.mxu0 0.0
    %3186 = vmatpush1.xpose.msra.mxu0 0.0
    %3187 = vmatprep.subr.mxu0 0.0
    %3188 = vmatpush1.xpose.msra.mxu0 0.0
    %3189 = vmatprep.subr.mxu0 0.0
    %3190 = vmatpush1.xpose.msra.mxu0 0.0
    %3191 = vmatprep.subr.mxu0 0.0
    %3192 = vmatpush1.xpose.msra.mxu0 0.0
    %3193 = vmatprep.subr.mxu0 0.0
    %3194 = vmatpush1.xpose.msra.mxu0 0.0
    %3195 = vmatprep.subr.mxu0 0.0
    %3196 = vmatpush1.xpose.msra.mxu0 0.0
    %3197 = vmatprep.subr.mxu0 0.0
    %3198 = vmatpush1.xpose.msra.mxu0 0.0
    %3199 = vmatprep.subr.mxu0 0.0
    %3200 = vmatpush1.xpose.msra.mxu0 0.0
    %3201 = vmatprep.subr.mxu0 0.0
    %3202 = vmatpush1.xpose.msra.mxu0 0.0
    %3203 = vmatprep.subr.mxu0 0.0
    %3204 = vmatpush1.xpose.msra.mxu0 0.0
    %3205 = vmatprep.subr.mxu0 0.0
    %3206 = vmatpush1.xpose.msra.mxu0 0.0
    %3207 = vmatprep.subr.mxu0 0.0
    %3208 = vmatpush1.xpose.msra.mxu0 0.0
    %3209 = vmatprep.subr.mxu0 0.0
    %3210 = vmatpush1.xpose.msra.mxu0 0.0
    %3211 = vmatprep.subr.mxu0 0.0
    %3212 = vmatpush1.xpose.msra.mxu0 0.0
    %3213 = vmatprep.subr.mxu0 0.0
    %3214 = vmatpush1.xpose.msra.mxu0 0.0
    %3215 = vmatprep.subr.mxu0 0.0
    %3216 = vmatpush1.xpose.msra.mxu0 0.0
    %3217 = vmatprep.subr.mxu0 0.0
    %3218 = vmatpush1.xpose.msra.mxu0 0.0
    %3219 = vmatprep.subr.mxu0 0.0
    %3220 = vmatpush1.xpose.msra.mxu0 0.0
    %3221 = vmatprep.subr.mxu0 0.0
    %3222 = vmatpush1.xpose.msra.mxu0 0.0
    %3223 = vmatprep.subr.mxu0 0.0
    %3224 = vmatpush1.xpose.msra.mxu0 0.0
    %3225 = vmatprep.subr.mxu0 0.0
    %3226 = vmatpush1.xpose.msra.mxu0 0.0
    %3227 = vmatprep.subr.mxu0 0.0
    %3228 = vmatpush1.xpose.msra.mxu0 0.0
    %3229 = vmatprep.subr.mxu0 0.0
    %3230 = vmatpush1.xpose.msra.mxu0 0.0
    %3231 = vmatprep.mubr.f32.mxu0 0.0
    %3232 = vmatmul.mubr.f32.gmra.mrb[0].mxu0 %v3161
    %v3233 = vpop.f32.mrb[0].mxu0
    %v3234 = vadd.f32 0.0, %v3233
    %v3235 = vpop.f32.mrb[0].mxu0
    %3236 = vdwg.mxu0
    %v3237 = vmul.f32 %v3234, 0.25
    %v3238 = vsel %vm595, %v3237, -inf
    %3239 = vmax.xlane.f32.xlu0 %v3238
    %v3240 = vpop.xlane.xlu0 %3239
    %v3241 = vsub.f32 %v3237, %v3240
    %v3242 = vmul.f32 %v3241, 1.442695
    %v3243 = vpow.pop %v3242
    %v3244 = vsel %vm595, %v3243, 0.0
    %3245 = vadd.xlane.f32.xlu0 %v3244
    %v3246 = vpop.xlane.xlu0 %3245
    %v3247 = vrcp.pop %v3246
    %v3248 = vmul.f32 %v3243, %v3247
    %v3249 = vadd.f32 %v3075, %v3248
    %3250 = vrot.lane.b32.xlu0 %v378, 16
    %v3251 = vpop.permute.xlu0 %3250
    %3252 = vrot.lane.b32.xlu0 %v384, 16
    %v3253 = vpop.permute.xlu0 %3252
    %v3257 = vsel %vm514, %v3248, 0
    %3259 = vmatprep.subr.mxu0 0.0
    %3260 = vmatpush1.msra.mxu0 %v3251
    %3261 = vmatprep.subr.mxu0 0.0
    %3262 = vmatpush1.msra.mxu0 %v3253
    %3263 = vmatprep.subr.mxu0 0.0
    %3264 = vmatpush1.msra.mxu0 0.0
    %3265 = vmatprep.subr.mxu0 0.0
    %3266 = vmatpush1.msra.mxu0 0.0
    %3267 = vmatprep.subr.mxu0 0.0
    %3268 = vmatpush1.msra.mxu0 0.0
    %3269 = vmatprep.subr.mxu0 0.0
    %3270 = vmatpush1.msra.mxu0 0.0
    %3271 = vmatprep.subr.mxu0 0.0
    %3272 = vmatpush1.msra.mxu0 0.0
    %3273 = vmatprep.subr.mxu0 0.0
    %3274 = vmatpush1.msra.mxu0 0.0
    %3275 = vmatprep.subr.mxu0 0.0
    %3276 = vmatpush1.msra.mxu0 0.0
    %3277 = vmatprep.subr.mxu0 0.0
    %3278 = vmatpush1.msra.mxu0 0.0
    %3279 = vmatprep.subr.mxu0 0.0
    %3280 = vmatpush1.msra.mxu0 0.0
    %3281 = vmatprep.subr.mxu0 0.0
    %3282 = vmatpush1.msra.mxu0 0.0
    %3283 = vmatprep.subr.mxu0 0.0
    %3284 = vmatpush1.msra.mxu0 0.0
    %3285 = vmatprep.subr.mxu0 0.0
    %3286 = vmatpush1.msra.mxu0 0.0
    %3287 = vmatprep.subr.mxu0 0.0
    %3288 = vmatpush1.msra.mxu0 0.0
    %3289 = vmatprep.subr.mxu0 0.0
    %3290 = vmatpush1.msra.mxu0 0.0
    %3291 = vmatprep.subr.mxu0 0.0
    %3292 = vmatpush1.msra.mxu0 0.0
    %3293 = vmatprep.subr.mxu0 0.0
    %3294 = vmatpush1.msra.mxu0 0.0
    %3295 = vmatprep.subr.mxu0 0.0
    %3296 = vmatpush1.msra.mxu0 0.0
    %3297 = vmatprep.subr.mxu0 0.0
    %3298 = vmatpush1.msra.mxu0 0.0
    %3299 = vmatprep.subr.mxu0 0.0
    %3300 = vmatpush1.msra.mxu0 0.0
    %3301 = vmatprep.subr.mxu0 0.0
    %3302 = vmatpush1.msra.mxu0 0.0
    %3303 = vmatprep.subr.mxu0 0.0
    %3304 = vmatpush1.msra.mxu0 0.0
    %3305 = vmatprep.subr.mxu0 0.0
    %3306 = vmatpush1.msra.mxu0 0.0
    %3307 = vmatprep.subr.mxu0 0.0
    %3308 = vmatpush1.msra.mxu0 0.0
    %3309 = vmatprep.subr.mxu0 0.0
    %3310 = vmatpush1.msra.mxu0 0.0
    %3311 = vmatprep.subr.mxu0 0.0
    %3312 = vmatpush1.msra.mxu0 0.0
    %3313 = vmatprep.subr.mxu0 0.0
    %3314 = vmatpush1.msra.mxu0 0.0
    %3315 = vmatprep.subr.mxu0 0.0
    %3316 = vmatpush1.msra.mxu0 0.0
    %3317 = vmatprep.subr.mxu0 0.0
    %3318 = vmatpush1.msra.mxu0 0.0
    %3319 = vmatprep.subr.mxu0 0.0
    %3320 = vmatpush1.msra.mxu0 0.0
    %3321 = vmatprep.subr.mxu0 0.0
    %3322 = vmatpush1.msra.mxu0 0.0
    %3323 = vmatprep.mubr.f32.mxu0 0.0
    %3324 = vmatmul.mubr.f32.gmra.mrb[0].mxu0 %v3257
    %v3325 = vpop.f32.mrb[0].mxu0
    %v3326 = vadd.f32 0.0, %v3325
    %v3327 = vpop.f32.mrb[0].mxu0
    %3328 = vdwg.mxu0
    %v3329 = vmul.f32 %v3249, 0.125
    %s3330 = scalar_lea.vmem [#allocation17], 4
    %3331 = vst.msk [vmem:[%s3330] sm:$0xf] %vm595, %v3329
    %3333 = vrot.lane.b32.xlu0 %v2282, 16
    %v3334 = vpop.permute.xlu0 %3333
    %3337 = vrot.lane.b32.xlu0 %v2456, 32
    %v3338 = vpop.permute.xlu0 %3337
    %3341 = vrot.lane.b32.xlu0 %v2630, 48
    %v3342 = vpop.permute.xlu0 %3341
    %3345 = vrot.lane.b32.xlu0 %v2804, 64
    %v3346 = vpop.permute.xlu0 %3345
    %3349 = vrot.lane.b32.xlu0 %v2978, 80
    %v3350 = vpop.permute.xlu0 %3349
    %3353 = vrot.lane.b32.xlu0 %v3152, 96
    %v3354 = vpop.permute.xlu0 %3353
    %3357 = vrot.lane.b32.xlu0 %v3326, 112
    %v3358 = vpop.permute.xlu0 %3357
    %v3360 = vsel %vm514, %v2106, %v3334
    %v3361 = vsel %vm1932, %v3360, %v3338
    %v3362 = vsel %vm1934, %v3361, %v3342
    %v3363 = vsel %vm1936, %v3362, %v3346
    %v3364 = vsel %vm1938, %v3363, %v3350
    %v3365 = vsel %vm1940, %v3364, %v3354
    %v3366 = vsel %vm1942, %v3365, %v3358
    %v3368 = vrot.slane %v3366, 4
    %v3370 = vsel %vm413, %v1943, %v3368
    %v3371 = vld [vmem:[#allocation11] sm:$0xff]
    %v3372 = vld [vmem:[#allocation11 + $0x8] sm:$0xff]
    %v3373 = vld [vmem:[#allocation11 + $0x10] sm:$0xff]
    %v3374 = vld [vmem:[#allocation11 + $0x18] sm:$0xff]
    %v3375 = vld [vmem:[#allocation11 + $0x20] sm:$0xff]
    %v3376 = vld [vmem:[#allocation11 + $0x28] sm:$0xff]
    %v3377 = vld [vmem:[#allocation11 + $0x30] sm:$0xff]
    %v3378 = vld [vmem:[#allocation11 + $0x38] sm:$0xff]
    %v3379 = vld [vmem:[#allocation11 + $0x40] sm:$0xff]
    %v3380 = vld [vmem:[#allocation11 + $0x48] sm:$0xff]
    %v3381 = vld [vmem:[#allocation11 + $0x50] sm:$0xff]
    %v3382 = vld [vmem:[#allocation11 + $0x58] sm:$0xff]
    %v3383 = vld [vmem:[#allocation11 + $0x60] sm:$0xff]
    %v3384 = vld [vmem:[#allocation11 + $0x68] sm:$0xff]
    %v3385 = vld [vmem:[#allocation11 + $0x70] sm:$0xff]
    %v3386 = vld [vmem:[#allocation11 + $0x78] sm:$0xff]
    %v3387 = vld [vmem:[#allocation13] sm:$0x1]
    %v3389 = vlaneseq
    %v3390 = vshrl.u32 %v3389, 7
    %v3391 = vsub.s32 0, %v3390
    %v3392 = vrot.slane %v3387, %v3391
    %3394 = vmatprep.subr.mxu0 0.0
    %3395 = vmatpush1.msra.mxu0 %v3371
    %3396 = vmatprep.subr.mxu0 0.0
    %3397 = vmatpush1.msra.mxu0 %v3372
    %3398 = vmatprep.subr.mxu0 0.0
    %3399 = vmatpush1.msra.mxu0 %v3373
    %3400 = vmatprep.subr.mxu0 0.0
    %3401 = vmatpush1.msra.mxu0 %v3374
    %3402 = vmatprep.subr.mxu0 0.0
    %3403 = vmatpush1.msra.mxu0 %v3375
    %3404 = vmatprep.subr.mxu0 0.0
    %3405 = vmatpush1.msra.mxu0 %v3376
    %3406 = vmatprep.subr.mxu0 0.0
    %3407 = vmatpush1.msra.mxu0 %v3377
    %3408 = vmatprep.subr.mxu0 0.0
    %3409 = vmatpush1.msra.mxu0 %v3378
    %3410 = vmatprep.subr.mxu0 0.0
    %3411 = vmatpush1.msra.mxu0 %v3379
    %3412 = vmatprep.subr.mxu0 0.0
    %3413 = vmatpush1.msra.mxu0 %v3380
    %3414 = vmatprep.subr.mxu0 0.0
    %3415 = vmatpush1.msra.mxu0 %v3381
    %3416 = vmatprep.subr.mxu0 0.0
    %3417 = vmatpush1.msra.mxu0 %v3382
    %3418 = vmatprep.subr.mxu0 0.0
    %3419 = vmatpush1.msra.mxu0 %v3383
    %3420 = vmatprep.subr.mxu0 0.0
    %3421 = vmatpush1.msra.mxu0 %v3384
    %3422 = vmatprep.subr.mxu0 0.0
    %3423 = vmatpush1.msra.mxu0 %v3385
    %3424 = vmatprep.subr.mxu0 0.0
    %3425 = vmatpush1.msra.mxu0 %v3386
    %3426 = vmatprep.subr.mxu0 0.0
    %3427 = vmatpush1.msra.mxu0 0.0
    %3428 = vmatprep.subr.mxu0 0.0
    %3429 = vmatpush1.msra.mxu0 0.0
    %3430 = vmatprep.subr.mxu0 0.0
    %3431 = vmatpush1.msra.mxu0 0.0
    %3432 = vmatprep.subr.mxu0 0.0
    %3433 = vmatpush1.msra.mxu0 0.0
    %3434 = vmatprep.subr.mxu0 0.0
    %3435 = vmatpush1.msra.mxu0 0.0
    %3436 = vmatprep.subr.mxu0 0.0
    %3437 = vmatpush1.msra.mxu0 0.0
    %3438 = vmatprep.subr.mxu0 0.0
    %3439 = vmatpush1.msra.mxu0 0.0
    %3440 = vmatprep.subr.mxu0 0.0
    %3441 = vmatpush1.msra.mxu0 0.0
    %3442 = vmatprep.subr.mxu0 0.0
    %3443 = vmatpush1.msra.mxu0 0.0
    %3444 = vmatprep.subr.mxu0 0.0
    %3445 = vmatpush1.msra.mxu0 0.0
    %3446 = vmatprep.subr.mxu0 0.0
    %3447 = vmatpush1.msra.mxu0 0.0
    %3448 = vmatprep.subr.mxu0 0.0
    %3449 = vmatpush1.msra.mxu0 0.0
    %3450 = vmatprep.subr.mxu0 0.0
    %3451 = vmatpush1.msra.mxu0 0.0
    %3452 = vmatprep.subr.mxu0 0.0
    %3453 = vmatpush1.msra.mxu0 0.0
    %3454 = vmatprep.subr.mxu0 0.0
    %3455 = vmatpush1.msra.mxu0 0.0
    %3456 = vmatprep.subr.mxu0 0.0
    %3457 = vmatpush1.msra.mxu0 0.0
    %3458 = vmatprep.mubr.f32.mxu0 0.0
    %3459 = vmatmul.mubr.f32.gmra.mrb[0].mxu0 %v3370
    %v3460 = vpop.f32.mrb[0].mxu0
    %v3461 = vadd.f32 %v3392, %v3460
    %v3462 = vpop.f32.mrb[0].mxu0
    %3463 = vdwg.mxu0
    %v3464 = vsel %vm413, %v3461, 0.0
    %v3465 = vrot.slane %v3464, 4
    %v3466 = vadd.f32 %v3464, %v3465
    %v3467 = vrot.slane %v3466, 2
    %v3468 = vadd.f32 %v3466, %v3467
    %v3469 = vrot.slane %v3468, 1
    %v3470 = vadd.f32 %v3468, %v3469
    %v3471 = vrcp.pop 4.0
    %v3472 = vmul.f32 %v3470, %v3471
    %v3474 = vrot.slane %v3461, 4
    %v3476 = vsel %vm413, %v3474, 0.0
    %v3477 = vrot.slane %v3476, 4
    %v3478 = vadd.f32 %v3476, %v3477
    %v3479 = vrot.slane %v3478, 2
    %v3480 = vadd.f32 %v3478, %v3479
    %v3481 = vrot.slane %v3480, 1
    %v3482 = vadd.f32 %v3480, %v3481
    %v3483 = vmul.f32 %v3482, %v3471
    %v3484 = vsel %vm408, %v3472, %v3483
    %v3485 = vld [vmem:[%s11] sm:$0xff]
    %v3486 = vld [vmem:[%s11 + $0x8] sm:$0xff]
    %v3487 = vld [vmem:[%s11 + $0x10] sm:$0xff]
    %v3488 = vld [vmem:[%s11 + $0x18] sm:$0xff]
    %v3489 = vld [vmem:[%s11 + $0x20] sm:$0xff]
    %v3490 = vld [vmem:[%s11 + $0x28] sm:$0xff]
    %v3491 = vld [vmem:[%s11 + $0x30] sm:$0xff]
    %v3492 = vld [vmem:[%s11 + $0x38] sm:$0xff]
    %v3493 = vld [vmem:[%s11 + $0x40] sm:$0xff]
    %v3494 = vld [vmem:[%s11 + $0x48] sm:$0xff]
    %v3495 = vld [vmem:[%s11 + $0x50] sm:$0xff]
    %v3496 = vld [vmem:[%s11 + $0x58] sm:$0xff]
    %v3497 = vld [vmem:[%s11 + $0x60] sm:$0xff]
    %v3498 = vld [vmem:[%s11 + $0x68] sm:$0xff]
    %v3499 = vld [vmem:[%s11 + $0x70] sm:$0xff]
    %v3500 = vld [vmem:[%s11 + $0x78] sm:$0xff]
    %v3501 = vld [vmem:[#allocation14] sm:$0x1]
    %v3503 = vlaneseq
    %v3504 = vshrl.u32 %v3503, 7
    %v3505 = vsub.s32 0, %v3504
    %v3506 = vrot.slane %v3501, %v3505
    %3508 = vmatprep.subr.mxu0 0.0
    %3509 = vmatpush1.msra.mxu0 %v3485
    %3510 = vmatprep.subr.mxu0 0.0
    %3511 = vmatpush1.msra.mxu0 %v3486
    %3512 = vmatprep.subr.mxu0 0.0
    %3513 = vmatpush1.msra.mxu0 %v3487
    %3514 = vmatprep.subr.mxu0 0.0
    %3515 = vmatpush1.msra.mxu0 %v3488
    %3516 = vmatprep.subr.mxu0 0.0
    %3517 = vmatpush1.msra.mxu0 %v3489
    %3518 = vmatprep.subr.mxu0 0.0
    %3519 = vmatpush1.msra.mxu0 %v3490
    %3520 = vmatprep.subr.mxu0 0.0
    %3521 = vmatpush1.msra.mxu0 %v3491
    %3522 = vmatprep.subr.mxu0 0.0
    %3523 = vmatpush1.msra.mxu0 %v3492
    %3524 = vmatprep.subr.mxu0 0.0
    %3525 = vmatpush1.msra.mxu0 %v3493
    %3526 = vmatprep.subr.mxu0 0.0
    %3527 = vmatpush1.msra.mxu0 %v3494
    %3528 = vmatprep.subr.mxu0 0.0
    %3529 = vmatpush1.msra.mxu0 %v3495
    %3530 = vmatprep.subr.mxu0 0.0
    %3531 = vmatpush1.msra.mxu0 %v3496
    %3532 = vmatprep.subr.mxu0 0.0
    %3533 = vmatpush1.msra.mxu0 %v3497
    %3534 = vmatprep.subr.mxu0 0.0
    %3535 = vmatpush1.msra.mxu0 %v3498
    %3536 = vmatprep.subr.mxu0 0.0
    %3537 = vmatpush1.msra.mxu0 %v3499
    %3538 = vmatprep.subr.mxu0 0.0
    %3539 = vmatpush1.msra.mxu0 %v3500
    %3540 = vmatprep.subr.mxu0 0.0
    %3541 = vmatpush1.msra.mxu0 0.0
    %3542 = vmatprep.subr.mxu0 0.0
    %3543 = vmatpush1.msra.mxu0 0.0
    %3544 = vmatprep.subr.mxu0 0.0
    %3545 = vmatpush1.msra.mxu0 0.0
    %3546 = vmatprep.subr.mxu0 0.0
    %3547 = vmatpush1.msra.mxu0 0.0
    %3548 = vmatprep.subr.mxu0 0.0
    %3549 = vmatpush1.msra.mxu0 0.0
    %3550 = vmatprep.subr.mxu0 0.0
    %3551 = vmatpush1.msra.mxu0 0.0
    %3552 = vmatprep.subr.mxu0 0.0
    %3553 = vmatpush1.msra.mxu0 0.0
    %3554 = vmatprep.subr.mxu0 0.0
    %3555 = vmatpush1.msra.mxu0 0.0
    %3556 = vmatprep.subr.mxu0 0.0
    %3557 = vmatpush1.msra.mxu0 0.0
    %3558 = vmatprep.subr.mxu0 0.0
    %3559 = vmatpush1.msra.mxu0 0.0
    %3560 = vmatprep.subr.mxu0 0.0
    %3561 = vmatpush1.msra.mxu0 0.0
    %3562 = vmatprep.subr.mxu0 0.0
    %3563 = vmatpush1.msra.mxu0 0.0
    %3564 = vmatprep.subr.mxu0 0.0
    %3565 = vmatpush1.msra.mxu0 0.0
    %3566 = vmatprep.subr.mxu0 0.0
    %3567 = vmatpush1.msra.mxu0 0.0
    %3568 = vmatprep.subr.mxu0 0.0
    %3569 = vmatpush1.msra.mxu0 0.0
    %3570 = vmatprep.subr.mxu0 0.0
    %3571 = vmatpush1.msra.mxu0 0.0
    %3572 = vmatprep.mubr.f32.mxu0 0.0
    %3573 = vmatmul.mubr.f32.gmra.mrb[0].mxu0 %v3484
    %v3574 = vpop.f32.mrb[0].mxu0
    %v3575 = vadd.f32 %v3506, %v3574
    %v3576 = vpop.f32.mrb[0].mxu0
    %3577 = vdwg.mxu0
    %vm3578 = vcmask 74752
    %3579 = vst.msk [vmem:[#allocation16] sm:$0x3] %vm3578, %v3575
    // Predicated region
    $region86: #{dual_head_forward.1} parent=1 // pred_check
      _
    $region87: #{dual_head_forward.1} parent=1 // pred_check_branch
      %3581 = sbr.rel (0) target = $region89
    $region88: #{dual_head_forward.1} parent=1 // pred_region
      _
    $region89: #{dual_head_forward.1} parent=1 // pred_fallthru
      _
    // Predicated region
    $region90: #{dual_head_forward.1} parent=1 // pred_check
      _
    $region91: #{dual_head_forward.1} parent=1 // pred_check_branch
      %3583 = sbr.rel (0) target = $region93
    $region92: #{dual_head_forward.1} parent=1 // pred_region
      %s3585 = ssub.s32 32, 32
      %3586 = vsyncadd [#allocation4], %s3585
      %s3588 = sshll.u32 [#allocation16], 4
      %s3589 = int_to_ptr.vmem [resolvable:$true] %s3588
      %3591 = dma.vmem_to_hbm [thread:$0]  %s3589, 32, %s14, [#allocation4]
    $region93: #{dual_head_forward.1} parent=1 // pred_fallthru
      _
    // Predicated region
    $region94: #{dual_head_forward.1} parent=1 // pred_check
      _
    $region95: #{dual_head_forward.1} parent=1 // pred_check_branch
      %3593 = sbr.rel (0) target = $region97
    $region96: #{dual_head_forward.1} parent=1 // pred_region
      %s3595 = ssub.s32 128, 128
      %3596 = vsyncadd [#allocation18], %s3595
      %s3597 = sshll.u32 [#allocation17], 4
      %s3598 = int_to_ptr.vmem [resolvable:$true] %s3597
      %3603 = dma.vmem_to_hbm [thread:$0]  %s3598, 128, %s15, [#allocation18], 64, 64, 4
    $region97: #{dual_head_forward.1} parent=1 // pred_fallthru
      _
    // Predicated region
    $region98: #{dual_head_forward.1} parent=1 // pred_check
      _
    $region99: #{dual_head_forward.1} parent=1 // pred_check_branch
      %3605 = sbr.rel (0) target = $region101
    $region100: #{dual_head_forward.1} parent=1 // pred_region
      _
    $region101: #{dual_head_forward.1} parent=1 // pred_fallthru
      _
    // Predicated region
    $region102: #{dual_head_forward.1} parent=1 // pred_check
      _
    $region103: #{dual_head_forward.1} parent=1 // pred_check_branch
      %3607 = sbr.rel (0) target = $region105
    $region104: #{dual_head_forward.1} parent=1 // pred_region
      %3608 = dma.done [#allocation4], 32
    $region105: #{dual_head_forward.1} parent=1 // pred_fallthru
      _
    // Predicated region
    $region106: #{dual_head_forward.1} parent=1 // pred_check
      _
    $region107: #{dual_head_forward.1} parent=1 // pred_check_branch
      %3610 = sbr.rel (0) target = $region109
    $region108: #{dual_head_forward.1} parent=1 // pred_region
      %3611 = dma.done [#allocation18], 128
    $region109: #{dual_head_forward.1} parent=1 // pred_fallthru
      _
    %3612 = vsyncpa [#allocation3], 1
    %3613 = vsyncpa [#allocation6], 1
    %3614 = vsyncpa [#allocation9], 1
    %3615 = vsyncpa [#allocation12], 1
    %3616 = vsyncpa [#allocation15], 1
    %3617 = vsyncpa [#allocation4], 1
    %3618 = vsyncpa [#allocation18], 1

</llo_original>
